<compile_context>
chip_gen: v7x
topology: tpu7x:2x2x1
jax: 0.10.0
libtpu: 0.0.40
codegen_flags: <defaults>
</compile_context>

<pallas_src>
import functools
import math

import jax
import jax.numpy as jnp
from jax.experimental import pallas as pl
from jax.experimental.pallas import tpu as pltpu

NEG_SLOPE = 0.01  # nn.LeakyReLU() default


def _round_up(x, m):
    return -(-x // m) * m


# ----------------------------------------------------------------------------
# Pallas kernel: lane-dense matmul with fused bias (+ optional LeakyReLU)
# ----------------------------------------------------------------------------
def _matmul_t_bias_kernel(w_ref, a_ref, b_ref, o_ref, *, apply_leaky):
    # Full-K contraction in a single MXU dot, f32 accumulation; bias +
    # (optional) LeakyReLU epilogue runs on the VPU while the MXU is the
    # binding unit, then a single lane-dense store.
    y = jnp.dot(w_ref[...], a_ref[...], preferred_element_type=jnp.float32)
    y = y + b_ref[...]
    if apply_leaky:
        y = jnp.where(y >= 0, y, NEG_SLOPE * y)
    o_ref[...] = y.astype(o_ref.dtype)


def pallas_matmul_t_bias(w_t, a_t, bias_col, *, apply_leaky, out_dtype):
    """O[P, Mp] = w_t[P, K] @ a_t[K, Mp] + bias_col[P, 1] (opt. LeakyReLU).

    P (output channels, small) sits on sublanes; M = B*Ho*Wo sits on lanes so
    stores are unmasked.  K is a full-dim block (exempt from the 128-lane
    rule), so there is no K padding, no K grid axis and no accumulator.
    """
    P, K = w_t.shape
    K2, Mp = a_t.shape
    assert K == K2 and P % 8 == 0 and Mp % 128 == 0

    # M tiling: single block when it comfortably fits VMEM (all layers in the
    # test config), else the largest multiple-of-128 divisor of Mp.
    if Mp <= 4096:
        tn = Mp
    else:
        tn = 128
        for cand in (4096, 2048, 1024, 512, 256):
            if Mp % cand == 0:
                tn = cand
                break

    kernel = functools.partial(_matmul_t_bias_kernel, apply_leaky=apply_leaky)
    return pl.pallas_call(
        kernel,
        out_shape=jax.ShapeDtypeStruct((P, Mp), out_dtype),
        grid_spec=pltpu.PrefetchScalarGridSpec(
            num_scalar_prefetch=0,
            grid=(Mp // tn,),
            in_specs=[
                pl.BlockSpec((P, K), lambda j: (0, 0)),    # weights (resident)
                pl.BlockSpec((K, tn), lambda j: (0, j)),   # activations
                pl.BlockSpec((P, 1), lambda j: (0, 0)),    # bias column
            ],
            out_specs=pl.BlockSpec((P, tn), lambda j: (0, j)),
        ),
        compiler_params=pltpu.CompilerParams(
            dimension_semantics=("parallel",)),
    )(w_t, a_t, bias_col)


# ----------------------------------------------------------------------------
# Glue: transposed im2col, weight steering (hoisted), layer wrappers
# ----------------------------------------------------------------------------
def _im2col_t(x, kH, kW, pad):
    # x: [B, N, H, W, C] -> A_t [kH*kW*N*C, Mp]  (lane dim = B*Ho*Wo, 128-pad)
    B, Ng, H, W, C = x.shape
    xp = jnp.pad(x, ((0, 0), (0, 0), (pad, pad), (pad, pad), (0, 0)))
    Ho = H + 2 * pad - kH + 1
    Wo = W + 2 * pad - kW + 1
    cols = [xp[:, :, dy:dy + Ho, dx:dx + Wo, :]
            for dy in range(kH) for dx in range(kW)]
    p = jnp.stack(cols, axis=0).reshape(kH, kW, B, Ng, Ho, Wo, C)
    p = jnp.transpose(p, (0, 1, 3, 6, 2, 4, 5))   # [kH,kW,N,C,B,Ho,Wo]
    M = B * Ho * Wo
    a_t = p.reshape(kH * kW * Ng * C, M)
    Mp = _round_up(M, 128)
    if Mp != M:
        a_t = jnp.pad(a_t, ((0, 0), (0, Mp - M)))
    return a_t, Ho, Wo, M


def _se2_rotate_stack(W):
    # W: [N, kH, kW, Cin, Cout] base filter bank (indexed by relative rotation)
    # -> W_eff[N_out, N_in, kH, kW, Cin, Cout] steered for all output rotations
    N = W.shape[0]
    rotated = []
    for r in range(N):
        Wr = jnp.roll(W, shift=r, axis=0)        # Wr[n_in] = W[(n_in - r) % N]
        Wr = jnp.rot90(Wr, k=r, axes=(1, 2))     # exact for 90-degree steps
        rotated.append(Wr)
    return jnp.stack(rotated, axis=0)


def prepare_decoder_layers(params, N):
    """Hoist all weight steering / reshape / padding / bf16 casts out of the
    forward pass.  Returns one dict per layer for the Pallas path."""
    prepared = []
    n_layers = len(params)
    for li, (W, b) in enumerate(params):
        is_final = (li == n_layers - 1)
        _, kH, kW, Cin, Cout = W.shape
        if is_final:
            # SE2->R2: group axis contracted away; output rows = Cout
            W_t = jnp.transpose(W, (4, 1, 2, 0, 3)).reshape(
                Cout, kH * kW * N * Cin)
            bias = b
            P = Cout
        else:
            W_eff = _se2_rotate_stack(W)          # [N_out,N_in,kH,kW,Cin,Cout]
            W_t = jnp.transpose(W_eff, (0, 5, 2, 3, 1, 4)).reshape(
                N * Cout, kH * kW * N * Cin)
            bias = jnp.tile(b, N)                 # shared bias per orientation
            P = N * Cout
        Pp = _round_up(max(P, 16), 16)            # bf16 sublane-friendly rows
        W_t = jnp.pad(W_t, ((0, Pp - P), (0, 0))).astype(jnp.bfloat16)
        bias = jnp.pad(bias, (0, Pp - P)).astype(jnp.float32).reshape(Pp, 1)
        prepared.append(dict(w_t=W_t, bias=bias, rows=P, cout=Cout,
                             kh=kH, kw=kW))
    return prepared


def se2_to_se2_conv_pallas(x, layer, pad, apply_leaky):
    # x: [B, N, H, W, Cin] (bf16) -> [B, N, Ho, Wo, Cout] (bf16)
    B, Ng = x.shape[0], x.shape[1]
    a_t, Ho, Wo, M = _im2col_t(x, layer["kh"], layer["kw"], pad)
    y = pallas_matmul_t_bias(layer["w_t"], a_t, layer["bias"],
                             apply_leaky=apply_leaky, out_dtype=jnp.bfloat16)
    y = y[:layer["rows"], :M].reshape(Ng, layer["cout"], B, Ho, Wo)
    return jnp.transpose(y, (2, 0, 3, 4, 1))


def se2_to_r2_conv_pallas(x, layer, pad):
    # x: [B, N, H, W, Cin] (bf16) -> [B, Cout, Ho, Wo] (f32)
    B = x.shape[0]
    a_t, Ho, Wo, M = _im2col_t(x, layer["kh"], layer["kw"], pad)
    y = pallas_matmul_t_bias(layer["w_t"], a_t, layer["bias"],
                             apply_leaky=False, out_dtype=jnp.float32)
    y = y[:layer["rows"], :M].reshape(layer["cout"], B, Ho, Wo)
    return jnp.transpose(y, (1, 0, 2, 3))


def spatial_upsample(x, factor):
    # nearest-neighbour upsample of the spatial axes of [B, N, H, W, C]
    # single broadcast + reshape (one pass instead of two jnp.repeat passes)
    B, Ng, H, W, C = x.shape
    x = x[:, :, :, None, :, None, :]
    x = jnp.broadcast_to(x, (B, Ng, H, factor, W, factor, C))
    return x.reshape(B, Ng, H * factor, W * factor, C)


# ----------------------------------------------------------------------------
# Decoder (Pallas path)
# ----------------------------------------------------------------------------
def decoder_forward(x, prepared, kernel_size):
    # x: [B, k, N, H, W] -> [B, output_dim, H_out, W_out]
    padding = kernel_size - 1
    h = jnp.transpose(x, (0, 2, 3, 4, 1)).astype(jnp.bfloat16)  # [B,N,H,W,C]

    # SE2ToSE2ConvNext(k->hidden) + SpatialUpsample(2) + LeakyReLU
    # (LeakyReLU is fused into the matmul epilogue and applied before the
    #  upsample — elementwise commutes with nearest-neighbour repeat.)
    h = se2_to_se2_conv_pallas(h, prepared[0], padding, apply_leaky=True)
    h = spatial_upsample(h, 2)

    # (depth-2) x [SE2ToSE2ConvNext(hidden->hidden) + SpatialUpsample(2)]
    for layer in prepared[1:-1]:
        h = se2_to_se2_conv_pallas(h, layer, padding, apply_leaky=False)
        h = spatial_upsample(h, 2)

    # SE2ToR2Conv(hidden->output_dim, kernel_size=5, padding=kernel_size-1)
    return se2_to_r2_conv_pallas(h, prepared[-1], padding)


# ----------------------------------------------------------------------------
# Pure-JAX f32 reference (mirrors the PyTorch module ordering exactly)
# ----------------------------------------------------------------------------
def _im2col_ref(x, kH, kW, pad):
    B, Ng, H, W, C = x.shape
    xp = jnp.pad(x, ((0, 0), (0, 0), (pad, pad), (pad, pad), (0, 0)))
    Ho = H + 2 * pad - kH + 1
    Wo = W + 2 * pad - kW + 1
    cols = [xp[:, :, dy:dy + Ho, dx:dx + Wo, :]
            for dy in range(kH) for dx in range(kW)]
    p = jnp.stack(cols, axis=0).reshape(kH, kW, B, Ng, Ho, Wo, C)
    p = jnp.transpose(p, (2, 4, 5, 0, 1, 3, 6))   # [B,Ho,Wo,kH,kW,N,C]
    return p.reshape(B * Ho * Wo, kH * kW * Ng * C), Ho, Wo


def decoder_forward_ref(x, params, N, kernel_size):
    padding = kernel_size - 1
    h = jnp.transpose(x, (0, 2, 3, 4, 1))

    def se2_conv(h, W, b):
        _, kH, kW, Cin, Cout = W.shape
        A, Ho, Wo = _im2col_ref(h, kH, kW, padding)
        W_eff = _se2_rotate_stack(W)
        Wm = jnp.transpose(W_eff, (2, 3, 1, 4, 0, 5)).reshape(
            kH * kW * N * Cin, N * Cout)
        y = A @ Wm + jnp.tile(b, N)[None, :]
        y = y.reshape(h.shape[0], Ho, Wo, N, Cout)
        return jnp.transpose(y, (0, 3, 1, 2, 4))

    def upsample(h):
        return jnp.repeat(jnp.repeat(h, 2, axis=2), 2, axis=3)

    W0, b0 = params[0]
    h = se2_conv(h, W0, b0)
    h = upsample(h)
    h = jnp.where(h >= 0, h, NEG_SLOPE * h)
    for (W, b) in params[1:-1]:
        h = se2_conv(h, W, b)
        h = upsample(h)
    Wf, bf = params[-1]
    _, kH, kW, Cin, Cout = Wf.shape
    A, Ho, Wo = _im2col_ref(h, kH, kW, padding)
    Wm = jnp.transpose(Wf, (1, 2, 0, 3, 4)).reshape(kH * kW * N * Cin, Cout)
    y = A @ Wm + bf[None, :]
    return jnp.transpose(y.reshape(h.shape[0], Ho, Wo, Cout), (0, 3, 1, 2))


# ----------------------------------------------------------------------------
# Parameter init
# ----------------------------------------------------------------------------
def init_decoder_params(key, output_dim, hidden_dim, depth, k, N, kernel_size):
    params = []
    in_ch = k
    for _ in range(depth - 1):                       # ConvNext-style SE2->SE2
        key, kw, kb = jax.random.split(key, 3)
        fan_in = N * kernel_size * kernel_size * in_ch
        W = jax.random.normal(
            kw, (N, kernel_size, kernel_size, in_ch, hidden_dim),
            jnp.float32) / math.sqrt(fan_in)
        b = 0.01 * jax.random.normal(kb, (hidden_dim,), jnp.float32)
        params.append((W, b))
        in_ch = hidden_dim
    key, kw, kb = jax.random.split(key, 3)           # final SE2->R2, kernel 5
    fan_in = N * 5 * 5 * hidden_dim
    W = jax.random.normal(kw, (N, 5, 5, hidden_dim, output_dim),
                          jnp.float32) / math.sqrt(fan_in)
    b = 0.01 * jax.random.normal(kb, (output_dim,), jnp.float32)
    params.append((W, b))
    return params


# ----------------------------------------------------------------------------
if __name__ == "__main__":
    output_dim, hidden_dim, depth, k, N, kernel_size = 2, 8, 3, 4, 4, 3
    B, H0, W0 = 2, 4, 4

    key = jax.random.PRNGKey(0)
    key, kp, kx = jax.random.split(key, 3)
    params = init_decoder_params(kp, output_dim, hidden_dim, depth, k, N,
                                 kernel_size)
    prepared = prepare_decoder_layers(params, N)     # weight prep hoisted
    x = jax.random.normal(kx, (B, k, N, H0, W0), jnp.float32)

    fwd = jax.jit(lambda xx: decoder_forward(xx, prepared, kernel_size))
    out = jax.block_until_ready(fwd(x))

    # shape trace: 4 -conv-> 6 -up-> 12 -conv-> 14 -up-> 28 -conv(5,pad2)-> 28
    assert out.shape == (B, output_dim, 28, 28), out.shape

    ref = decoder_forward_ref(x, params, N, kernel_size)
    assert jnp.allclose(out, ref, rtol=2e-2, atol=2e-2), \
        float(jnp.max(jnp.abs(out - ref)))

    print("KERNEL_OK")
</pallas_src>

<mosaic_0001>
module attributes {stable_mosaic.version = 11 : i64} {
  func.func @_matmul_t_bias_kernel(%arg0: i32, %arg1: memref<32x144xbf16, #tpu.memory_space<vmem>>, %arg2: memref<144x128xbf16, #tpu.memory_space<vmem>>, %arg3: memref<32x1xf32, #tpu.memory_space<vmem>>, %arg4: memref<32x128xbf16, #tpu.memory_space<vmem>>) attributes {dimension_semantics = [#tpu.dimension_semantics<parallel>], iteration_bounds = array<i64: 1>, scalar_prefetch = 0 : i64, scratch_operands = 0 : i64, tpu.core_type = #tpu.core_type<tc>, window_params = [{pipeline_mode = #tpu.pipeline_mode<synchronous>, transform_indices = @transform_0, window_bounds = array<i64: 32, 144>}, {transform_indices = @transform_1, window_bounds = array<i64: 144, 128>}, {pipeline_mode = #tpu.pipeline_mode<synchronous>, transform_indices = @transform_2, window_bounds = array<i64: 32, 1>}, {transform_indices = @transform_3, window_bounds = array<i64: 32, 128>}]} {
    %c0 = arith.constant 0 : index
    %c0_0 = arith.constant 0 : index
    %0 = vector.load %arg1[%c0, %c0_0] : memref<32x144xbf16, #tpu.memory_space<vmem>>, vector<32x144xbf16>
    %c0_1 = arith.constant 0 : index
    %c0_2 = arith.constant 0 : index
    %1 = vector.load %arg2[%c0_1, %c0_2] : memref<144x128xbf16, #tpu.memory_space<vmem>>, vector<144x128xbf16>
    %cst = arith.constant dense<0.000000e+00> : vector<32x128xf32>
    %2 = tpu.matmul %0, %1, %cst {dimension_numbers = #tpu.dot_dimension_numbers<[1], [0], [0], [1], [0, 0, 1, 1], [], []>} : vector<32x144xbf16>, vector<144x128xbf16>, vector<32x128xf32> -> vector<32x128xf32>
    %c0_3 = arith.constant 0 : index
    %c0_4 = arith.constant 0 : index
    %3 = vector.load %arg3[%c0_3, %c0_4] : memref<32x1xf32, #tpu.memory_space<vmem>>, vector<32x1xf32>
    %4 = vector.broadcast %3 : vector<32x1xf32> to vector<32x128xf32>
    %5 = arith.addf %2, %4 : vector<32x128xf32>
    %cst_5 = arith.constant 0.000000e+00 : f32
    %6 = vector.broadcast %cst_5 : f32 to vector<32x128xf32>
    %7 = arith.cmpf oge, %5, %6 : vector<32x128xf32>
    %cst_6 = arith.constant 0.00999999977 : f32
    %8 = vector.broadcast %cst_6 : f32 to vector<32x128xf32>
    %9 = arith.mulf %8, %5 : vector<32x128xf32>
    %10 = arith.select %7, %5, %9 : vector<32x128xi1>, vector<32x128xf32>
    %11 = arith.truncf %10 : vector<32x128xf32> to vector<32x128xbf16>
    %c0_7 = arith.constant 0 : index
    %c0_8 = arith.constant 0 : index
    %12 = vector.load %arg4[%c0_7, %c0_8] : memref<32x128xbf16, #tpu.memory_space<vmem>>, vector<32x128xbf16>
    tpu.vector_store %arg4[%c0_7, %c0_8], %11 {strides = array<i32>} : memref<32x128xbf16, #tpu.memory_space<vmem>>, vector<32x128xbf16>,
    return
  }
  func.func @transform_0(%arg0: i32) -> (i32, i32) {
    %c0_i32 = arith.constant 0 : i32
    %c0_i32_0 = arith.constant 0 : i32
    %c0_i32_1 = arith.constant 0 : i32
    return %c0_i32, %c0_i32_0 : i32, i32
  }
  func.func @transform_1(%arg0: i32) -> (i32, i32) {
    %c0_i32 = arith.constant 0 : i32
    %c0_i32_0 = arith.constant 0 : i32
    return %c0_i32, %arg0 : i32, i32
  }
  func.func @transform_2(%arg0: i32) -> (i32, i32) {
    %c0_i32 = arith.constant 0 : i32
    %c0_i32_0 = arith.constant 0 : i32
    %c0_i32_1 = arith.constant 0 : i32
    return %c0_i32, %c0_i32_0 : i32, i32
  }
  func.func @transform_3(%arg0: i32) -> (i32, i32) {
    %c0_i32 = arith.constant 0 : i32
    %c0_i32_0 = arith.constant 0 : i32
    return %c0_i32, %arg0 : i32, i32
  }
}

module attributes {stable_mosaic.version = 11 : i64} {
  func.func @_matmul_t_bias_kernel(%arg0: i32, %arg1: memref<32x288xbf16, #tpu.memory_space<vmem>>, %arg2: memref<288x512xbf16, #tpu.memory_space<vmem>>, %arg3: memref<32x1xf32, #tpu.memory_space<vmem>>, %arg4: memref<32x512xbf16, #tpu.memory_space<vmem>>) attributes {dimension_semantics = [#tpu.dimension_semantics<parallel>], iteration_bounds = array<i64: 1>, scalar_prefetch = 0 : i64, scratch_operands = 0 : i64, tpu.core_type = #tpu.core_type<tc>, window_params = [{pipeline_mode = #tpu.pipeline_mode<synchronous>, transform_indices = @transform_0, window_bounds = array<i64: 32, 288>}, {transform_indices = @transform_1, window_bounds = array<i64: 288, 512>}, {pipeline_mode = #tpu.pipeline_mode<synchronous>, transform_indices = @transform_2, window_bounds = array<i64: 32, 1>}, {transform_indices = @transform_3, window_bounds = array<i64: 32, 512>}]} {
    %c0 = arith.constant 0 : index
    %c0_0 = arith.constant 0 : index
    %0 = vector.load %arg1[%c0, %c0_0] : memref<32x288xbf16, #tpu.memory_space<vmem>>, vector<32x288xbf16>
    %c0_1 = arith.constant 0 : index
    %c0_2 = arith.constant 0 : index
    %1 = vector.load %arg2[%c0_1, %c0_2] : memref<288x512xbf16, #tpu.memory_space<vmem>>, vector<288x512xbf16>
    %cst = arith.constant dense<0.000000e+00> : vector<32x512xf32>
    %2 = tpu.matmul %0, %1, %cst {dimension_numbers = #tpu.dot_dimension_numbers<[1], [0], [0], [1], [0, 0, 1, 1], [], []>} : vector<32x288xbf16>, vector<288x512xbf16>, vector<32x512xf32> -> vector<32x512xf32>
    %c0_3 = arith.constant 0 : index
    %c0_4 = arith.constant 0 : index
    %3 = vector.load %arg3[%c0_3, %c0_4] : memref<32x1xf32, #tpu.memory_space<vmem>>, vector<32x1xf32>
    %4 = vector.broadcast %3 : vector<32x1xf32> to vector<32x512xf32>
    %5 = arith.addf %2, %4 : vector<32x512xf32>
    %6 = arith.truncf %5 : vector<32x512xf32> to vector<32x512xbf16>
    %c0_5 = arith.constant 0 : index
    %c0_6 = arith.constant 0 : index
    %7 = vector.load %arg4[%c0_5, %c0_6] : memref<32x512xbf16, #tpu.memory_space<vmem>>, vector<32x512xbf16>
    tpu.vector_store %arg4[%c0_5, %c0_6], %6 {strides = array<i32>} : memref<32x512xbf16, #tpu.memory_space<vmem>>, vector<32x512xbf16>,
    return
  }
  func.func @transform_0(%arg0: i32) -> (i32, i32) {
    %c0_i32 = arith.constant 0 : i32
    %c0_i32_0 = arith.constant 0 : i32
    %c0_i32_1 = arith.constant 0 : i32
    return %c0_i32, %c0_i32_0 : i32, i32
  }
  func.func @transform_1(%arg0: i32) -> (i32, i32) {
    %c0_i32 = arith.constant 0 : i32
    %c0_i32_0 = arith.constant 0 : i32
    return %c0_i32, %arg0 : i32, i32
  }
  func.func @transform_2(%arg0: i32) -> (i32, i32) {
    %c0_i32 = arith.constant 0 : i32
    %c0_i32_0 = arith.constant 0 : i32
    %c0_i32_1 = arith.constant 0 : i32
    return %c0_i32, %c0_i32_0 : i32, i32
  }
  func.func @transform_3(%arg0: i32) -> (i32, i32) {
    %c0_i32 = arith.constant 0 : i32
    %c0_i32_0 = arith.constant 0 : i32
    return %c0_i32, %arg0 : i32, i32
  }
}

module attributes {stable_mosaic.version = 11 : i64} {
  func.func @_matmul_t_bias_kernel(%arg0: i32, %arg1: memref<16x800xbf16, #tpu.memory_space<vmem>>, %arg2: memref<800x1664xbf16, #tpu.memory_space<vmem>>, %arg3: memref<16x1xf32, #tpu.memory_space<vmem>>, %arg4: memref<16x1664xf32, #tpu.memory_space<vmem>>) attributes {dimension_semantics = [#tpu.dimension_semantics<parallel>], iteration_bounds = array<i64: 1>, scalar_prefetch = 0 : i64, scratch_operands = 0 : i64, tpu.core_type = #tpu.core_type<tc>, window_params = [{pipeline_mode = #tpu.pipeline_mode<synchronous>, transform_indices = @transform_0, window_bounds = array<i64: 16, 800>}, {transform_indices = @transform_1, window_bounds = array<i64: 800, 1664>}, {pipeline_mode = #tpu.pipeline_mode<synchronous>, transform_indices = @transform_2, window_bounds = array<i64: 16, 1>}, {transform_indices = @transform_3, window_bounds = array<i64: 16, 1664>}]} {
    %c0 = arith.constant 0 : index
    %c0_0 = arith.constant 0 : index
    %0 = vector.load %arg1[%c0, %c0_0] : memref<16x800xbf16, #tpu.memory_space<vmem>>, vector<16x800xbf16>
    %c0_1 = arith.constant 0 : index
    %c0_2 = arith.constant 0 : index
    %1 = vector.load %arg2[%c0_1, %c0_2] : memref<800x1664xbf16, #tpu.memory_space<vmem>>, vector<800x1664xbf16>
    %cst = arith.constant dense<0.000000e+00> : vector<16x1664xf32>
    %2 = tpu.matmul %0, %1, %cst {dimension_numbers = #tpu.dot_dimension_numbers<[1], [0], [0], [1], [0, 0, 1, 1], [], []>} : vector<16x800xbf16>, vector<800x1664xbf16>, vector<16x1664xf32> -> vector<16x1664xf32>
    %c0_3 = arith.constant 0 : index
    %c0_4 = arith.constant 0 : index
    %3 = vector.load %arg3[%c0_3, %c0_4] : memref<16x1xf32, #tpu.memory_space<vmem>>, vector<16x1xf32>
    %4 = vector.broadcast %3 : vector<16x1xf32> to vector<16x1664xf32>
    %5 = arith.addf %2, %4 : vector<16x1664xf32>
    %c0_5 = arith.constant 0 : index
    %c0_6 = arith.constant 0 : index
    %6 = vector.load %arg4[%c0_5, %c0_6] : memref<16x1664xf32, #tpu.memory_space<vmem>>, vector<16x1664xf32>
    tpu.vector_store %arg4[%c0_5, %c0_6], %5 {strides = array<i32>} : memref<16x1664xf32, #tpu.memory_space<vmem>>, vector<16x1664xf32>,
    return
  }
  func.func @transform_0(%arg0: i32) -> (i32, i32) {
    %c0_i32 = arith.constant 0 : i32
    %c0_i32_0 = arith.constant 0 : i32
    %c0_i32_1 = arith.constant 0 : i32
    return %c0_i32, %c0_i32_0 : i32, i32
  }
  func.func @transform_1(%arg0: i32) -> (i32, i32) {
    %c0_i32 = arith.constant 0 : i32
    %c0_i32_0 = arith.constant 0 : i32
    return %c0_i32, %arg0 : i32, i32
  }
  func.func @transform_2(%arg0: i32) -> (i32, i32) {
    %c0_i32 = arith.constant 0 : i32
    %c0_i32_0 = arith.constant 0 : i32
    %c0_i32_1 = arith.constant 0 : i32
    return %c0_i32, %c0_i32_0 : i32, i32
  }
  func.func @transform_3(%arg0: i32) -> (i32, i32) {
    %c0_i32 = arith.constant 0 : i32
    %c0_i32_0 = arith.constant 0 : i32
    return %c0_i32, %arg0 : i32, i32
  }
}

</mosaic_0001>

<llo_original>
// kernel: _lambda_.3
$region0: #{_lambda_.3}
  #allocation0 [shape = 'u32[]', space=smem, size = 0x4, offset = 0x4, fixed_abs, tag = 'smem constant byte address 0x4 - core index']
  #allocation1 [shape = 'u32[144,128]{1,0:T(1,128)}', space=vmem, size = 0x12000, scoped, tag = 'internal scratch']
  %s0 = inlined_call_operand.vmem [shape: bf16[32,144], index: 0, kind: input, shape index: {}]
  %s1 = inlined_call_operand.vmem [shape: bf16[144,128], index: 1, kind: input, shape index: {}]
  %s2 = inlined_call_operand.hbm [shape: f32[32,1], index: 2, kind: input, shape index: {}]
  %s3 = inlined_call_operand.vmem [shape: bf16[32,128], index: 3, kind: output, shape index: {}]
  %s4 = sld [smem:[#allocation0]]
  $region26: #{_lambda_.3} parent=0
    _
  %s6 = ssub.s32 1, %s4
  %s7 = scalar_select 0, %s6, %s4
  $region1: #{_lambda_.3} parent=0
    #allocation2 [shape = 'u8[16384]{0}', space=vmem, size = 0x4000, scoped, tag = 'input window, operand 2, single buffered']
    #allocation3 [shape = 's32[1]{0}', space=sflag, size = 0x4, scoped, tag = 'scoped memory for _lambda_.3']
    %8 = vsyncpa [#allocation3], 0
    // Predicated region
    $region2: #{_lambda_.3} parent=1 // pred_check
      _
    $region3: #{_lambda_.3} parent=1 // pred_check_branch
      %10 = sbr.rel (0) target = $region5
    $region4: #{_lambda_.3} parent=1 // pred_region
      _
    $region5: #{_lambda_.3} parent=1 // pred_fallthru
      _
    // Predicated region
    $region6: #{_lambda_.3} parent=1 // pred_check
      _
    $region7: #{_lambda_.3} parent=1 // pred_check_branch
      %12 = sbr.rel (0) target = $region9
    $region8: #{_lambda_.3} parent=1 // pred_region
      _
    $region9: #{_lambda_.3} parent=1 // pred_fallthru
      _
    // Predicated region
    $region10: #{_lambda_.3} parent=1 // pred_check
      _
    $region11: #{_lambda_.3} parent=1 // pred_check_branch
      %14 = sbr.rel (0) target = $region13
    $region12: #{_lambda_.3} parent=1 // pred_region
      %s16 = ssub.s32 512, 512
      %17 = vsyncadd [#allocation3], %s16
      %s18 = sshll.u32 [#allocation2], 4
      %s19 = int_to_ptr.vmem [resolvable:$true] %s18
      %24 = dma.hbm_to_vmem [thread:$0]  %s2, 512, %s19, [#allocation3], 128, 128, 8
    $region13: #{_lambda_.3} parent=1 // pred_fallthru
      _
    // Predicated region
    $region14: #{_lambda_.3} parent=1 // pred_check
      _
    $region15: #{_lambda_.3} parent=1 // pred_check_branch
      %26 = sbr.rel (0) target = $region17
    $region16: #{_lambda_.3} parent=1 // pred_region
      %27 = dma.done [#allocation3], 512
    $region17: #{_lambda_.3} parent=1 // pred_fallthru
      _
    %v29 = vld [vmem:[%s0] sm:$0xff]
    %v30 = vld [vmem:[%s0 + $0x8] sm:$0xff]
    %v31 = vld [vmem:[%s0 + $0x10] sm:$0xff]
    %v32 = vld [vmem:[%s0 + $0x18] sm:$0xff]
    %v33 = vld [vmem:[%s1] sm:$0xf]
    %v34 = vld [vmem:[%s1 + $0x4] sm:$0xf]
    %v35 = vld [vmem:[%s1 + $0x8] sm:$0xf]
    %v36 = vld [vmem:[%s1 + $0xc] sm:$0xf]
    %v37 = vld [vmem:[%s1 + $0x10] sm:$0xf]
    %v38 = vld [vmem:[%s1 + $0x14] sm:$0xf]
    %v39 = vld [vmem:[%s1 + $0x18] sm:$0xf]
    %v40 = vld [vmem:[%s1 + $0x1c] sm:$0xf]
    %v41 = vld [vmem:[%s1 + $0x20] sm:$0xf]
    %v42 = vld [vmem:[%s1 + $0x24] sm:$0xf]
    %v43 = vld [vmem:[%s1 + $0x28] sm:$0xf]
    %v44 = vld [vmem:[%s1 + $0x2c] sm:$0xf]
    %v45 = vld [vmem:[%s1 + $0x30] sm:$0xf]
    %v46 = vld [vmem:[%s1 + $0x34] sm:$0xf]
    %v47 = vld [vmem:[%s1 + $0x38] sm:$0xf]
    %v48 = vld [vmem:[%s1 + $0x3c] sm:$0xf]
    %v49 = vld [vmem:[%s1 + $0x40] sm:$0xf]
    %v50 = vld [vmem:[%s1 + $0x44] sm:$0xf]
    %v51 = vld [vmem:[#allocation2] sm:$0xff]
    %v52 = vld [vmem:[#allocation2 + $0x8] sm:$0xff]
    %v53 = vld [vmem:[#allocation2 + $0x10] sm:$0xff]
    %v54 = vld [vmem:[#allocation2 + $0x18] sm:$0xff]
    %56 = vset.pattern.permute.xlu0 0
    %57 = vperm.xlu0 %56, %v51
    %v58 = vpop.permute.xlu0 %57
    %61 = vset.pattern.permute.xlu0 0
    %62 = vperm.xlu0 %61, %v52
    %v63 = vpop.permute.xlu0 %62
    %66 = vset.pattern.permute.xlu0 0
    %67 = vperm.xlu0 %66, %v53
    %v68 = vpop.permute.xlu0 %67
    %71 = vset.pattern.permute.xlu0 0
    %72 = vperm.xlu0 %71, %v54
    %v73 = vpop.permute.xlu0 %72
    %v79 = vunpack.c.l.b16 %v29
    %v80 = vunpack.c.h.b16 %v29
    %v81 = vunpack.c.l.b16 %v30
    %v82 = vunpack.c.h.b16 %v30
    %v83 = vunpack.c.l.b16 %v31
    %v84 = vunpack.c.h.b16 %v31
    %v85 = vunpack.c.l.b16 %v32
    %v86 = vunpack.c.h.b16 %v32
    %v87 = vpack.c.b16 %v81, %v79
    %v88 = vpack.c.b16 %v82, %v80
    %v89 = vpack.c.b16 %v85, %v83
    %v90 = vpack.c.b16 %v86, %v84
    %v111 = vunpack.c.l.b16 %v33
    %v112 = vunpack.c.l.b16 %v34
    %v113 = vunpack.c.l.b16 %v35
    %v114 = vunpack.c.l.b16 %v36
    %v115 = vunpack.c.l.b16 %v37
    %v116 = vunpack.c.l.b16 %v38
    %v117 = vunpack.c.l.b16 %v39
    %v118 = vunpack.c.l.b16 %v40
    %v119 = vunpack.c.l.b16 %v41
    %v120 = vunpack.c.l.b16 %v42
    %v121 = vunpack.c.l.b16 %v43
    %v122 = vunpack.c.l.b16 %v44
    %v123 = vunpack.c.l.b16 %v45
    %v124 = vunpack.c.l.b16 %v46
    %v125 = vunpack.c.l.b16 %v47
    %v126 = vunpack.c.l.b16 %v48
    %v127 = vunpack.c.l.b16 %v49
    %v128 = vunpack.c.l.b16 %v50
    %v129 = vpack.c.b16 %v112, %v111
    %v130 = vpack.c.b16 %v114, %v113
    %v131 = vpack.c.b16 %v116, %v115
    %v132 = vpack.c.b16 %v118, %v117
    %v133 = vpack.c.b16 %v120, %v119
    %v134 = vpack.c.b16 %v122, %v121
    %v135 = vpack.c.b16 %v124, %v123
    %v136 = vpack.c.b16 %v126, %v125
    %v137 = vpack.c.b16 %v128, %v127
    %vm147 = vcmask 130048
    %v149 = vsel %vm147, %v88, 0
    %v152 = vsel %vm147, %v90, 0
    %154 = vmatprep.subr.bf16.mxu0 0
    %155 = vmatpush1.bf16.msra.mxu0 %v129
    %156 = vmatprep.subr.bf16.mxu0 0
    %157 = vmatpush1.bf16.msra.mxu0 %v130
    %158 = vmatprep.subr.bf16.mxu0 0
    %159 = vmatpush1.bf16.msra.mxu0 %v131
    %160 = vmatprep.subr.bf16.mxu0 0
    %161 = vmatpush1.bf16.msra.mxu0 %v132
    %162 = vmatprep.subr.bf16.mxu0 0
    %163 = vmatpush1.bf16.msra.mxu0 %v133
    %164 = vmatprep.subr.bf16.mxu0 0
    %165 = vmatpush1.bf16.msra.mxu0 %v134
    %166 = vmatprep.subr.bf16.mxu0 0
    %167 = vmatpush1.bf16.msra.mxu0 %v135
    %168 = vmatprep.subr.bf16.mxu0 0
    %169 = vmatpush1.bf16.msra.mxu0 %v136
    %170 = vmatprep.subr.bf16.mxu0 0
    %171 = vmatpush1.bf16.msra.mxu0 %v137
    %172 = vmatprep.subr.bf16.mxu0 0
    %173 = vmatpush1.bf16.msra.mxu0 0
    %174 = vmatprep.subr.bf16.mxu0 0
    %175 = vmatpush1.bf16.msra.mxu0 0
    %176 = vmatprep.subr.bf16.mxu0 0
    %177 = vmatpush1.bf16.msra.mxu0 0
    %178 = vmatprep.subr.bf16.mxu0 0
    %179 = vmatpush1.bf16.msra.mxu0 0
    %180 = vmatprep.subr.bf16.mxu0 0
    %181 = vmatpush1.bf16.msra.mxu0 0
    %182 = vmatprep.subr.bf16.mxu0 0
    %183 = vmatpush1.bf16.msra.mxu0 0
    %184 = vmatprep.subr.bf16.mxu0 0
    %185 = vmatpush1.bf16.msra.mxu0 0
    %186 = vmatprep.mubr.bf16.mxu0 %v149
    %187 = vmatmul.mubr.bf16.gmra.mrb[0].mxu0 %v87
    %v188 = vpop.f32.mrb[0].mxu0
    %v189 = vadd.f32 %v58, %v188
    %v190 = vpop.f32.mrb[0].mxu0
    %v191 = vpop.f32.mrb[0].mxu0
    %v192 = vadd.f32 %v63, %v191
    %v193 = vpop.f32.mrb[0].mxu0
    %194 = vmatprep.mubr.bf16.mxu0 %v152
    %195 = vmatmul.mubr.bf16.gmra.mrb[0].mxu0 %v89
    %v196 = vpop.f32.mrb[0].mxu0
    %v197 = vadd.f32 %v68, %v196
    %v198 = vpop.f32.mrb[0].mxu0
    %v199 = vpop.f32.mrb[0].mxu0
    %v200 = vadd.f32 %v73, %v199
    %v201 = vpop.f32.mrb[0].mxu0
    %202 = vdwg.mxu0
    %vm203 = vcmp.ge.f32.partialorder %v189, 0.0
    %vm204 = vcmp.ge.f32.partialorder %v192, 0.0
    %vm205 = vcmp.ge.f32.partialorder %v197, 0.0
    %vm206 = vcmp.ge.f32.partialorder %v200, 0.0
    %v207 = vmul.f32 %v189, 0.01
    %v208 = vmul.f32 %v192, 0.01
    %v209 = vmul.f32 %v197, 0.01
    %v210 = vmul.f32 %v200, 0.01
    %v211 = vsel %vm203, %v189, %v207
    %v212 = vsel %vm204, %v192, %v208
    %v213 = vsel %vm205, %v197, %v209
    %v214 = vsel %vm206, %v200, %v210
    %v215 = vpack.c.bf16 %v212, %v211
    %v216 = vpack.c.bf16 %v214, %v213
    %v219 = vunpack.c.l.b16 %v215
    %v220 = vunpack.c.h.b16 %v215
    %v221 = vunpack.c.l.b16 %v216
    %v222 = vunpack.c.h.b16 %v216
    %v223 = vpack.c.b16 %v219, %v219
    %v224 = vpack.c.b16 %v220, %v220
    %v225 = vpack.c.b16 %v221, %v221
    %v226 = vpack.c.b16 %v222, %v222
    %231 = vst [vmem:[%s3] sm:$0xf] %v223
    %232 = vst [vmem:[%s3 + $0x4] sm:$0xf] %v224
    %233 = vst [vmem:[%s3 + $0x8] sm:$0xf] %v225
    %234 = vst [vmem:[%s3 + $0xc] sm:$0xf] %v226
    // Predicated region
    $region18: #{_lambda_.3} parent=1 // pred_check
      _
    $region19: #{_lambda_.3} parent=1 // pred_check_branch
      %236 = sbr.rel (0) target = $region21
    $region20: #{_lambda_.3} parent=1 // pred_region
      _
    $region21: #{_lambda_.3} parent=1 // pred_fallthru
      _
    // Predicated region
    $region22: #{_lambda_.3} parent=1 // pred_check
      _
    $region23: #{_lambda_.3} parent=1 // pred_check_branch
      %238 = sbr.rel (0) target = $region25
    $region24: #{_lambda_.3} parent=1 // pred_region
      _
    $region25: #{_lambda_.3} parent=1 // pred_fallthru
      _
    %239 = vsyncpa [#allocation3], 1

// kernel: _lambda_.4
$region0: #{_lambda_.4}
  #allocation0 [shape = 'u32[]', space=smem, size = 0x4, offset = 0x4, fixed_abs, tag = 'smem constant byte address 0x4 - core index']
  #allocation1 [shape = 'u32[144,128]{1,0:T(1,128)}', space=vmem, size = 0x12000, scoped, tag = 'internal scratch']
  %s0 = inlined_call_operand.vmem [shape: bf16[32,288], index: 0, kind: input, shape index: {}]
  %s1 = inlined_call_operand.vmem [shape: bf16[288,512], index: 1, kind: input, shape index: {}]
  %s2 = inlined_call_operand.vmem [shape: f32[32,1], index: 2, kind: input, shape index: {}]
  %s3 = inlined_call_operand.vmem [shape: bf16[32,512], index: 3, kind: output, shape index: {}]
  %s4 = sld [smem:[#allocation0]]
  $region22: #{_lambda_.4} parent=0
    _
  %s6 = ssub.s32 1, %s4
  %s7 = scalar_select 0, %s6, %s4
  // Predicated region
  $region2: #{_lambda_.4} parent=0 // pred_check
    _
  $region3: #{_lambda_.4} parent=0 // pred_check_branch
    %9 = sbr.rel (0) target = $region5
  $region4: #{_lambda_.4} parent=0 // pred_region
    _
  $region5: #{_lambda_.4} parent=0 // pred_fallthru
    _
  // Predicated region
  $region6: #{_lambda_.4} parent=0 // pred_check
    _
  $region7: #{_lambda_.4} parent=0 // pred_check_branch
    %11 = sbr.rel (0) target = $region9
  $region8: #{_lambda_.4} parent=0 // pred_region
    _
  $region9: #{_lambda_.4} parent=0 // pred_fallthru
    _
  // Predicated region
  $region10: #{_lambda_.4} parent=0 // pred_check
    _
  $region11: #{_lambda_.4} parent=0 // pred_check_branch
    %13 = sbr.rel (0) target = $region13
  $region12: #{_lambda_.4} parent=0 // pred_region
    _
  $region13: #{_lambda_.4} parent=0 // pred_fallthru
    _
  %v15 = vld [vmem:[%s0] sm:$0xff]
  %v16 = vld [vmem:[%s0 + $0x8] sm:$0xf]
  %v17 = vld [vmem:[%s0 + $0xc] sm:$0xff]
  %v18 = vld [vmem:[%s0 + $0x14] sm:$0xf]
  %v19 = vld [vmem:[%s0 + $0x18] sm:$0xff]
  %v20 = vld [vmem:[%s0 + $0x20] sm:$0xf]
  %v21 = vld [vmem:[%s0 + $0x24] sm:$0xff]
  %v22 = vld [vmem:[%s0 + $0x2c] sm:$0xf]
  %v23 = vld [vmem:[%s1] sm:$0xff]
  %v24 = vld [vmem:[%s1 + $0x8] sm:$0xff]
  %v25 = vld [vmem:[%s1 + $0x10] sm:$0xff]
  %v26 = vld [vmem:[%s1 + $0x18] sm:$0xff]
  %v27 = vld [vmem:[%s1 + $0x20] sm:$0xff]
  %v28 = vld [vmem:[%s1 + $0x28] sm:$0xff]
  %v29 = vld [vmem:[%s1 + $0x30] sm:$0xff]
  %v30 = vld [vmem:[%s1 + $0x38] sm:$0xff]
  %v31 = vld [vmem:[%s1 + $0x40] sm:$0xff]
  %v32 = vld [vmem:[%s1 + $0x48] sm:$0xff]
  %v33 = vld [vmem:[%s1 + $0x50] sm:$0xff]
  %v34 = vld [vmem:[%s1 + $0x58] sm:$0xff]
  %v35 = vld [vmem:[%s1 + $0x60] sm:$0xff]
  %v36 = vld [vmem:[%s1 + $0x68] sm:$0xff]
  %v37 = vld [vmem:[%s1 + $0x70] sm:$0xff]
  %v38 = vld [vmem:[%s1 + $0x78] sm:$0xff]
  %v39 = vld [vmem:[%s1 + $0x80] sm:$0xff]
  %v40 = vld [vmem:[%s1 + $0x88] sm:$0xff]
  %v41 = vld [vmem:[%s1 + $0x90] sm:$0xff]
  %v42 = vld [vmem:[%s1 + $0x98] sm:$0xff]
  %v43 = vld [vmem:[%s1 + $0xa0] sm:$0xff]
  %v44 = vld [vmem:[%s1 + $0xa8] sm:$0xff]
  %v45 = vld [vmem:[%s1 + $0xb0] sm:$0xff]
  %v46 = vld [vmem:[%s1 + $0xb8] sm:$0xff]
  %v47 = vld [vmem:[%s1 + $0xc0] sm:$0xff]
  %v48 = vld [vmem:[%s1 + $0xc8] sm:$0xff]
  %v49 = vld [vmem:[%s1 + $0xd0] sm:$0xff]
  %v50 = vld [vmem:[%s1 + $0xd8] sm:$0xff]
  %v51 = vld [vmem:[%s1 + $0xe0] sm:$0xff]
  %v52 = vld [vmem:[%s1 + $0xe8] sm:$0xff]
  %v53 = vld [vmem:[%s1 + $0xf0] sm:$0xff]
  %v54 = vld [vmem:[%s1 + $0xf8] sm:$0xff]
  %v55 = vld [vmem:[%s1 + $0x100] sm:$0xff]
  %v56 = vld [vmem:[%s1 + $0x108] sm:$0xff]
  %v57 = vld [vmem:[%s1 + $0x110] sm:$0xff]
  %v58 = vld [vmem:[%s1 + $0x118] sm:$0xff]
  %v59 = vld [vmem:[%s1 + $0x120] sm:$0xff]
  %v60 = vld [vmem:[%s1 + $0x128] sm:$0xff]
  %v61 = vld [vmem:[%s1 + $0x130] sm:$0xff]
  %v62 = vld [vmem:[%s1 + $0x138] sm:$0xff]
  %v63 = vld [vmem:[%s1 + $0x140] sm:$0xff]
  %v64 = vld [vmem:[%s1 + $0x148] sm:$0xff]
  %v65 = vld [vmem:[%s1 + $0x150] sm:$0xff]
  %v66 = vld [vmem:[%s1 + $0x158] sm:$0xff]
  %v67 = vld [vmem:[%s1 + $0x160] sm:$0xff]
  %v68 = vld [vmem:[%s1 + $0x168] sm:$0xff]
  %v69 = vld [vmem:[%s1 + $0x170] sm:$0xff]
  %v70 = vld [vmem:[%s1 + $0x178] sm:$0xff]
  %v71 = vld [vmem:[%s1 + $0x180] sm:$0xff]
  %v72 = vld [vmem:[%s1 + $0x188] sm:$0xff]
  %v73 = vld [vmem:[%s1 + $0x190] sm:$0xff]
  %v74 = vld [vmem:[%s1 + $0x198] sm:$0xff]
  %v75 = vld [vmem:[%s1 + $0x1a0] sm:$0xff]
  %v76 = vld [vmem:[%s1 + $0x1a8] sm:$0xff]
  %v77 = vld [vmem:[%s1 + $0x1b0] sm:$0xff]
  %v78 = vld [vmem:[%s1 + $0x1b8] sm:$0xff]
  %v79 = vld [vmem:[%s1 + $0x1c0] sm:$0xff]
  %v80 = vld [vmem:[%s1 + $0x1c8] sm:$0xff]
  %v81 = vld [vmem:[%s1 + $0x1d0] sm:$0xff]
  %v82 = vld [vmem:[%s1 + $0x1d8] sm:$0xff]
  %v83 = vld [vmem:[%s1 + $0x1e0] sm:$0xff]
  %v84 = vld [vmem:[%s1 + $0x1e8] sm:$0xff]
  %v85 = vld [vmem:[%s1 + $0x1f0] sm:$0xff]
  %v86 = vld [vmem:[%s1 + $0x1f8] sm:$0xff]
  %v87 = vld [vmem:[%s1 + $0x200] sm:$0xff]
  %v88 = vld [vmem:[%s1 + $0x208] sm:$0xff]
  %v89 = vld [vmem:[%s1 + $0x210] sm:$0xff]
  %v90 = vld [vmem:[%s1 + $0x218] sm:$0xff]
  %v91 = vld [vmem:[%s1 + $0x220] sm:$0xff]
  %v92 = vld [vmem:[%s1 + $0x228] sm:$0xff]
  %v93 = vld [vmem:[%s1 + $0x230] sm:$0xff]
  %v94 = vld [vmem:[%s1 + $0x238] sm:$0xff]
  %v95 = vld [vmem:[%s2] sm:$0xff]
  %v96 = vld [vmem:[%s2 + $0x8] sm:$0xff]
  %v97 = vld [vmem:[%s2 + $0x10] sm:$0xff]
  %v98 = vld [vmem:[%s2 + $0x18] sm:$0xff]
  %100 = vset.pattern.permute.xlu0 0
  %101 = vperm.xlu0 %100, %v95
  %v102 = vpop.permute.xlu0 %101
  %105 = vset.pattern.permute.xlu0 0
  %106 = vperm.xlu0 %105, %v96
  %v107 = vpop.permute.xlu0 %106
  %110 = vset.pattern.permute.xlu0 0
  %111 = vperm.xlu0 %110, %v97
  %v112 = vpop.permute.xlu0 %111
  %115 = vset.pattern.permute.xlu0 0
  %116 = vperm.xlu0 %115, %v98
  %v117 = vpop.permute.xlu0 %116
  %v127 = vunpack.c.l.b16 %v15
  %v128 = vunpack.c.h.b16 %v15
  %v129 = vunpack.c.l.b16 %v16
  %v130 = vunpack.c.l.b16 %v17
  %v131 = vunpack.c.h.b16 %v17
  %v132 = vunpack.c.l.b16 %v18
  %v133 = vunpack.c.l.b16 %v19
  %v134 = vunpack.c.h.b16 %v19
  %v135 = vunpack.c.l.b16 %v20
  %v136 = vunpack.c.l.b16 %v21
  %v137 = vunpack.c.h.b16 %v21
  %v138 = vunpack.c.l.b16 %v22
  %v139 = vpack.c.b16 %v130, %v127
  %v140 = vpack.c.b16 %v131, %v128
  %v141 = vpack.c.b16 %v132, %v129
  %v142 = vpack.c.b16 %v136, %v133
  %v143 = vpack.c.b16 %v137, %v134
  %v144 = vpack.c.b16 %v138, %v135
  %v221 = vunpack.c.l.b16 %v23
  %v222 = vunpack.c.h.b16 %v23
  %v223 = vunpack.c.l.b16 %v24
  %v224 = vunpack.c.h.b16 %v24
  %v225 = vunpack.c.l.b16 %v25
  %v226 = vunpack.c.h.b16 %v25
  %v227 = vunpack.c.l.b16 %v26
  %v228 = vunpack.c.h.b16 %v26
  %v229 = vunpack.c.l.b16 %v27
  %v230 = vunpack.c.h.b16 %v27
  %v231 = vunpack.c.l.b16 %v28
  %v232 = vunpack.c.h.b16 %v28
  %v233 = vunpack.c.l.b16 %v29
  %v234 = vunpack.c.h.b16 %v29
  %v235 = vunpack.c.l.b16 %v30
  %v236 = vunpack.c.h.b16 %v30
  %v237 = vunpack.c.l.b16 %v31
  %v238 = vunpack.c.h.b16 %v31
  %v239 = vunpack.c.l.b16 %v32
  %v240 = vunpack.c.h.b16 %v32
  %v241 = vunpack.c.l.b16 %v33
  %v242 = vunpack.c.h.b16 %v33
  %v243 = vunpack.c.l.b16 %v34
  %v244 = vunpack.c.h.b16 %v34
  %v245 = vunpack.c.l.b16 %v35
  %v246 = vunpack.c.h.b16 %v35
  %v247 = vunpack.c.l.b16 %v36
  %v248 = vunpack.c.h.b16 %v36
  %v249 = vunpack.c.l.b16 %v37
  %v250 = vunpack.c.h.b16 %v37
  %v251 = vunpack.c.l.b16 %v38
  %v252 = vunpack.c.h.b16 %v38
  %v253 = vunpack.c.l.b16 %v39
  %v254 = vunpack.c.h.b16 %v39
  %v255 = vunpack.c.l.b16 %v40
  %v256 = vunpack.c.h.b16 %v40
  %v257 = vunpack.c.l.b16 %v41
  %v258 = vunpack.c.h.b16 %v41
  %v259 = vunpack.c.l.b16 %v42
  %v260 = vunpack.c.h.b16 %v42
  %v261 = vunpack.c.l.b16 %v43
  %v262 = vunpack.c.h.b16 %v43
  %v263 = vunpack.c.l.b16 %v44
  %v264 = vunpack.c.h.b16 %v44
  %v265 = vunpack.c.l.b16 %v45
  %v266 = vunpack.c.h.b16 %v45
  %v267 = vunpack.c.l.b16 %v46
  %v268 = vunpack.c.h.b16 %v46
  %v269 = vunpack.c.l.b16 %v47
  %v270 = vunpack.c.h.b16 %v47
  %v271 = vunpack.c.l.b16 %v48
  %v272 = vunpack.c.h.b16 %v48
  %v273 = vunpack.c.l.b16 %v49
  %v274 = vunpack.c.h.b16 %v49
  %v275 = vunpack.c.l.b16 %v50
  %v276 = vunpack.c.h.b16 %v50
  %v277 = vunpack.c.l.b16 %v51
  %v278 = vunpack.c.h.b16 %v51
  %v279 = vunpack.c.l.b16 %v52
  %v280 = vunpack.c.h.b16 %v52
  %v281 = vunpack.c.l.b16 %v53
  %v282 = vunpack.c.h.b16 %v53
  %v283 = vunpack.c.l.b16 %v54
  %v284 = vunpack.c.h.b16 %v54
  %v285 = vunpack.c.l.b16 %v55
  %v286 = vunpack.c.h.b16 %v55
  %v287 = vunpack.c.l.b16 %v56
  %v288 = vunpack.c.h.b16 %v56
  %v289 = vunpack.c.l.b16 %v57
  %v290 = vunpack.c.h.b16 %v57
  %v291 = vunpack.c.l.b16 %v58
  %v292 = vunpack.c.h.b16 %v58
  %v293 = vunpack.c.l.b16 %v59
  %v294 = vunpack.c.h.b16 %v59
  %v295 = vunpack.c.l.b16 %v60
  %v296 = vunpack.c.h.b16 %v60
  %v297 = vunpack.c.l.b16 %v61
  %v298 = vunpack.c.h.b16 %v61
  %v299 = vunpack.c.l.b16 %v62
  %v300 = vunpack.c.h.b16 %v62
  %v301 = vunpack.c.l.b16 %v63
  %v302 = vunpack.c.h.b16 %v63
  %v303 = vunpack.c.l.b16 %v64
  %v304 = vunpack.c.h.b16 %v64
  %v305 = vunpack.c.l.b16 %v65
  %v306 = vunpack.c.h.b16 %v65
  %v307 = vunpack.c.l.b16 %v66
  %v308 = vunpack.c.h.b16 %v66
  %v309 = vunpack.c.l.b16 %v67
  %v310 = vunpack.c.h.b16 %v67
  %v311 = vunpack.c.l.b16 %v68
  %v312 = vunpack.c.h.b16 %v68
  %v313 = vunpack.c.l.b16 %v69
  %v314 = vunpack.c.h.b16 %v69
  %v315 = vunpack.c.l.b16 %v70
  %v316 = vunpack.c.h.b16 %v70
  %v317 = vunpack.c.l.b16 %v71
  %v318 = vunpack.c.h.b16 %v71
  %v319 = vunpack.c.l.b16 %v72
  %v320 = vunpack.c.h.b16 %v72
  %v321 = vunpack.c.l.b16 %v73
  %v322 = vunpack.c.h.b16 %v73
  %v323 = vunpack.c.l.b16 %v74
  %v324 = vunpack.c.h.b16 %v74
  %v325 = vunpack.c.l.b16 %v75
  %v326 = vunpack.c.h.b16 %v75
  %v327 = vunpack.c.l.b16 %v76
  %v328 = vunpack.c.h.b16 %v76
  %v329 = vunpack.c.l.b16 %v77
  %v330 = vunpack.c.h.b16 %v77
  %v331 = vunpack.c.l.b16 %v78
  %v332 = vunpack.c.h.b16 %v78
  %v333 = vunpack.c.l.b16 %v79
  %v334 = vunpack.c.h.b16 %v79
  %v335 = vunpack.c.l.b16 %v80
  %v336 = vunpack.c.h.b16 %v80
  %v337 = vunpack.c.l.b16 %v81
  %v338 = vunpack.c.h.b16 %v81
  %v339 = vunpack.c.l.b16 %v82
  %v340 = vunpack.c.h.b16 %v82
  %v341 = vunpack.c.l.b16 %v83
  %v342 = vunpack.c.h.b16 %v83
  %v343 = vunpack.c.l.b16 %v84
  %v344 = vunpack.c.h.b16 %v84
  %v345 = vunpack.c.l.b16 %v85
  %v346 = vunpack.c.h.b16 %v85
  %v347 = vunpack.c.l.b16 %v86
  %v348 = vunpack.c.h.b16 %v86
  %v349 = vunpack.c.l.b16 %v87
  %v350 = vunpack.c.h.b16 %v87
  %v351 = vunpack.c.l.b16 %v88
  %v352 = vunpack.c.h.b16 %v88
  %v353 = vunpack.c.l.b16 %v89
  %v354 = vunpack.c.h.b16 %v89
  %v355 = vunpack.c.l.b16 %v90
  %v356 = vunpack.c.h.b16 %v90
  %v357 = vunpack.c.l.b16 %v91
  %v358 = vunpack.c.h.b16 %v91
  %v359 = vunpack.c.l.b16 %v92
  %v360 = vunpack.c.h.b16 %v92
  %v361 = vunpack.c.l.b16 %v93
  %v362 = vunpack.c.h.b16 %v93
  %v363 = vunpack.c.l.b16 %v94
  %v364 = vunpack.c.h.b16 %v94
  %v365 = vpack.c.b16 %v225, %v221
  %v366 = vpack.c.b16 %v226, %v222
  %v367 = vpack.c.b16 %v227, %v223
  %v368 = vpack.c.b16 %v228, %v224
  %v369 = vpack.c.b16 %v233, %v229
  %v370 = vpack.c.b16 %v234, %v230
  %v371 = vpack.c.b16 %v235, %v231
  %v372 = vpack.c.b16 %v236, %v232
  %v373 = vpack.c.b16 %v241, %v237
  %v374 = vpack.c.b16 %v242, %v238
  %v375 = vpack.c.b16 %v243, %v239
  %v376 = vpack.c.b16 %v244, %v240
  %v377 = vpack.c.b16 %v249, %v245
  %v378 = vpack.c.b16 %v250, %v246
  %v379 = vpack.c.b16 %v251, %v247
  %v380 = vpack.c.b16 %v252, %v248
  %v381 = vpack.c.b16 %v257, %v253
  %v382 = vpack.c.b16 %v258, %v254
  %v383 = vpack.c.b16 %v259, %v255
  %v384 = vpack.c.b16 %v260, %v256
  %v385 = vpack.c.b16 %v265, %v261
  %v386 = vpack.c.b16 %v266, %v262
  %v387 = vpack.c.b16 %v267, %v263
  %v388 = vpack.c.b16 %v268, %v264
  %v389 = vpack.c.b16 %v273, %v269
  %v390 = vpack.c.b16 %v274, %v270
  %v391 = vpack.c.b16 %v275, %v271
  %v392 = vpack.c.b16 %v276, %v272
  %v393 = vpack.c.b16 %v281, %v277
  %v394 = vpack.c.b16 %v282, %v278
  %v395 = vpack.c.b16 %v283, %v279
  %v396 = vpack.c.b16 %v284, %v280
  %v397 = vpack.c.b16 %v289, %v285
  %v398 = vpack.c.b16 %v290, %v286
  %v399 = vpack.c.b16 %v291, %v287
  %v400 = vpack.c.b16 %v292, %v288
  %v401 = vpack.c.b16 %v297, %v293
  %v402 = vpack.c.b16 %v298, %v294
  %v403 = vpack.c.b16 %v299, %v295
  %v404 = vpack.c.b16 %v300, %v296
  %v405 = vpack.c.b16 %v305, %v301
  %v406 = vpack.c.b16 %v306, %v302
  %v407 = vpack.c.b16 %v307, %v303
  %v408 = vpack.c.b16 %v308, %v304
  %v409 = vpack.c.b16 %v313, %v309
  %v410 = vpack.c.b16 %v314, %v310
  %v411 = vpack.c.b16 %v315, %v311
  %v412 = vpack.c.b16 %v316, %v312
  %v413 = vpack.c.b16 %v321, %v317
  %v414 = vpack.c.b16 %v322, %v318
  %v415 = vpack.c.b16 %v323, %v319
  %v416 = vpack.c.b16 %v324, %v320
  %v417 = vpack.c.b16 %v329, %v325
  %v418 = vpack.c.b16 %v330, %v326
  %v419 = vpack.c.b16 %v331, %v327
  %v420 = vpack.c.b16 %v332, %v328
  %v421 = vpack.c.b16 %v337, %v333
  %v422 = vpack.c.b16 %v338, %v334
  %v423 = vpack.c.b16 %v339, %v335
  %v424 = vpack.c.b16 %v340, %v336
  %v425 = vpack.c.b16 %v345, %v341
  %v426 = vpack.c.b16 %v346, %v342
  %v427 = vpack.c.b16 %v347, %v343
  %v428 = vpack.c.b16 %v348, %v344
  %v429 = vpack.c.b16 %v353, %v349
  %v430 = vpack.c.b16 %v354, %v350
  %v431 = vpack.c.b16 %v355, %v351
  %v432 = vpack.c.b16 %v356, %v352
  %v433 = vpack.c.b16 %v361, %v357
  %v434 = vpack.c.b16 %v362, %v358
  %v435 = vpack.c.b16 %v363, %v359
  %v436 = vpack.c.b16 %v364, %v360
  %vm509 = vcmask 261120
  %v511 = vsel %vm509, %v141, 0
  %v514 = vsel %vm509, %v144, 0
  %516 = vmatprep.subr.bf16.mxu0 %v366
  %517 = vmatpush1.bf16.msra.mxu0 %v365
  %518 = vmatprep.subr.bf16.mxu0 %v370
  %519 = vmatpush1.bf16.msra.mxu0 %v369
  %520 = vmatprep.subr.bf16.mxu0 %v374
  %521 = vmatpush1.bf16.msra.mxu0 %v373
  %522 = vmatprep.subr.bf16.mxu0 %v378
  %523 = vmatpush1.bf16.msra.mxu0 %v377
  %524 = vmatprep.subr.bf16.mxu0 %v382
  %525 = vmatpush1.bf16.msra.mxu0 %v381
  %526 = vmatprep.subr.bf16.mxu0 %v386
  %527 = vmatpush1.bf16.msra.mxu0 %v385
  %528 = vmatprep.subr.bf16.mxu0 %v390
  %529 = vmatpush1.bf16.msra.mxu0 %v389
  %530 = vmatprep.subr.bf16.mxu0 %v394
  %531 = vmatpush1.bf16.msra.mxu0 %v393
  %532 = vmatprep.subr.bf16.mxu0 %v398
  %533 = vmatpush1.bf16.msra.mxu0 %v397
  %534 = vmatprep.subr.bf16.mxu0 %v402
  %535 = vmatpush1.bf16.msra.mxu0 %v401
  %536 = vmatprep.subr.bf16.mxu0 %v406
  %537 = vmatpush1.bf16.msra.mxu0 %v405
  %538 = vmatprep.subr.bf16.mxu0 %v410
  %539 = vmatpush1.bf16.msra.mxu0 %v409
  %540 = vmatprep.subr.bf16.mxu0 %v414
  %541 = vmatpush1.bf16.msra.mxu0 %v413
  %542 = vmatprep.subr.bf16.mxu0 %v418
  %543 = vmatpush1.bf16.msra.mxu0 %v417
  %544 = vmatprep.subr.bf16.mxu0 %v422
  %545 = vmatpush1.bf16.msra.mxu0 %v421
  %546 = vmatprep.subr.bf16.mxu0 %v426
  %547 = vmatpush1.bf16.msra.mxu0 %v425
  %548 = vmatprep.mubr.bf16.mxu0 %v140
  %549 = vmatmul.mubr.bf16.gmra.mrb[0].mxu0 %v139
  %v550 = vpop.f32.mrb[0].mxu0
  %v551 = vadd.f32 %v102, %v550
  %v552 = vpop.f32.mrb[0].mxu0
  %v553 = vadd.f32 %v102, %v552
  %v554 = vpop.f32.mrb[0].mxu0
  %v555 = vadd.f32 %v107, %v554
  %v556 = vpop.f32.mrb[0].mxu0
  %v557 = vadd.f32 %v107, %v556
  %558 = vmatprep.mubr.bf16.mxu0 %v143
  %559 = vmatmul.mubr.bf16.gmra.mrb[0].mxu0 %v142
  %v560 = vpop.f32.mrb[0].mxu0
  %v561 = vadd.f32 %v112, %v560
  %v562 = vpop.f32.mrb[0].mxu0
  %v563 = vadd.f32 %v112, %v562
  %v564 = vpop.f32.mrb[0].mxu0
  %v565 = vadd.f32 %v117, %v564
  %v566 = vpop.f32.mrb[0].mxu0
  %v567 = vadd.f32 %v117, %v566
  %568 = vdwg.mxu0
  %569 = vmatprep.subr.bf16.mxu0 %v430
  %570 = vmatpush1.bf16.msra.mxu0 %v429
  %571 = vmatprep.subr.bf16.mxu0 %v434
  %572 = vmatpush1.bf16.msra.mxu0 %v433
  %573 = vmatprep.subr.bf16.mxu0 0
  %574 = vmatpush1.bf16.msra.mxu0 0
  %575 = vmatprep.subr.bf16.mxu0 0
  %576 = vmatpush1.bf16.msra.mxu0 0
  %577 = vmatprep.subr.bf16.mxu0 0
  %578 = vmatpush1.bf16.msra.mxu0 0
  %579 = vmatprep.subr.bf16.mxu0 0
  %580 = vmatpush1.bf16.msra.mxu0 0
  %581 = vmatprep.subr.bf16.mxu0 0
  %582 = vmatpush1.bf16.msra.mxu0 0
  %583 = vmatprep.subr.bf16.mxu0 0
  %584 = vmatpush1.bf16.msra.mxu0 0
  %585 = vmatprep.subr.bf16.mxu0 0
  %586 = vmatpush1.bf16.msra.mxu0 0
  %587 = vmatprep.subr.bf16.mxu0 0
  %588 = vmatpush1.bf16.msra.mxu0 0
  %589 = vmatprep.subr.bf16.mxu0 0
  %590 = vmatpush1.bf16.msra.mxu0 0
  %591 = vmatprep.subr.bf16.mxu0 0
  %592 = vmatpush1.bf16.msra.mxu0 0
  %593 = vmatprep.subr.bf16.mxu0 0
  %594 = vmatpush1.bf16.msra.mxu0 0
  %595 = vmatprep.subr.bf16.mxu0 0
  %596 = vmatpush1.bf16.msra.mxu0 0
  %597 = vmatprep.subr.bf16.mxu0 0
  %598 = vmatpush1.bf16.msra.mxu0 0
  %599 = vmatprep.subr.bf16.mxu0 0
  %600 = vmatpush1.bf16.msra.mxu0 0
  %601 = vmatprep.mubr.bf16.mxu0 0
  %602 = vmatmul.mubr.bf16.gmra.mrb[0].mxu0 %v511
  %v603 = vpop.f32.mrb[0].mxu0
  %v604 = vadd.f32 %v551, %v603
  %v605 = vpop.f32.mrb[0].mxu0
  %v606 = vadd.f32 %v553, %v605
  %v607 = vpop.f32.mrb[0].mxu0
  %v608 = vadd.f32 %v555, %v607
  %v609 = vpop.f32.mrb[0].mxu0
  %v610 = vadd.f32 %v557, %v609
  %611 = vmatprep.mubr.bf16.mxu0 0
  %612 = vmatmul.mubr.bf16.gmra.mrb[0].mxu0 %v514
  %v613 = vpop.f32.mrb[0].mxu0
  %v614 = vadd.f32 %v561, %v613
  %v615 = vpop.f32.mrb[0].mxu0
  %v616 = vadd.f32 %v563, %v615
  %v617 = vpop.f32.mrb[0].mxu0
  %v618 = vadd.f32 %v565, %v617
  %v619 = vpop.f32.mrb[0].mxu0
  %v620 = vadd.f32 %v567, %v619
  %621 = vdwg.mxu0
  %622 = vmatprep.subr.bf16.mxu0 %v368
  %623 = vmatpush1.bf16.msra.mxu0 %v367
  %624 = vmatprep.subr.bf16.mxu0 %v372
  %625 = vmatpush1.bf16.msra.mxu0 %v371
  %626 = vmatprep.subr.bf16.mxu0 %v376
  %627 = vmatpush1.bf16.msra.mxu0 %v375
  %628 = vmatprep.subr.bf16.mxu0 %v380
  %629 = vmatpush1.bf16.msra.mxu0 %v379
  %630 = vmatprep.subr.bf16.mxu0 %v384
  %631 = vmatpush1.bf16.msra.mxu0 %v383
  %632 = vmatprep.subr.bf16.mxu0 %v388
  %633 = vmatpush1.bf16.msra.mxu0 %v387
  %634 = vmatprep.subr.bf16.mxu0 %v392
  %635 = vmatpush1.bf16.msra.mxu0 %v391
  %636 = vmatprep.subr.bf16.mxu0 %v396
  %637 = vmatpush1.bf16.msra.mxu0 %v395
  %638 = vmatprep.subr.bf16.mxu0 %v400
  %639 = vmatpush1.bf16.msra.mxu0 %v399
  %640 = vmatprep.subr.bf16.mxu0 %v404
  %641 = vmatpush1.bf16.msra.mxu0 %v403
  %642 = vmatprep.subr.bf16.mxu0 %v408
  %643 = vmatpush1.bf16.msra.mxu0 %v407
  %644 = vmatprep.subr.bf16.mxu0 %v412
  %645 = vmatpush1.bf16.msra.mxu0 %v411
  %646 = vmatprep.subr.bf16.mxu0 %v416
  %647 = vmatpush1.bf16.msra.mxu0 %v415
  %648 = vmatprep.subr.bf16.mxu0 %v420
  %649 = vmatpush1.bf16.msra.mxu0 %v419
  %650 = vmatprep.subr.bf16.mxu0 %v424
  %651 = vmatpush1.bf16.msra.mxu0 %v423
  %652 = vmatprep.subr.bf16.mxu0 %v428
  %653 = vmatpush1.bf16.msra.mxu0 %v427
  %654 = vmatprep.mubr.bf16.mxu0 %v140
  %655 = vmatmul.mubr.bf16.gmra.mrb[0].mxu0 %v139
  %v656 = vpop.f32.mrb[0].mxu0
  %v657 = vadd.f32 %v102, %v656
  %v658 = vpop.f32.mrb[0].mxu0
  %v659 = vadd.f32 %v102, %v658
  %v660 = vpop.f32.mrb[0].mxu0
  %v661 = vadd.f32 %v107, %v660
  %v662 = vpop.f32.mrb[0].mxu0
  %v663 = vadd.f32 %v107, %v662
  %664 = vmatprep.mubr.bf16.mxu0 %v143
  %665 = vmatmul.mubr.bf16.gmra.mrb[0].mxu0 %v142
  %v666 = vpop.f32.mrb[0].mxu0
  %v667 = vadd.f32 %v112, %v666
  %v668 = vpop.f32.mrb[0].mxu0
  %v669 = vadd.f32 %v112, %v668
  %v670 = vpop.f32.mrb[0].mxu0
  %v671 = vadd.f32 %v117, %v670
  %v672 = vpop.f32.mrb[0].mxu0
  %v673 = vadd.f32 %v117, %v672
  %674 = vdwg.mxu0
  %675 = vmatprep.subr.bf16.mxu0 %v432
  %676 = vmatpush1.bf16.msra.mxu0 %v431
  %677 = vmatprep.subr.bf16.mxu0 %v436
  %678 = vmatpush1.bf16.msra.mxu0 %v435
  %679 = vmatprep.subr.bf16.mxu0 0
  %680 = vmatpush1.bf16.msra.mxu0 0
  %681 = vmatprep.subr.bf16.mxu0 0
  %682 = vmatpush1.bf16.msra.mxu0 0
  %683 = vmatprep.subr.bf16.mxu0 0
  %684 = vmatpush1.bf16.msra.mxu0 0
  %685 = vmatprep.subr.bf16.mxu0 0
  %686 = vmatpush1.bf16.msra.mxu0 0
  %687 = vmatprep.subr.bf16.mxu0 0
  %688 = vmatpush1.bf16.msra.mxu0 0
  %689 = vmatprep.subr.bf16.mxu0 0
  %690 = vmatpush1.bf16.msra.mxu0 0
  %691 = vmatprep.subr.bf16.mxu0 0
  %692 = vmatpush1.bf16.msra.mxu0 0
  %693 = vmatprep.subr.bf16.mxu0 0
  %694 = vmatpush1.bf16.msra.mxu0 0
  %695 = vmatprep.subr.bf16.mxu0 0
  %696 = vmatpush1.bf16.msra.mxu0 0
  %697 = vmatprep.subr.bf16.mxu0 0
  %698 = vmatpush1.bf16.msra.mxu0 0
  %699 = vmatprep.subr.bf16.mxu0 0
  %700 = vmatpush1.bf16.msra.mxu0 0
  %701 = vmatprep.subr.bf16.mxu0 0
  %702 = vmatpush1.bf16.msra.mxu0 0
  %703 = vmatprep.subr.bf16.mxu0 0
  %704 = vmatpush1.bf16.msra.mxu0 0
  %705 = vmatprep.subr.bf16.mxu0 0
  %706 = vmatpush1.bf16.msra.mxu0 0
  %707 = vmatprep.mubr.bf16.mxu0 0
  %708 = vmatmul.mubr.bf16.gmra.mrb[0].mxu0 %v511
  %v709 = vpop.f32.mrb[0].mxu0
  %v710 = vadd.f32 %v657, %v709
  %v711 = vpop.f32.mrb[0].mxu0
  %v712 = vadd.f32 %v659, %v711
  %v713 = vpop.f32.mrb[0].mxu0
  %v714 = vadd.f32 %v661, %v713
  %v715 = vpop.f32.mrb[0].mxu0
  %v716 = vadd.f32 %v663, %v715
  %717 = vmatprep.mubr.bf16.mxu0 0
  %718 = vmatmul.mubr.bf16.gmra.mrb[0].mxu0 %v514
  %v719 = vpop.f32.mrb[0].mxu0
  %v720 = vadd.f32 %v667, %v719
  %v721 = vpop.f32.mrb[0].mxu0
  %v722 = vadd.f32 %v669, %v721
  %v723 = vpop.f32.mrb[0].mxu0
  %v724 = vadd.f32 %v671, %v723
  %v725 = vpop.f32.mrb[0].mxu0
  %v726 = vadd.f32 %v673, %v725
  %727 = vdwg.mxu0
  %v728 = vpack.c.bf16 %v608, %v604
  %v729 = vpack.c.bf16 %v610, %v606
  %v730 = vpack.c.bf16 %v714, %v710
  %v731 = vpack.c.bf16 %v716, %v712
  %v732 = vpack.c.bf16 %v618, %v614
  %v733 = vpack.c.bf16 %v620, %v616
  %v734 = vpack.c.bf16 %v724, %v720
  %v735 = vpack.c.bf16 %v726, %v722
  %v744 = vunpack.c.l.b16 %v728
  %v745 = vunpack.c.l.b16 %v729
  %v746 = vunpack.c.l.b16 %v730
  %v747 = vunpack.c.l.b16 %v731
  %v748 = vunpack.c.h.b16 %v728
  %v749 = vunpack.c.h.b16 %v729
  %v750 = vunpack.c.h.b16 %v730
  %v751 = vunpack.c.h.b16 %v731
  %v752 = vunpack.c.l.b16 %v732
  %v753 = vunpack.c.l.b16 %v733
  %v754 = vunpack.c.l.b16 %v734
  %v755 = vunpack.c.l.b16 %v735
  %v756 = vunpack.c.h.b16 %v732
  %v757 = vunpack.c.h.b16 %v733
  %v758 = vunpack.c.h.b16 %v734
  %v759 = vunpack.c.h.b16 %v735
  %v760 = vpack.c.b16 %v745, %v744
  %v761 = vpack.c.b16 %v747, %v746
  %v762 = vpack.c.b16 %v749, %v748
  %v763 = vpack.c.b16 %v751, %v750
  %v764 = vpack.c.b16 %v753, %v752
  %v765 = vpack.c.b16 %v755, %v754
  %v766 = vpack.c.b16 %v757, %v756
  %v767 = vpack.c.b16 %v759, %v758
  %776 = vst [vmem:[%s3] sm:$0xff] %v760
  %777 = vst [vmem:[%s3 + $0x8] sm:$0xff] %v761
  %778 = vst [vmem:[%s3 + $0x10] sm:$0xff] %v762
  %779 = vst [vmem:[%s3 + $0x18] sm:$0xff] %v763
  %780 = vst [vmem:[%s3 + $0x20] sm:$0xff] %v764
  %781 = vst [vmem:[%s3 + $0x28] sm:$0xff] %v765
  %782 = vst [vmem:[%s3 + $0x30] sm:$0xff] %v766
  %783 = vst [vmem:[%s3 + $0x38] sm:$0xff] %v767
  // Predicated region
  $region14: #{_lambda_.4} parent=0 // pred_check
    _
  $region15: #{_lambda_.4} parent=0 // pred_check_branch
    %785 = sbr.rel (0) target = $region17
  $region16: #{_lambda_.4} parent=0 // pred_region
    _
  $region17: #{_lambda_.4} parent=0 // pred_fallthru
    _
  // Predicated region
  $region18: #{_lambda_.4} parent=0 // pred_check
    _
  $region19: #{_lambda_.4} parent=0 // pred_check_branch
    %787 = sbr.rel (0) target = $region21
  $region20: #{_lambda_.4} parent=0 // pred_region
    _
  $region21: #{_lambda_.4} parent=0 // pred_fallthru
    _

// kernel: _lambda_.5
$region0: #{_lambda_.5}
  #allocation0 [shape = 'u32[]', space=smem, size = 0x4, offset = 0x4, fixed_abs, tag = 'smem constant byte address 0x4 - core index']
  #allocation1 [shape = 'u32[144,128]{1,0:T(1,128)}', space=vmem, size = 0x12000, scoped, tag = 'internal scratch']
  %s0 = inlined_call_operand.vmem [shape: bf16[16,800], index: 0, kind: input, shape index: {}]
  %s1 = inlined_call_operand.vmem [shape: bf16[800,1664], index: 1, kind: input, shape index: {}]
  %s2 = inlined_call_operand.vmem [shape: f32[16,1], index: 2, kind: input, shape index: {}]
  %s3 = inlined_call_operand.vmem [shape: f32[16,1664], index: 3, kind: output, shape index: {}]
  %s4 = sld [smem:[#allocation0]]
  $region22: #{_lambda_.5} parent=0
    _
  %s6 = ssub.s32 1, %s4
  %s7 = scalar_select 0, %s6, %s4
  // Predicated region
  $region2: #{_lambda_.5} parent=0 // pred_check
    _
  $region3: #{_lambda_.5} parent=0 // pred_check_branch
    %9 = sbr.rel (0) target = $region5
  $region4: #{_lambda_.5} parent=0 // pred_region
    _
  $region5: #{_lambda_.5} parent=0 // pred_fallthru
    _
  // Predicated region
  $region6: #{_lambda_.5} parent=0 // pred_check
    _
  $region7: #{_lambda_.5} parent=0 // pred_check_branch
    %11 = sbr.rel (0) target = $region9
  $region8: #{_lambda_.5} parent=0 // pred_region
    _
  $region9: #{_lambda_.5} parent=0 // pred_fallthru
    _
  // Predicated region
  $region10: #{_lambda_.5} parent=0 // pred_check
    _
  $region11: #{_lambda_.5} parent=0 // pred_check_branch
    %13 = sbr.rel (0) target = $region13
  $region12: #{_lambda_.5} parent=0 // pred_region
    _
  $region13: #{_lambda_.5} parent=0 // pred_fallthru
    _
  %v15 = vld [vmem:[%s0] sm:$0xff]
  %v16 = vld [vmem:[%s0 + $0x8] sm:$0xff]
  %v17 = vld [vmem:[%s0 + $0x10] sm:$0xff]
  %v18 = vld [vmem:[%s0 + $0x18] sm:$0xf]
  %v19 = vld [vmem:[%s0 + $0x1c] sm:$0xff]
  %v20 = vld [vmem:[%s0 + $0x24] sm:$0xff]
  %v21 = vld [vmem:[%s0 + $0x2c] sm:$0xff]
  %v22 = vld [vmem:[%s0 + $0x34] sm:$0xf]
  %v23 = vld [vmem:[%s1] sm:$0xff]
  %v24 = vld [vmem:[%s1 + $0x8] sm:$0xff]
  %v25 = vld [vmem:[%s1 + $0x10] sm:$0xff]
  %v26 = vld [vmem:[%s1 + $0x18] sm:$0xff]
  %v27 = vld [vmem:[%s1 + $0x20] sm:$0xff]
  %v28 = vld [vmem:[%s1 + $0x28] sm:$0xff]
  %v29 = vld [vmem:[%s1 + $0x30] sm:$0xf]
  %v30 = vld [vmem:[%s1 + $0x34] sm:$0xff]
  %v31 = vld [vmem:[%s1 + $0x3c] sm:$0xff]
  %v32 = vld [vmem:[%s1 + $0x44] sm:$0xff]
  %v33 = vld [vmem:[%s1 + $0x4c] sm:$0xff]
  %v34 = vld [vmem:[%s1 + $0x54] sm:$0xff]
  %v35 = vld [vmem:[%s1 + $0x5c] sm:$0xff]
  %v36 = vld [vmem:[%s1 + $0x64] sm:$0xf]
  %v37 = vld [vmem:[%s1 + $0x68] sm:$0xff]
  %v38 = vld [vmem:[%s1 + $0x70] sm:$0xff]
  %v39 = vld [vmem:[%s1 + $0x78] sm:$0xff]
  %v40 = vld [vmem:[%s1 + $0x80] sm:$0xff]
  %v41 = vld [vmem:[%s1 + $0x88] sm:$0xff]
  %v42 = vld [vmem:[%s1 + $0x90] sm:$0xff]
  %v43 = vld [vmem:[%s1 + $0x98] sm:$0xf]
  %v44 = vld [vmem:[%s1 + $0x9c] sm:$0xff]
  %v45 = vld [vmem:[%s1 + $0xa4] sm:$0xff]
  %v46 = vld [vmem:[%s1 + $0xac] sm:$0xff]
  %v47 = vld [vmem:[%s1 + $0xb4] sm:$0xff]
  %v48 = vld [vmem:[%s1 + $0xbc] sm:$0xff]
  %v49 = vld [vmem:[%s1 + $0xc4] sm:$0xff]
  %v50 = vld [vmem:[%s1 + $0xcc] sm:$0xf]
  %v51 = vld [vmem:[%s1 + $0xd0] sm:$0xff]
  %v52 = vld [vmem:[%s1 + $0xd8] sm:$0xff]
  %v53 = vld [vmem:[%s1 + $0xe0] sm:$0xff]
  %v54 = vld [vmem:[%s1 + $0xe8] sm:$0xff]
  %v55 = vld [vmem:[%s1 + $0xf0] sm:$0xff]
  %v56 = vld [vmem:[%s1 + $0xf8] sm:$0xff]
  %v57 = vld [vmem:[%s1 + $0x100] sm:$0xf]
  %v58 = vld [vmem:[%s1 + $0x104] sm:$0xff]
  %v59 = vld [vmem:[%s1 + $0x10c] sm:$0xff]
  %v60 = vld [vmem:[%s1 + $0x114] sm:$0xff]
  %v61 = vld [vmem:[%s1 + $0x11c] sm:$0xff]
  %v62 = vld [vmem:[%s1 + $0x124] sm:$0xff]
  %v63 = vld [vmem:[%s1 + $0x12c] sm:$0xff]
  %v64 = vld [vmem:[%s1 + $0x134] sm:$0xf]
  %v65 = vld [vmem:[%s1 + $0x138] sm:$0xff]
  %v66 = vld [vmem:[%s1 + $0x140] sm:$0xff]
  %v67 = vld [vmem:[%s1 + $0x148] sm:$0xff]
  %v68 = vld [vmem:[%s1 + $0x150] sm:$0xff]
  %v69 = vld [vmem:[%s1 + $0x158] sm:$0xff]
  %v70 = vld [vmem:[%s1 + $0x160] sm:$0xff]
  %v71 = vld [vmem:[%s1 + $0x168] sm:$0xf]
  %v72 = vld [vmem:[%s1 + $0x16c] sm:$0xff]
  %v73 = vld [vmem:[%s1 + $0x174] sm:$0xff]
  %v74 = vld [vmem:[%s1 + $0x17c] sm:$0xff]
  %v75 = vld [vmem:[%s1 + $0x184] sm:$0xff]
  %v76 = vld [vmem:[%s1 + $0x18c] sm:$0xff]
  %v77 = vld [vmem:[%s1 + $0x194] sm:$0xff]
  %v78 = vld [vmem:[%s1 + $0x19c] sm:$0xf]
  %v79 = vld [vmem:[%s1 + $0x1a0] sm:$0xff]
  %v80 = vld [vmem:[%s1 + $0x1a8] sm:$0xff]
  %v81 = vld [vmem:[%s1 + $0x1b0] sm:$0xff]
  %v82 = vld [vmem:[%s1 + $0x1b8] sm:$0xff]
  %v83 = vld [vmem:[%s1 + $0x1c0] sm:$0xff]
  %v84 = vld [vmem:[%s1 + $0x1c8] sm:$0xff]
  %v85 = vld [vmem:[%s1 + $0x1d0] sm:$0xf]
  %v86 = vld [vmem:[%s1 + $0x1d4] sm:$0xff]
  %v87 = vld [vmem:[%s1 + $0x1dc] sm:$0xff]
  %v88 = vld [vmem:[%s1 + $0x1e4] sm:$0xff]
  %v89 = vld [vmem:[%s1 + $0x1ec] sm:$0xff]
  %v90 = vld [vmem:[%s1 + $0x1f4] sm:$0xff]
  %v91 = vld [vmem:[%s1 + $0x1fc] sm:$0xff]
  %v92 = vld [vmem:[%s1 + $0x204] sm:$0xf]
  %v93 = vld [vmem:[%s1 + $0x208] sm:$0xff]
  %v94 = vld [vmem:[%s1 + $0x210] sm:$0xff]
  %v95 = vld [vmem:[%s1 + $0x218] sm:$0xff]
  %v96 = vld [vmem:[%s1 + $0x220] sm:$0xff]
  %v97 = vld [vmem:[%s1 + $0x228] sm:$0xff]
  %v98 = vld [vmem:[%s1 + $0x230] sm:$0xff]
  %v99 = vld [vmem:[%s1 + $0x238] sm:$0xf]
  %v100 = vld [vmem:[%s1 + $0x23c] sm:$0xff]
  %v101 = vld [vmem:[%s1 + $0x244] sm:$0xff]
  %v102 = vld [vmem:[%s1 + $0x24c] sm:$0xff]
  %v103 = vld [vmem:[%s1 + $0x254] sm:$0xff]
  %v104 = vld [vmem:[%s1 + $0x25c] sm:$0xff]
  %v105 = vld [vmem:[%s1 + $0x264] sm:$0xff]
  %v106 = vld [vmem:[%s1 + $0x26c] sm:$0xf]
  %v107 = vld [vmem:[%s1 + $0x270] sm:$0xff]
  %v108 = vld [vmem:[%s1 + $0x278] sm:$0xff]
  %v109 = vld [vmem:[%s1 + $0x280] sm:$0xff]
  %v110 = vld [vmem:[%s1 + $0x288] sm:$0xff]
  %v111 = vld [vmem:[%s1 + $0x290] sm:$0xff]
  %v112 = vld [vmem:[%s1 + $0x298] sm:$0xff]
  %v113 = vld [vmem:[%s1 + $0x2a0] sm:$0xf]
  %v114 = vld [vmem:[%s1 + $0x2a4] sm:$0xff]
  %v115 = vld [vmem:[%s1 + $0x2ac] sm:$0xff]
  %v116 = vld [vmem:[%s1 + $0x2b4] sm:$0xff]
  %v117 = vld [vmem:[%s1 + $0x2bc] sm:$0xff]
  %v118 = vld [vmem:[%s1 + $0x2c4] sm:$0xff]
  %v119 = vld [vmem:[%s1 + $0x2cc] sm:$0xff]
  %v120 = vld [vmem:[%s1 + $0x2d4] sm:$0xf]
  %v121 = vld [vmem:[%s1 + $0x2d8] sm:$0xff]
  %v122 = vld [vmem:[%s1 + $0x2e0] sm:$0xff]
  %v123 = vld [vmem:[%s1 + $0x2e8] sm:$0xff]
  %v124 = vld [vmem:[%s1 + $0x2f0] sm:$0xff]
  %v125 = vld [vmem:[%s1 + $0x2f8] sm:$0xff]
  %v126 = vld [vmem:[%s1 + $0x300] sm:$0xff]
  %v127 = vld [vmem:[%s1 + $0x308] sm:$0xf]
  %v128 = vld [vmem:[%s1 + $0x30c] sm:$0xff]
  %v129 = vld [vmem:[%s1 + $0x314] sm:$0xff]
  %v130 = vld [vmem:[%s1 + $0x31c] sm:$0xff]
  %v131 = vld [vmem:[%s1 + $0x324] sm:$0xff]
  %v132 = vld [vmem:[%s1 + $0x32c] sm:$0xff]
  %v133 = vld [vmem:[%s1 + $0x334] sm:$0xff]
  %v134 = vld [vmem:[%s1 + $0x33c] sm:$0xf]
  %v135 = vld [vmem:[%s1 + $0x340] sm:$0xff]
  %v136 = vld [vmem:[%s1 + $0x348] sm:$0xff]
  %v137 = vld [vmem:[%s1 + $0x350] sm:$0xff]
  %v138 = vld [vmem:[%s1 + $0x358] sm:$0xff]
  %v139 = vld [vmem:[%s1 + $0x360] sm:$0xff]
  %v140 = vld [vmem:[%s1 + $0x368] sm:$0xff]
  %v141 = vld [vmem:[%s1 + $0x370] sm:$0xf]
  %v142 = vld [vmem:[%s1 + $0x374] sm:$0xff]
  %v143 = vld [vmem:[%s1 + $0x37c] sm:$0xff]
  %v144 = vld [vmem:[%s1 + $0x384] sm:$0xff]
  %v145 = vld [vmem:[%s1 + $0x38c] sm:$0xff]
  %v146 = vld [vmem:[%s1 + $0x394] sm:$0xff]
  %v147 = vld [vmem:[%s1 + $0x39c] sm:$0xff]
  %v148 = vld [vmem:[%s1 + $0x3a4] sm:$0xf]
  %v149 = vld [vmem:[%s1 + $0x3a8] sm:$0xff]
  %v150 = vld [vmem:[%s1 + $0x3b0] sm:$0xff]
  %v151 = vld [vmem:[%s1 + $0x3b8] sm:$0xff]
  %v152 = vld [vmem:[%s1 + $0x3c0] sm:$0xff]
  %v153 = vld [vmem:[%s1 + $0x3c8] sm:$0xff]
  %v154 = vld [vmem:[%s1 + $0x3d0] sm:$0xff]
  %v155 = vld [vmem:[%s1 + $0x3d8] sm:$0xf]
  %v156 = vld [vmem:[%s1 + $0x3dc] sm:$0xff]
  %v157 = vld [vmem:[%s1 + $0x3e4] sm:$0xff]
  %v158 = vld [vmem:[%s1 + $0x3ec] sm:$0xff]
  %v159 = vld [vmem:[%s1 + $0x3f4] sm:$0xff]
  %v160 = vld [vmem:[%s1 + $0x3fc] sm:$0xff]
  %v161 = vld [vmem:[%s1 + $0x404] sm:$0xff]
  %v162 = vld [vmem:[%s1 + $0x40c] sm:$0xf]
  %v163 = vld [vmem:[%s1 + $0x410] sm:$0xff]
  %v164 = vld [vmem:[%s1 + $0x418] sm:$0xff]
  %v165 = vld [vmem:[%s1 + $0x420] sm:$0xff]
  %v166 = vld [vmem:[%s1 + $0x428] sm:$0xff]
  %v167 = vld [vmem:[%s1 + $0x430] sm:$0xff]
  %v168 = vld [vmem:[%s1 + $0x438] sm:$0xff]
  %v169 = vld [vmem:[%s1 + $0x440] sm:$0xf]
  %v170 = vld [vmem:[%s1 + $0x444] sm:$0xff]
  %v171 = vld [vmem:[%s1 + $0x44c] sm:$0xff]
  %v172 = vld [vmem:[%s1 + $0x454] sm:$0xff]
  %v173 = vld [vmem:[%s1 + $0x45c] sm:$0xff]
  %v174 = vld [vmem:[%s1 + $0x464] sm:$0xff]
  %v175 = vld [vmem:[%s1 + $0x46c] sm:$0xff]
  %v176 = vld [vmem:[%s1 + $0x474] sm:$0xf]
  %v177 = vld [vmem:[%s1 + $0x478] sm:$0xff]
  %v178 = vld [vmem:[%s1 + $0x480] sm:$0xff]
  %v179 = vld [vmem:[%s1 + $0x488] sm:$0xff]
  %v180 = vld [vmem:[%s1 + $0x490] sm:$0xff]
  %v181 = vld [vmem:[%s1 + $0x498] sm:$0xff]
  %v182 = vld [vmem:[%s1 + $0x4a0] sm:$0xff]
  %v183 = vld [vmem:[%s1 + $0x4a8] sm:$0xf]
  %v184 = vld [vmem:[%s1 + $0x4ac] sm:$0xff]
  %v185 = vld [vmem:[%s1 + $0x4b4] sm:$0xff]
  %v186 = vld [vmem:[%s1 + $0x4bc] sm:$0xff]
  %v187 = vld [vmem:[%s1 + $0x4c4] sm:$0xff]
  %v188 = vld [vmem:[%s1 + $0x4cc] sm:$0xff]
  %v189 = vld [vmem:[%s1 + $0x4d4] sm:$0xff]
  %v190 = vld [vmem:[%s1 + $0x4dc] sm:$0xf]
  %v191 = vld [vmem:[%s1 + $0x4e0] sm:$0xff]
  %v192 = vld [vmem:[%s1 + $0x4e8] sm:$0xff]
  %v193 = vld [vmem:[%s1 + $0x4f0] sm:$0xff]
  %v194 = vld [vmem:[%s1 + $0x4f8] sm:$0xff]
  %v195 = vld [vmem:[%s1 + $0x500] sm:$0xff]
  %v196 = vld [vmem:[%s1 + $0x508] sm:$0xff]
  %v197 = vld [vmem:[%s1 + $0x510] sm:$0xf]
  %v198 = vld [vmem:[%s1 + $0x514] sm:$0xff]
  %v199 = vld [vmem:[%s1 + $0x51c] sm:$0xff]
  %v200 = vld [vmem:[%s1 + $0x524] sm:$0xff]
  %v201 = vld [vmem:[%s1 + $0x52c] sm:$0xff]
  %v202 = vld [vmem:[%s1 + $0x534] sm:$0xff]
  %v203 = vld [vmem:[%s1 + $0x53c] sm:$0xff]
  %v204 = vld [vmem:[%s1 + $0x544] sm:$0xf]
  %v205 = vld [vmem:[%s1 + $0x548] sm:$0xff]
  %v206 = vld [vmem:[%s1 + $0x550] sm:$0xff]
  %v207 = vld [vmem:[%s1 + $0x558] sm:$0xff]
  %v208 = vld [vmem:[%s1 + $0x560] sm:$0xff]
  %v209 = vld [vmem:[%s1 + $0x568] sm:$0xff]
  %v210 = vld [vmem:[%s1 + $0x570] sm:$0xff]
  %v211 = vld [vmem:[%s1 + $0x578] sm:$0xf]
  %v212 = vld [vmem:[%s1 + $0x57c] sm:$0xff]
  %v213 = vld [vmem:[%s1 + $0x584] sm:$0xff]
  %v214 = vld [vmem:[%s1 + $0x58c] sm:$0xff]
  %v215 = vld [vmem:[%s1 + $0x594] sm:$0xff]
  %v216 = vld [vmem:[%s1 + $0x59c] sm:$0xff]
  %v217 = vld [vmem:[%s1 + $0x5a4] sm:$0xff]
  %v218 = vld [vmem:[%s1 + $0x5ac] sm:$0xf]
  %v219 = vld [vmem:[%s1 + $0x5b0] sm:$0xff]
  %v220 = vld [vmem:[%s1 + $0x5b8] sm:$0xff]
  %v221 = vld [vmem:[%s1 + $0x5c0] sm:$0xff]
  %v222 = vld [vmem:[%s1 + $0x5c8] sm:$0xff]
  %v223 = vld [vmem:[%s1 + $0x5d0] sm:$0xff]
  %v224 = vld [vmem:[%s1 + $0x5d8] sm:$0xff]
  %v225 = vld [vmem:[%s1 + $0x5e0] sm:$0xf]
  %v226 = vld [vmem:[%s1 + $0x5e4] sm:$0xff]
  %v227 = vld [vmem:[%s1 + $0x5ec] sm:$0xff]
  %v228 = vld [vmem:[%s1 + $0x5f4] sm:$0xff]
  %v229 = vld [vmem:[%s1 + $0x5fc] sm:$0xff]
  %v230 = vld [vmem:[%s1 + $0x604] sm:$0xff]
  %v231 = vld [vmem:[%s1 + $0x60c] sm:$0xff]
  %v232 = vld [vmem:[%s1 + $0x614] sm:$0xf]
  %v233 = vld [vmem:[%s1 + $0x618] sm:$0xff]
  %v234 = vld [vmem:[%s1 + $0x620] sm:$0xff]
  %v235 = vld [vmem:[%s1 + $0x628] sm:$0xff]
  %v236 = vld [vmem:[%s1 + $0x630] sm:$0xff]
  %v237 = vld [vmem:[%s1 + $0x638] sm:$0xff]
  %v238 = vld [vmem:[%s1 + $0x640] sm:$0xff]
  %v239 = vld [vmem:[%s1 + $0x648] sm:$0xf]
  %v240 = vld [vmem:[%s1 + $0x64c] sm:$0xff]
  %v241 = vld [vmem:[%s1 + $0x654] sm:$0xff]
  %v242 = vld [vmem:[%s1 + $0x65c] sm:$0xff]
  %v243 = vld [vmem:[%s1 + $0x664] sm:$0xff]
  %v244 = vld [vmem:[%s1 + $0x66c] sm:$0xff]
  %v245 = vld [vmem:[%s1 + $0x674] sm:$0xff]
  %v246 = vld [vmem:[%s1 + $0x67c] sm:$0xf]
  %v247 = vld [vmem:[%s1 + $0x680] sm:$0xff]
  %v248 = vld [vmem:[%s1 + $0x688] sm:$0xff]
  %v249 = vld [vmem:[%s1 + $0x690] sm:$0xff]
  %v250 = vld [vmem:[%s1 + $0x698] sm:$0xff]
  %v251 = vld [vmem:[%s1 + $0x6a0] sm:$0xff]
  %v252 = vld [vmem:[%s1 + $0x6a8] sm:$0xff]
  %v253 = vld [vmem:[%s1 + $0x6b0] sm:$0xf]
  %v254 = vld [vmem:[%s1 + $0x6b4] sm:$0xff]
  %v255 = vld [vmem:[%s1 + $0x6bc] sm:$0xff]
  %v256 = vld [vmem:[%s1 + $0x6c4] sm:$0xff]
  %v257 = vld [vmem:[%s1 + $0x6cc] sm:$0xff]
  %v258 = vld [vmem:[%s1 + $0x6d4] sm:$0xff]
  %v259 = vld [vmem:[%s1 + $0x6dc] sm:$0xff]
  %v260 = vld [vmem:[%s1 + $0x6e4] sm:$0xf]
  %v261 = vld [vmem:[%s1 + $0x6e8] sm:$0xff]
  %v262 = vld [vmem:[%s1 + $0x6f0] sm:$0xff]
  %v263 = vld [vmem:[%s1 + $0x6f8] sm:$0xff]
  %v264 = vld [vmem:[%s1 + $0x700] sm:$0xff]
  %v265 = vld [vmem:[%s1 + $0x708] sm:$0xff]
  %v266 = vld [vmem:[%s1 + $0x710] sm:$0xff]
  %v267 = vld [vmem:[%s1 + $0x718] sm:$0xf]
  %v268 = vld [vmem:[%s1 + $0x71c] sm:$0xff]
  %v269 = vld [vmem:[%s1 + $0x724] sm:$0xff]
  %v270 = vld [vmem:[%s1 + $0x72c] sm:$0xff]
  %v271 = vld [vmem:[%s1 + $0x734] sm:$0xff]
  %v272 = vld [vmem:[%s1 + $0x73c] sm:$0xff]
  %v273 = vld [vmem:[%s1 + $0x744] sm:$0xff]
  %v274 = vld [vmem:[%s1 + $0x74c] sm:$0xf]
  %v275 = vld [vmem:[%s1 + $0x750] sm:$0xff]
  %v276 = vld [vmem:[%s1 + $0x758] sm:$0xff]
  %v277 = vld [vmem:[%s1 + $0x760] sm:$0xff]
  %v278 = vld [vmem:[%s1 + $0x768] sm:$0xff]
  %v279 = vld [vmem:[%s1 + $0x770] sm:$0xff]
  %v280 = vld [vmem:[%s1 + $0x778] sm:$0xff]
  %v281 = vld [vmem:[%s1 + $0x780] sm:$0xf]
  %v282 = vld [vmem:[%s1 + $0x784] sm:$0xff]
  %v283 = vld [vmem:[%s1 + $0x78c] sm:$0xff]
  %v284 = vld [vmem:[%s1 + $0x794] sm:$0xff]
  %v285 = vld [vmem:[%s1 + $0x79c] sm:$0xff]
  %v286 = vld [vmem:[%s1 + $0x7a4] sm:$0xff]
  %v287 = vld [vmem:[%s1 + $0x7ac] sm:$0xff]
  %v288 = vld [vmem:[%s1 + $0x7b4] sm:$0xf]
  %v289 = vld [vmem:[%s1 + $0x7b8] sm:$0xff]
  %v290 = vld [vmem:[%s1 + $0x7c0] sm:$0xff]
  %v291 = vld [vmem:[%s1 + $0x7c8] sm:$0xff]
  %v292 = vld [vmem:[%s1 + $0x7d0] sm:$0xff]
  %v293 = vld [vmem:[%s1 + $0x7d8] sm:$0xff]
  %v294 = vld [vmem:[%s1 + $0x7e0] sm:$0xff]
  %v295 = vld [vmem:[%s1 + $0x7e8] sm:$0xf]
  %v296 = vld [vmem:[%s1 + $0x7ec] sm:$0xff]
  %v297 = vld [vmem:[%s1 + $0x7f4] sm:$0xff]
  %v298 = vld [vmem:[%s1 + $0x7fc] sm:$0xff]
  %v299 = vld [vmem:[%s1 + $0x804] sm:$0xff]
  %v300 = vld [vmem:[%s1 + $0x80c] sm:$0xff]
  %v301 = vld [vmem:[%s1 + $0x814] sm:$0xff]
  %v302 = vld [vmem:[%s1 + $0x81c] sm:$0xf]
  %v303 = vld [vmem:[%s1 + $0x820] sm:$0xff]
  %v304 = vld [vmem:[%s1 + $0x828] sm:$0xff]
  %v305 = vld [vmem:[%s1 + $0x830] sm:$0xff]
  %v306 = vld [vmem:[%s1 + $0x838] sm:$0xff]
  %v307 = vld [vmem:[%s1 + $0x840] sm:$0xff]
  %v308 = vld [vmem:[%s1 + $0x848] sm:$0xff]
  %v309 = vld [vmem:[%s1 + $0x850] sm:$0xf]
  %v310 = vld [vmem:[%s1 + $0x854] sm:$0xff]
  %v311 = vld [vmem:[%s1 + $0x85c] sm:$0xff]
  %v312 = vld [vmem:[%s1 + $0x864] sm:$0xff]
  %v313 = vld [vmem:[%s1 + $0x86c] sm:$0xff]
  %v314 = vld [vmem:[%s1 + $0x874] sm:$0xff]
  %v315 = vld [vmem:[%s1 + $0x87c] sm:$0xff]
  %v316 = vld [vmem:[%s1 + $0x884] sm:$0xf]
  %v317 = vld [vmem:[%s1 + $0x888] sm:$0xff]
  %v318 = vld [vmem:[%s1 + $0x890] sm:$0xff]
  %v319 = vld [vmem:[%s1 + $0x898] sm:$0xff]
  %v320 = vld [vmem:[%s1 + $0x8a0] sm:$0xff]
  %v321 = vld [vmem:[%s1 + $0x8a8] sm:$0xff]
  %v322 = vld [vmem:[%s1 + $0x8b0] sm:$0xff]
  %v323 = vld [vmem:[%s1 + $0x8b8] sm:$0xf]
  %v324 = vld [vmem:[%s1 + $0x8bc] sm:$0xff]
  %v325 = vld [vmem:[%s1 + $0x8c4] sm:$0xff]
  %v326 = vld [vmem:[%s1 + $0x8cc] sm:$0xff]
  %v327 = vld [vmem:[%s1 + $0x8d4] sm:$0xff]
  %v328 = vld [vmem:[%s1 + $0x8dc] sm:$0xff]
  %v329 = vld [vmem:[%s1 + $0x8e4] sm:$0xff]
  %v330 = vld [vmem:[%s1 + $0x8ec] sm:$0xf]
  %v331 = vld [vmem:[%s1 + $0x8f0] sm:$0xff]
  %v332 = vld [vmem:[%s1 + $0x8f8] sm:$0xff]
  %v333 = vld [vmem:[%s1 + $0x900] sm:$0xff]
  %v334 = vld [vmem:[%s1 + $0x908] sm:$0xff]
  %v335 = vld [vmem:[%s1 + $0x910] sm:$0xff]
  %v336 = vld [vmem:[%s1 + $0x918] sm:$0xff]
  %v337 = vld [vmem:[%s1 + $0x920] sm:$0xf]
  %v338 = vld [vmem:[%s1 + $0x924] sm:$0xff]
  %v339 = vld [vmem:[%s1 + $0x92c] sm:$0xff]
  %v340 = vld [vmem:[%s1 + $0x934] sm:$0xff]
  %v341 = vld [vmem:[%s1 + $0x93c] sm:$0xff]
  %v342 = vld [vmem:[%s1 + $0x944] sm:$0xff]
  %v343 = vld [vmem:[%s1 + $0x94c] sm:$0xff]
  %v344 = vld [vmem:[%s1 + $0x954] sm:$0xf]
  %v345 = vld [vmem:[%s1 + $0x958] sm:$0xff]
  %v346 = vld [vmem:[%s1 + $0x960] sm:$0xff]
  %v347 = vld [vmem:[%s1 + $0x968] sm:$0xff]
  %v348 = vld [vmem:[%s1 + $0x970] sm:$0xff]
  %v349 = vld [vmem:[%s1 + $0x978] sm:$0xff]
  %v350 = vld [vmem:[%s1 + $0x980] sm:$0xff]
  %v351 = vld [vmem:[%s1 + $0x988] sm:$0xf]
  %v352 = vld [vmem:[%s1 + $0x98c] sm:$0xff]
  %v353 = vld [vmem:[%s1 + $0x994] sm:$0xff]
  %v354 = vld [vmem:[%s1 + $0x99c] sm:$0xff]
  %v355 = vld [vmem:[%s1 + $0x9a4] sm:$0xff]
  %v356 = vld [vmem:[%s1 + $0x9ac] sm:$0xff]
  %v357 = vld [vmem:[%s1 + $0x9b4] sm:$0xff]
  %v358 = vld [vmem:[%s1 + $0x9bc] sm:$0xf]
  %v359 = vld [vmem:[%s1 + $0x9c0] sm:$0xff]
  %v360 = vld [vmem:[%s1 + $0x9c8] sm:$0xff]
  %v361 = vld [vmem:[%s1 + $0x9d0] sm:$0xff]
  %v362 = vld [vmem:[%s1 + $0x9d8] sm:$0xff]
  %v363 = vld [vmem:[%s1 + $0x9e0] sm:$0xff]
  %v364 = vld [vmem:[%s1 + $0x9e8] sm:$0xff]
  %v365 = vld [vmem:[%s1 + $0x9f0] sm:$0xf]
  %v366 = vld [vmem:[%s1 + $0x9f4] sm:$0xff]
  %v367 = vld [vmem:[%s1 + $0x9fc] sm:$0xff]
  %v368 = vld [vmem:[%s1 + $0xa04] sm:$0xff]
  %v369 = vld [vmem:[%s1 + $0xa0c] sm:$0xff]
  %v370 = vld [vmem:[%s1 + $0xa14] sm:$0xff]
  %v371 = vld [vmem:[%s1 + $0xa1c] sm:$0xff]
  %v372 = vld [vmem:[%s1 + $0xa24] sm:$0xf]
  %v373 = vld [vmem:[%s1 + $0xa28] sm:$0xff]
  %v374 = vld [vmem:[%s1 + $0xa30] sm:$0xff]
  %v375 = vld [vmem:[%s1 + $0xa38] sm:$0xff]
  %v376 = vld [vmem:[%s1 + $0xa40] sm:$0xff]
  %v377 = vld [vmem:[%s1 + $0xa48] sm:$0xff]
  %v378 = vld [vmem:[%s1 + $0xa50] sm:$0xff]
  %v379 = vld [vmem:[%s1 + $0xa58] sm:$0xf]
  %v380 = vld [vmem:[%s1 + $0xa5c] sm:$0xff]
  %v381 = vld [vmem:[%s1 + $0xa64] sm:$0xff]
  %v382 = vld [vmem:[%s1 + $0xa6c] sm:$0xff]
  %v383 = vld [vmem:[%s1 + $0xa74] sm:$0xff]
  %v384 = vld [vmem:[%s1 + $0xa7c] sm:$0xff]
  %v385 = vld [vmem:[%s1 + $0xa84] sm:$0xff]
  %v386 = vld [vmem:[%s1 + $0xa8c] sm:$0xf]
  %v387 = vld [vmem:[%s1 + $0xa90] sm:$0xff]
  %v388 = vld [vmem:[%s1 + $0xa98] sm:$0xff]
  %v389 = vld [vmem:[%s1 + $0xaa0] sm:$0xff]
  %v390 = vld [vmem:[%s1 + $0xaa8] sm:$0xff]
  %v391 = vld [vmem:[%s1 + $0xab0] sm:$0xff]
  %v392 = vld [vmem:[%s1 + $0xab8] sm:$0xff]
  %v393 = vld [vmem:[%s1 + $0xac0] sm:$0xf]
  %v394 = vld [vmem:[%s1 + $0xac4] sm:$0xff]
  %v395 = vld [vmem:[%s1 + $0xacc] sm:$0xff]
  %v396 = vld [vmem:[%s1 + $0xad4] sm:$0xff]
  %v397 = vld [vmem:[%s1 + $0xadc] sm:$0xff]
  %v398 = vld [vmem:[%s1 + $0xae4] sm:$0xff]
  %v399 = vld [vmem:[%s1 + $0xaec] sm:$0xff]
  %v400 = vld [vmem:[%s1 + $0xaf4] sm:$0xf]
  %v401 = vld [vmem:[%s1 + $0xaf8] sm:$0xff]
  %v402 = vld [vmem:[%s1 + $0xb00] sm:$0xff]
  %v403 = vld [vmem:[%s1 + $0xb08] sm:$0xff]
  %v404 = vld [vmem:[%s1 + $0xb10] sm:$0xff]
  %v405 = vld [vmem:[%s1 + $0xb18] sm:$0xff]
  %v406 = vld [vmem:[%s1 + $0xb20] sm:$0xff]
  %v407 = vld [vmem:[%s1 + $0xb28] sm:$0xf]
  %v408 = vld [vmem:[%s1 + $0xb2c] sm:$0xff]
  %v409 = vld [vmem:[%s1 + $0xb34] sm:$0xff]
  %v410 = vld [vmem:[%s1 + $0xb3c] sm:$0xff]
  %v411 = vld [vmem:[%s1 + $0xb44] sm:$0xff]
  %v412 = vld [vmem:[%s1 + $0xb4c] sm:$0xff]
  %v413 = vld [vmem:[%s1 + $0xb54] sm:$0xff]
  %v414 = vld [vmem:[%s1 + $0xb5c] sm:$0xf]
  %v415 = vld [vmem:[%s1 + $0xb60] sm:$0xff]
  %v416 = vld [vmem:[%s1 + $0xb68] sm:$0xff]
  %v417 = vld [vmem:[%s1 + $0xb70] sm:$0xff]
  %v418 = vld [vmem:[%s1 + $0xb78] sm:$0xff]
  %v419 = vld [vmem:[%s1 + $0xb80] sm:$0xff]
  %v420 = vld [vmem:[%s1 + $0xb88] sm:$0xff]
  %v421 = vld [vmem:[%s1 + $0xb90] sm:$0xf]
  %v422 = vld [vmem:[%s1 + $0xb94] sm:$0xff]
  %v423 = vld [vmem:[%s1 + $0xb9c] sm:$0xff]
  %v424 = vld [vmem:[%s1 + $0xba4] sm:$0xff]
  %v425 = vld [vmem:[%s1 + $0xbac] sm:$0xff]
  %v426 = vld [vmem:[%s1 + $0xbb4] sm:$0xff]
  %v427 = vld [vmem:[%s1 + $0xbbc] sm:$0xff]
  %v428 = vld [vmem:[%s1 + $0xbc4] sm:$0xf]
  %v429 = vld [vmem:[%s1 + $0xbc8] sm:$0xff]
  %v430 = vld [vmem:[%s1 + $0xbd0] sm:$0xff]
  %v431 = vld [vmem:[%s1 + $0xbd8] sm:$0xff]
  %v432 = vld [vmem:[%s1 + $0xbe0] sm:$0xff]
  %v433 = vld [vmem:[%s1 + $0xbe8] sm:$0xff]
  %v434 = vld [vmem:[%s1 + $0xbf0] sm:$0xff]
  %v435 = vld [vmem:[%s1 + $0xbf8] sm:$0xf]
  %v436 = vld [vmem:[%s1 + $0xbfc] sm:$0xff]
  %v437 = vld [vmem:[%s1 + $0xc04] sm:$0xff]
  %v438 = vld [vmem:[%s1 + $0xc0c] sm:$0xff]
  %v439 = vld [vmem:[%s1 + $0xc14] sm:$0xff]
  %v440 = vld [vmem:[%s1 + $0xc1c] sm:$0xff]
  %v441 = vld [vmem:[%s1 + $0xc24] sm:$0xff]
  %v442 = vld [vmem:[%s1 + $0xc2c] sm:$0xf]
  %v443 = vld [vmem:[%s1 + $0xc30] sm:$0xff]
  %v444 = vld [vmem:[%s1 + $0xc38] sm:$0xff]
  %v445 = vld [vmem:[%s1 + $0xc40] sm:$0xff]
  %v446 = vld [vmem:[%s1 + $0xc48] sm:$0xff]
  %v447 = vld [vmem:[%s1 + $0xc50] sm:$0xff]
  %v448 = vld [vmem:[%s1 + $0xc58] sm:$0xff]
  %v449 = vld [vmem:[%s1 + $0xc60] sm:$0xf]
  %v450 = vld [vmem:[%s1 + $0xc64] sm:$0xff]
  %v451 = vld [vmem:[%s1 + $0xc6c] sm:$0xff]
  %v452 = vld [vmem:[%s1 + $0xc74] sm:$0xff]
  %v453 = vld [vmem:[%s1 + $0xc7c] sm:$0xff]
  %v454 = vld [vmem:[%s1 + $0xc84] sm:$0xff]
  %v455 = vld [vmem:[%s1 + $0xc8c] sm:$0xff]
  %v456 = vld [vmem:[%s1 + $0xc94] sm:$0xf]
  %v457 = vld [vmem:[%s1 + $0xc98] sm:$0xff]
  %v458 = vld [vmem:[%s1 + $0xca0] sm:$0xff]
  %v459 = vld [vmem:[%s1 + $0xca8] sm:$0xff]
  %v460 = vld [vmem:[%s1 + $0xcb0] sm:$0xff]
  %v461 = vld [vmem:[%s1 + $0xcb8] sm:$0xff]
  %v462 = vld [vmem:[%s1 + $0xcc0] sm:$0xff]
  %v463 = vld [vmem:[%s1 + $0xcc8] sm:$0xf]
  %v464 = vld [vmem:[%s1 + $0xccc] sm:$0xff]
  %v465 = vld [vmem:[%s1 + $0xcd4] sm:$0xff]
  %v466 = vld [vmem:[%s1 + $0xcdc] sm:$0xff]
  %v467 = vld [vmem:[%s1 + $0xce4] sm:$0xff]
  %v468 = vld [vmem:[%s1 + $0xcec] sm:$0xff]
  %v469 = vld [vmem:[%s1 + $0xcf4] sm:$0xff]
  %v470 = vld [vmem:[%s1 + $0xcfc] sm:$0xf]
  %v471 = vld [vmem:[%s1 + $0xd00] sm:$0xff]
  %v472 = vld [vmem:[%s1 + $0xd08] sm:$0xff]
  %v473 = vld [vmem:[%s1 + $0xd10] sm:$0xff]
  %v474 = vld [vmem:[%s1 + $0xd18] sm:$0xff]
  %v475 = vld [vmem:[%s1 + $0xd20] sm:$0xff]
  %v476 = vld [vmem:[%s1 + $0xd28] sm:$0xff]
  %v477 = vld [vmem:[%s1 + $0xd30] sm:$0xf]
  %v478 = vld [vmem:[%s1 + $0xd34] sm:$0xff]
  %v479 = vld [vmem:[%s1 + $0xd3c] sm:$0xff]
  %v480 = vld [vmem:[%s1 + $0xd44] sm:$0xff]
  %v481 = vld [vmem:[%s1 + $0xd4c] sm:$0xff]
  %v482 = vld [vmem:[%s1 + $0xd54] sm:$0xff]
  %v483 = vld [vmem:[%s1 + $0xd5c] sm:$0xff]
  %v484 = vld [vmem:[%s1 + $0xd64] sm:$0xf]
  %v485 = vld [vmem:[%s1 + $0xd68] sm:$0xff]
  %v486 = vld [vmem:[%s1 + $0xd70] sm:$0xff]
  %v487 = vld [vmem:[%s1 + $0xd78] sm:$0xff]
  %v488 = vld [vmem:[%s1 + $0xd80] sm:$0xff]
  %v489 = vld [vmem:[%s1 + $0xd88] sm:$0xff]
  %v490 = vld [vmem:[%s1 + $0xd90] sm:$0xff]
  %v491 = vld [vmem:[%s1 + $0xd98] sm:$0xf]
  %v492 = vld [vmem:[%s1 + $0xd9c] sm:$0xff]
  %v493 = vld [vmem:[%s1 + $0xda4] sm:$0xff]
  %v494 = vld [vmem:[%s1 + $0xdac] sm:$0xff]
  %v495 = vld [vmem:[%s1 + $0xdb4] sm:$0xff]
  %v496 = vld [vmem:[%s1 + $0xdbc] sm:$0xff]
  %v497 = vld [vmem:[%s1 + $0xdc4] sm:$0xff]
  %v498 = vld [vmem:[%s1 + $0xdcc] sm:$0xf]
  %v499 = vld [vmem:[%s1 + $0xdd0] sm:$0xff]
  %v500 = vld [vmem:[%s1 + $0xdd8] sm:$0xff]
  %v501 = vld [vmem:[%s1 + $0xde0] sm:$0xff]
  %v502 = vld [vmem:[%s1 + $0xde8] sm:$0xff]
  %v503 = vld [vmem:[%s1 + $0xdf0] sm:$0xff]
  %v504 = vld [vmem:[%s1 + $0xdf8] sm:$0xff]
  %v505 = vld [vmem:[%s1 + $0xe00] sm:$0xf]
  %v506 = vld [vmem:[%s1 + $0xe04] sm:$0xff]
  %v507 = vld [vmem:[%s1 + $0xe0c] sm:$0xff]
  %v508 = vld [vmem:[%s1 + $0xe14] sm:$0xff]
  %v509 = vld [vmem:[%s1 + $0xe1c] sm:$0xff]
  %v510 = vld [vmem:[%s1 + $0xe24] sm:$0xff]
  %v511 = vld [vmem:[%s1 + $0xe2c] sm:$0xff]
  %v512 = vld [vmem:[%s1 + $0xe34] sm:$0xf]
  %v513 = vld [vmem:[%s1 + $0xe38] sm:$0xff]
  %v514 = vld [vmem:[%s1 + $0xe40] sm:$0xff]
  %v515 = vld [vmem:[%s1 + $0xe48] sm:$0xff]
  %v516 = vld [vmem:[%s1 + $0xe50] sm:$0xff]
  %v517 = vld [vmem:[%s1 + $0xe58] sm:$0xff]
  %v518 = vld [vmem:[%s1 + $0xe60] sm:$0xff]
  %v519 = vld [vmem:[%s1 + $0xe68] sm:$0xf]
  %v520 = vld [vmem:[%s1 + $0xe6c] sm:$0xff]
  %v521 = vld [vmem:[%s1 + $0xe74] sm:$0xff]
  %v522 = vld [vmem:[%s1 + $0xe7c] sm:$0xff]
  %v523 = vld [vmem:[%s1 + $0xe84] sm:$0xff]
  %v524 = vld [vmem:[%s1 + $0xe8c] sm:$0xff]
  %v525 = vld [vmem:[%s1 + $0xe94] sm:$0xff]
  %v526 = vld [vmem:[%s1 + $0xe9c] sm:$0xf]
  %v527 = vld [vmem:[%s1 + $0xea0] sm:$0xff]
  %v528 = vld [vmem:[%s1 + $0xea8] sm:$0xff]
  %v529 = vld [vmem:[%s1 + $0xeb0] sm:$0xff]
  %v530 = vld [vmem:[%s1 + $0xeb8] sm:$0xff]
  %v531 = vld [vmem:[%s1 + $0xec0] sm:$0xff]
  %v532 = vld [vmem:[%s1 + $0xec8] sm:$0xff]
  %v533 = vld [vmem:[%s1 + $0xed0] sm:$0xf]
  %v534 = vld [vmem:[%s1 + $0xed4] sm:$0xff]
  %v535 = vld [vmem:[%s1 + $0xedc] sm:$0xff]
  %v536 = vld [vmem:[%s1 + $0xee4] sm:$0xff]
  %v537 = vld [vmem:[%s1 + $0xeec] sm:$0xff]
  %v538 = vld [vmem:[%s1 + $0xef4] sm:$0xff]
  %v539 = vld [vmem:[%s1 + $0xefc] sm:$0xff]
  %v540 = vld [vmem:[%s1 + $0xf04] sm:$0xf]
  %v541 = vld [vmem:[%s1 + $0xf08] sm:$0xff]
  %v542 = vld [vmem:[%s1 + $0xf10] sm:$0xff]
  %v543 = vld [vmem:[%s1 + $0xf18] sm:$0xff]
  %v544 = vld [vmem:[%s1 + $0xf20] sm:$0xff]
  %v545 = vld [vmem:[%s1 + $0xf28] sm:$0xff]
  %v546 = vld [vmem:[%s1 + $0xf30] sm:$0xff]
  %v547 = vld [vmem:[%s1 + $0xf38] sm:$0xf]
  %v548 = vld [vmem:[%s1 + $0xf3c] sm:$0xff]
  %v549 = vld [vmem:[%s1 + $0xf44] sm:$0xff]
  %v550 = vld [vmem:[%s1 + $0xf4c] sm:$0xff]
  %v551 = vld [vmem:[%s1 + $0xf54] sm:$0xff]
  %v552 = vld [vmem:[%s1 + $0xf5c] sm:$0xff]
  %v553 = vld [vmem:[%s1 + $0xf64] sm:$0xff]
  %v554 = vld [vmem:[%s1 + $0xf6c] sm:$0xf]
  %v555 = vld [vmem:[%s1 + $0xf70] sm:$0xff]
  %v556 = vld [vmem:[%s1 + $0xf78] sm:$0xff]
  %v557 = vld [vmem:[%s1 + $0xf80] sm:$0xff]
  %v558 = vld [vmem:[%s1 + $0xf88] sm:$0xff]
  %v559 = vld [vmem:[%s1 + $0xf90] sm:$0xff]
  %v560 = vld [vmem:[%s1 + $0xf98] sm:$0xff]
  %v561 = vld [vmem:[%s1 + $0xfa0] sm:$0xf]
  %v562 = vld [vmem:[%s1 + $0xfa4] sm:$0xff]
  %v563 = vld [vmem:[%s1 + $0xfac] sm:$0xff]
  %v564 = vld [vmem:[%s1 + $0xfb4] sm:$0xff]
  %v565 = vld [vmem:[%s1 + $0xfbc] sm:$0xff]
  %v566 = vld [vmem:[%s1 + $0xfc4] sm:$0xff]
  %v567 = vld [vmem:[%s1 + $0xfcc] sm:$0xff]
  %v568 = vld [vmem:[%s1 + $0xfd4] sm:$0xf]
  %v569 = vld [vmem:[%s1 + $0xfd8] sm:$0xff]
  %v570 = vld [vmem:[%s1 + $0xfe0] sm:$0xff]
  %v571 = vld [vmem:[%s1 + $0xfe8] sm:$0xff]
  %v572 = vld [vmem:[%s1 + $0xff0] sm:$0xff]
  %v573 = vld [vmem:[%s1 + $0xff8] sm:$0xff]
  %v574 = vld [vmem:[%s1 + $0x1000] sm:$0xff]
  %v575 = vld [vmem:[%s1 + $0x1008] sm:$0xf]
  %v576 = vld [vmem:[%s1 + $0x100c] sm:$0xff]
  %v577 = vld [vmem:[%s1 + $0x1014] sm:$0xff]
  %v578 = vld [vmem:[%s1 + $0x101c] sm:$0xff]
  %v579 = vld [vmem:[%s1 + $0x1024] sm:$0xff]
  %v580 = vld [vmem:[%s1 + $0x102c] sm:$0xff]
  %v581 = vld [vmem:[%s1 + $0x1034] sm:$0xff]
  %v582 = vld [vmem:[%s1 + $0x103c] sm:$0xf]
  %v583 = vld [vmem:[%s1 + $0x1040] sm:$0xff]
  %v584 = vld [vmem:[%s1 + $0x1048] sm:$0xff]
  %v585 = vld [vmem:[%s1 + $0x1050] sm:$0xff]
  %v586 = vld [vmem:[%s1 + $0x1058] sm:$0xff]
  %v587 = vld [vmem:[%s1 + $0x1060] sm:$0xff]
  %v588 = vld [vmem:[%s1 + $0x1068] sm:$0xff]
  %v589 = vld [vmem:[%s1 + $0x1070] sm:$0xf]
  %v590 = vld [vmem:[%s1 + $0x1074] sm:$0xff]
  %v591 = vld [vmem:[%s1 + $0x107c] sm:$0xff]
  %v592 = vld [vmem:[%s1 + $0x1084] sm:$0xff]
  %v593 = vld [vmem:[%s1 + $0x108c] sm:$0xff]
  %v594 = vld [vmem:[%s1 + $0x1094] sm:$0xff]
  %v595 = vld [vmem:[%s1 + $0x109c] sm:$0xff]
  %v596 = vld [vmem:[%s1 + $0x10a4] sm:$0xf]
  %v597 = vld [vmem:[%s1 + $0x10a8] sm:$0xff]
  %v598 = vld [vmem:[%s1 + $0x10b0] sm:$0xff]
  %v599 = vld [vmem:[%s1 + $0x10b8] sm:$0xff]
  %v600 = vld [vmem:[%s1 + $0x10c0] sm:$0xff]
  %v601 = vld [vmem:[%s1 + $0x10c8] sm:$0xff]
  %v602 = vld [vmem:[%s1 + $0x10d0] sm:$0xff]
  %v603 = vld [vmem:[%s1 + $0x10d8] sm:$0xf]
  %v604 = vld [vmem:[%s1 + $0x10dc] sm:$0xff]
  %v605 = vld [vmem:[%s1 + $0x10e4] sm:$0xff]
  %v606 = vld [vmem:[%s1 + $0x10ec] sm:$0xff]
  %v607 = vld [vmem:[%s1 + $0x10f4] sm:$0xff]
  %v608 = vld [vmem:[%s1 + $0x10fc] sm:$0xff]
  %v609 = vld [vmem:[%s1 + $0x1104] sm:$0xff]
  %v610 = vld [vmem:[%s1 + $0x110c] sm:$0xf]
  %v611 = vld [vmem:[%s1 + $0x1110] sm:$0xff]
  %v612 = vld [vmem:[%s1 + $0x1118] sm:$0xff]
  %v613 = vld [vmem:[%s1 + $0x1120] sm:$0xff]
  %v614 = vld [vmem:[%s1 + $0x1128] sm:$0xff]
  %v615 = vld [vmem:[%s1 + $0x1130] sm:$0xff]
  %v616 = vld [vmem:[%s1 + $0x1138] sm:$0xff]
  %v617 = vld [vmem:[%s1 + $0x1140] sm:$0xf]
  %v618 = vld [vmem:[%s1 + $0x1144] sm:$0xff]
  %v619 = vld [vmem:[%s1 + $0x114c] sm:$0xff]
  %v620 = vld [vmem:[%s1 + $0x1154] sm:$0xff]
  %v621 = vld [vmem:[%s1 + $0x115c] sm:$0xff]
  %v622 = vld [vmem:[%s1 + $0x1164] sm:$0xff]
  %v623 = vld [vmem:[%s1 + $0x116c] sm:$0xff]
  %v624 = vld [vmem:[%s1 + $0x1174] sm:$0xf]
  %v625 = vld [vmem:[%s1 + $0x1178] sm:$0xff]
  %v626 = vld [vmem:[%s1 + $0x1180] sm:$0xff]
  %v627 = vld [vmem:[%s1 + $0x1188] sm:$0xff]
  %v628 = vld [vmem:[%s1 + $0x1190] sm:$0xff]
  %v629 = vld [vmem:[%s1 + $0x1198] sm:$0xff]
  %v630 = vld [vmem:[%s1 + $0x11a0] sm:$0xff]
  %v631 = vld [vmem:[%s1 + $0x11a8] sm:$0xf]
  %v632 = vld [vmem:[%s1 + $0x11ac] sm:$0xff]
  %v633 = vld [vmem:[%s1 + $0x11b4] sm:$0xff]
  %v634 = vld [vmem:[%s1 + $0x11bc] sm:$0xff]
  %v635 = vld [vmem:[%s1 + $0x11c4] sm:$0xff]
  %v636 = vld [vmem:[%s1 + $0x11cc] sm:$0xff]
  %v637 = vld [vmem:[%s1 + $0x11d4] sm:$0xff]
  %v638 = vld [vmem:[%s1 + $0x11dc] sm:$0xf]
  %v639 = vld [vmem:[%s1 + $0x11e0] sm:$0xff]
  %v640 = vld [vmem:[%s1 + $0x11e8] sm:$0xff]
  %v641 = vld [vmem:[%s1 + $0x11f0] sm:$0xff]
  %v642 = vld [vmem:[%s1 + $0x11f8] sm:$0xff]
  %v643 = vld [vmem:[%s1 + $0x1200] sm:$0xff]
  %v644 = vld [vmem:[%s1 + $0x1208] sm:$0xff]
  %v645 = vld [vmem:[%s1 + $0x1210] sm:$0xf]
  %v646 = vld [vmem:[%s1 + $0x1214] sm:$0xff]
  %v647 = vld [vmem:[%s1 + $0x121c] sm:$0xff]
  %v648 = vld [vmem:[%s1 + $0x1224] sm:$0xff]
  %v649 = vld [vmem:[%s1 + $0x122c] sm:$0xff]
  %v650 = vld [vmem:[%s1 + $0x1234] sm:$0xff]
  %v651 = vld [vmem:[%s1 + $0x123c] sm:$0xff]
  %v652 = vld [vmem:[%s1 + $0x1244] sm:$0xf]
  %v653 = vld [vmem:[%s1 + $0x1248] sm:$0xff]
  %v654 = vld [vmem:[%s1 + $0x1250] sm:$0xff]
  %v655 = vld [vmem:[%s1 + $0x1258] sm:$0xff]
  %v656 = vld [vmem:[%s1 + $0x1260] sm:$0xff]
  %v657 = vld [vmem:[%s1 + $0x1268] sm:$0xff]
  %v658 = vld [vmem:[%s1 + $0x1270] sm:$0xff]
  %v659 = vld [vmem:[%s1 + $0x1278] sm:$0xf]
  %v660 = vld [vmem:[%s1 + $0x127c] sm:$0xff]
  %v661 = vld [vmem:[%s1 + $0x1284] sm:$0xff]
  %v662 = vld [vmem:[%s1 + $0x128c] sm:$0xff]
  %v663 = vld [vmem:[%s1 + $0x1294] sm:$0xff]
  %v664 = vld [vmem:[%s1 + $0x129c] sm:$0xff]
  %v665 = vld [vmem:[%s1 + $0x12a4] sm:$0xff]
  %v666 = vld [vmem:[%s1 + $0x12ac] sm:$0xf]
  %v667 = vld [vmem:[%s1 + $0x12b0] sm:$0xff]
  %v668 = vld [vmem:[%s1 + $0x12b8] sm:$0xff]
  %v669 = vld [vmem:[%s1 + $0x12c0] sm:$0xff]
  %v670 = vld [vmem:[%s1 + $0x12c8] sm:$0xff]
  %v671 = vld [vmem:[%s1 + $0x12d0] sm:$0xff]
  %v672 = vld [vmem:[%s1 + $0x12d8] sm:$0xff]
  %v673 = vld [vmem:[%s1 + $0x12e0] sm:$0xf]
  %v674 = vld [vmem:[%s1 + $0x12e4] sm:$0xff]
  %v675 = vld [vmem:[%s1 + $0x12ec] sm:$0xff]
  %v676 = vld [vmem:[%s1 + $0x12f4] sm:$0xff]
  %v677 = vld [vmem:[%s1 + $0x12fc] sm:$0xff]
  %v678 = vld [vmem:[%s1 + $0x1304] sm:$0xff]
  %v679 = vld [vmem:[%s1 + $0x130c] sm:$0xff]
  %v680 = vld [vmem:[%s1 + $0x1314] sm:$0xf]
  %v681 = vld [vmem:[%s1 + $0x1318] sm:$0xff]
  %v682 = vld [vmem:[%s1 + $0x1320] sm:$0xff]
  %v683 = vld [vmem:[%s1 + $0x1328] sm:$0xff]
  %v684 = vld [vmem:[%s1 + $0x1330] sm:$0xff]
  %v685 = vld [vmem:[%s1 + $0x1338] sm:$0xff]
  %v686 = vld [vmem:[%s1 + $0x1340] sm:$0xff]
  %v687 = vld [vmem:[%s1 + $0x1348] sm:$0xf]
  %v688 = vld [vmem:[%s1 + $0x134c] sm:$0xff]
  %v689 = vld [vmem:[%s1 + $0x1354] sm:$0xff]
  %v690 = vld [vmem:[%s1 + $0x135c] sm:$0xff]
  %v691 = vld [vmem:[%s1 + $0x1364] sm:$0xff]
  %v692 = vld [vmem:[%s1 + $0x136c] sm:$0xff]
  %v693 = vld [vmem:[%s1 + $0x1374] sm:$0xff]
  %v694 = vld [vmem:[%s1 + $0x137c] sm:$0xf]
  %v695 = vld [vmem:[%s1 + $0x1380] sm:$0xff]
  %v696 = vld [vmem:[%s1 + $0x1388] sm:$0xff]
  %v697 = vld [vmem:[%s1 + $0x1390] sm:$0xff]
  %v698 = vld [vmem:[%s1 + $0x1398] sm:$0xff]
  %v699 = vld [vmem:[%s1 + $0x13a0] sm:$0xff]
  %v700 = vld [vmem:[%s1 + $0x13a8] sm:$0xff]
  %v701 = vld [vmem:[%s1 + $0x13b0] sm:$0xf]
  %v702 = vld [vmem:[%s1 + $0x13b4] sm:$0xff]
  %v703 = vld [vmem:[%s1 + $0x13bc] sm:$0xff]
  %v704 = vld [vmem:[%s1 + $0x13c4] sm:$0xff]
  %v705 = vld [vmem:[%s1 + $0x13cc] sm:$0xff]
  %v706 = vld [vmem:[%s1 + $0x13d4] sm:$0xff]
  %v707 = vld [vmem:[%s1 + $0x13dc] sm:$0xff]
  %v708 = vld [vmem:[%s1 + $0x13e4] sm:$0xf]
  %v709 = vld [vmem:[%s1 + $0x13e8] sm:$0xff]
  %v710 = vld [vmem:[%s1 + $0x13f0] sm:$0xff]
  %v711 = vld [vmem:[%s1 + $0x13f8] sm:$0xff]
  %v712 = vld [vmem:[%s1 + $0x1400] sm:$0xff]
  %v713 = vld [vmem:[%s1 + $0x1408] sm:$0xff]
  %v714 = vld [vmem:[%s1 + $0x1410] sm:$0xff]
  %v715 = vld [vmem:[%s1 + $0x1418] sm:$0xf]
  %v716 = vld [vmem:[%s1 + $0x141c] sm:$0xff]
  %v717 = vld [vmem:[%s1 + $0x1424] sm:$0xff]
  %v718 = vld [vmem:[%s1 + $0x142c] sm:$0xff]
  %v719 = vld [vmem:[%s1 + $0x1434] sm:$0xff]
  %v720 = vld [vmem:[%s1 + $0x143c] sm:$0xff]
  %v721 = vld [vmem:[%s1 + $0x1444] sm:$0xff]
  %v722 = vld [vmem:[%s1 + $0x144c] sm:$0xf]
  %v723 = vld [vmem:[%s2] sm:$0xff]
  %v724 = vld [vmem:[%s2 + $0x8] sm:$0xff]
  %726 = vset.pattern.permute.xlu0 0
  %727 = vperm.xlu0 %726, %v723
  %v728 = vpop.permute.xlu0 %727
  %731 = vset.pattern.permute.xlu0 0
  %732 = vperm.xlu0 %731, %v724
  %v733 = vpop.permute.xlu0 %732
  %v743 = vunpack.c.l.b16 %v15
  %v744 = vunpack.c.h.b16 %v15
  %v745 = vunpack.c.l.b16 %v16
  %v746 = vunpack.c.h.b16 %v16
  %v747 = vunpack.c.l.b16 %v17
  %v748 = vunpack.c.h.b16 %v17
  %v749 = vunpack.c.l.b16 %v18
  %v750 = vunpack.c.l.b16 %v19
  %v751 = vunpack.c.h.b16 %v19
  %v752 = vunpack.c.l.b16 %v20
  %v753 = vunpack.c.h.b16 %v20
  %v754 = vunpack.c.l.b16 %v21
  %v755 = vunpack.c.h.b16 %v21
  %v756 = vunpack.c.l.b16 %v22
  %v757 = vpack.c.b16 %v750, %v743
  %v758 = vpack.c.b16 %v751, %v744
  %v759 = vpack.c.b16 %v752, %v745
  %v760 = vpack.c.b16 %v753, %v746
  %v761 = vpack.c.b16 %v754, %v747
  %v762 = vpack.c.b16 %v755, %v748
  %v763 = vpack.c.b16 %v756, %v749
  %v1470 = vunpack.c.l.b16 %v23
  %v1471 = vunpack.c.h.b16 %v23
  %v1472 = vunpack.c.l.b16 %v24
  %v1473 = vunpack.c.h.b16 %v24
  %v1474 = vunpack.c.l.b16 %v25
  %v1475 = vunpack.c.h.b16 %v25
  %v1476 = vunpack.c.l.b16 %v26
  %v1477 = vunpack.c.h.b16 %v26
  %v1478 = vunpack.c.l.b16 %v27
  %v1479 = vunpack.c.h.b16 %v27
  %v1480 = vunpack.c.l.b16 %v28
  %v1481 = vunpack.c.h.b16 %v28
  %v1482 = vunpack.c.l.b16 %v29
  %v1483 = vunpack.c.l.b16 %v30
  %v1484 = vunpack.c.h.b16 %v30
  %v1485 = vunpack.c.l.b16 %v31
  %v1486 = vunpack.c.h.b16 %v31
  %v1487 = vunpack.c.l.b16 %v32
  %v1488 = vunpack.c.h.b16 %v32
  %v1489 = vunpack.c.l.b16 %v33
  %v1490 = vunpack.c.h.b16 %v33
  %v1491 = vunpack.c.l.b16 %v34
  %v1492 = vunpack.c.h.b16 %v34
  %v1493 = vunpack.c.l.b16 %v35
  %v1494 = vunpack.c.h.b16 %v35
  %v1495 = vunpack.c.l.b16 %v36
  %v1496 = vunpack.c.l.b16 %v37
  %v1497 = vunpack.c.h.b16 %v37
  %v1498 = vunpack.c.l.b16 %v38
  %v1499 = vunpack.c.h.b16 %v38
  %v1500 = vunpack.c.l.b16 %v39
  %v1501 = vunpack.c.h.b16 %v39
  %v1502 = vunpack.c.l.b16 %v40
  %v1503 = vunpack.c.h.b16 %v40
  %v1504 = vunpack.c.l.b16 %v41
  %v1505 = vunpack.c.h.b16 %v41
  %v1506 = vunpack.c.l.b16 %v42
  %v1507 = vunpack.c.h.b16 %v42
  %v1508 = vunpack.c.l.b16 %v43
  %v1509 = vunpack.c.l.b16 %v44
  %v1510 = vunpack.c.h.b16 %v44
  %v1511 = vunpack.c.l.b16 %v45
  %v1512 = vunpack.c.h.b16 %v45
  %v1513 = vunpack.c.l.b16 %v46
  %v1514 = vunpack.c.h.b16 %v46
  %v1515 = vunpack.c.l.b16 %v47
  %v1516 = vunpack.c.h.b16 %v47
  %v1517 = vunpack.c.l.b16 %v48
  %v1518 = vunpack.c.h.b16 %v48
  %v1519 = vunpack.c.l.b16 %v49
  %v1520 = vunpack.c.h.b16 %v49
  %v1521 = vunpack.c.l.b16 %v50
  %v1522 = vunpack.c.l.b16 %v51
  %v1523 = vunpack.c.h.b16 %v51
  %v1524 = vunpack.c.l.b16 %v52
  %v1525 = vunpack.c.h.b16 %v52
  %v1526 = vunpack.c.l.b16 %v53
  %v1527 = vunpack.c.h.b16 %v53
  %v1528 = vunpack.c.l.b16 %v54
  %v1529 = vunpack.c.h.b16 %v54
  %v1530 = vunpack.c.l.b16 %v55
  %v1531 = vunpack.c.h.b16 %v55
  %v1532 = vunpack.c.l.b16 %v56
  %v1533 = vunpack.c.h.b16 %v56
  %v1534 = vunpack.c.l.b16 %v57
  %v1535 = vunpack.c.l.b16 %v58
  %v1536 = vunpack.c.h.b16 %v58
  %v1537 = vunpack.c.l.b16 %v59
  %v1538 = vunpack.c.h.b16 %v59
  %v1539 = vunpack.c.l.b16 %v60
  %v1540 = vunpack.c.h.b16 %v60
  %v1541 = vunpack.c.l.b16 %v61
  %v1542 = vunpack.c.h.b16 %v61
  %v1543 = vunpack.c.l.b16 %v62
  %v1544 = vunpack.c.h.b16 %v62
  %v1545 = vunpack.c.l.b16 %v63
  %v1546 = vunpack.c.h.b16 %v63
  %v1547 = vunpack.c.l.b16 %v64
  %v1548 = vunpack.c.l.b16 %v65
  %v1549 = vunpack.c.h.b16 %v65
  %v1550 = vunpack.c.l.b16 %v66
  %v1551 = vunpack.c.h.b16 %v66
  %v1552 = vunpack.c.l.b16 %v67
  %v1553 = vunpack.c.h.b16 %v67
  %v1554 = vunpack.c.l.b16 %v68
  %v1555 = vunpack.c.h.b16 %v68
  %v1556 = vunpack.c.l.b16 %v69
  %v1557 = vunpack.c.h.b16 %v69
  %v1558 = vunpack.c.l.b16 %v70
  %v1559 = vunpack.c.h.b16 %v70
  %v1560 = vunpack.c.l.b16 %v71
  %v1561 = vunpack.c.l.b16 %v72
  %v1562 = vunpack.c.h.b16 %v72
  %v1563 = vunpack.c.l.b16 %v73
  %v1564 = vunpack.c.h.b16 %v73
  %v1565 = vunpack.c.l.b16 %v74
  %v1566 = vunpack.c.h.b16 %v74
  %v1567 = vunpack.c.l.b16 %v75
  %v1568 = vunpack.c.h.b16 %v75
  %v1569 = vunpack.c.l.b16 %v76
  %v1570 = vunpack.c.h.b16 %v76
  %v1571 = vunpack.c.l.b16 %v77
  %v1572 = vunpack.c.h.b16 %v77
  %v1573 = vunpack.c.l.b16 %v78
  %v1574 = vunpack.c.l.b16 %v79
  %v1575 = vunpack.c.h.b16 %v79
  %v1576 = vunpack.c.l.b16 %v80
  %v1577 = vunpack.c.h.b16 %v80
  %v1578 = vunpack.c.l.b16 %v81
  %v1579 = vunpack.c.h.b16 %v81
  %v1580 = vunpack.c.l.b16 %v82
  %v1581 = vunpack.c.h.b16 %v82
  %v1582 = vunpack.c.l.b16 %v83
  %v1583 = vunpack.c.h.b16 %v83
  %v1584 = vunpack.c.l.b16 %v84
  %v1585 = vunpack.c.h.b16 %v84
  %v1586 = vunpack.c.l.b16 %v85
  %v1587 = vunpack.c.l.b16 %v86
  %v1588 = vunpack.c.h.b16 %v86
  %v1589 = vunpack.c.l.b16 %v87
  %v1590 = vunpack.c.h.b16 %v87
  %v1591 = vunpack.c.l.b16 %v88
  %v1592 = vunpack.c.h.b16 %v88
  %v1593 = vunpack.c.l.b16 %v89
  %v1594 = vunpack.c.h.b16 %v89
  %v1595 = vunpack.c.l.b16 %v90
  %v1596 = vunpack.c.h.b16 %v90
  %v1597 = vunpack.c.l.b16 %v91
  %v1598 = vunpack.c.h.b16 %v91
  %v1599 = vunpack.c.l.b16 %v92
  %v1600 = vunpack.c.l.b16 %v93
  %v1601 = vunpack.c.h.b16 %v93
  %v1602 = vunpack.c.l.b16 %v94
  %v1603 = vunpack.c.h.b16 %v94
  %v1604 = vunpack.c.l.b16 %v95
  %v1605 = vunpack.c.h.b16 %v95
  %v1606 = vunpack.c.l.b16 %v96
  %v1607 = vunpack.c.h.b16 %v96
  %v1608 = vunpack.c.l.b16 %v97
  %v1609 = vunpack.c.h.b16 %v97
  %v1610 = vunpack.c.l.b16 %v98
  %v1611 = vunpack.c.h.b16 %v98
  %v1612 = vunpack.c.l.b16 %v99
  %v1613 = vunpack.c.l.b16 %v100
  %v1614 = vunpack.c.h.b16 %v100
  %v1615 = vunpack.c.l.b16 %v101
  %v1616 = vunpack.c.h.b16 %v101
  %v1617 = vunpack.c.l.b16 %v102
  %v1618 = vunpack.c.h.b16 %v102
  %v1619 = vunpack.c.l.b16 %v103
  %v1620 = vunpack.c.h.b16 %v103
  %v1621 = vunpack.c.l.b16 %v104
  %v1622 = vunpack.c.h.b16 %v104
  %v1623 = vunpack.c.l.b16 %v105
  %v1624 = vunpack.c.h.b16 %v105
  %v1625 = vunpack.c.l.b16 %v106
  %v1626 = vunpack.c.l.b16 %v107
  %v1627 = vunpack.c.h.b16 %v107
  %v1628 = vunpack.c.l.b16 %v108
  %v1629 = vunpack.c.h.b16 %v108
  %v1630 = vunpack.c.l.b16 %v109
  %v1631 = vunpack.c.h.b16 %v109
  %v1632 = vunpack.c.l.b16 %v110
  %v1633 = vunpack.c.h.b16 %v110
  %v1634 = vunpack.c.l.b16 %v111
  %v1635 = vunpack.c.h.b16 %v111
  %v1636 = vunpack.c.l.b16 %v112
  %v1637 = vunpack.c.h.b16 %v112
  %v1638 = vunpack.c.l.b16 %v113
  %v1639 = vunpack.c.l.b16 %v114
  %v1640 = vunpack.c.h.b16 %v114
  %v1641 = vunpack.c.l.b16 %v115
  %v1642 = vunpack.c.h.b16 %v115
  %v1643 = vunpack.c.l.b16 %v116
  %v1644 = vunpack.c.h.b16 %v116
  %v1645 = vunpack.c.l.b16 %v117
  %v1646 = vunpack.c.h.b16 %v117
  %v1647 = vunpack.c.l.b16 %v118
  %v1648 = vunpack.c.h.b16 %v118
  %v1649 = vunpack.c.l.b16 %v119
  %v1650 = vunpack.c.h.b16 %v119
  %v1651 = vunpack.c.l.b16 %v120
  %v1652 = vunpack.c.l.b16 %v121
  %v1653 = vunpack.c.h.b16 %v121
  %v1654 = vunpack.c.l.b16 %v122
  %v1655 = vunpack.c.h.b16 %v122
  %v1656 = vunpack.c.l.b16 %v123
  %v1657 = vunpack.c.h.b16 %v123
  %v1658 = vunpack.c.l.b16 %v124
  %v1659 = vunpack.c.h.b16 %v124
  %v1660 = vunpack.c.l.b16 %v125
  %v1661 = vunpack.c.h.b16 %v125
  %v1662 = vunpack.c.l.b16 %v126
  %v1663 = vunpack.c.h.b16 %v126
  %v1664 = vunpack.c.l.b16 %v127
  %v1665 = vunpack.c.l.b16 %v128
  %v1666 = vunpack.c.h.b16 %v128
  %v1667 = vunpack.c.l.b16 %v129
  %v1668 = vunpack.c.h.b16 %v129
  %v1669 = vunpack.c.l.b16 %v130
  %v1670 = vunpack.c.h.b16 %v130
  %v1671 = vunpack.c.l.b16 %v131
  %v1672 = vunpack.c.h.b16 %v131
  %v1673 = vunpack.c.l.b16 %v132
  %v1674 = vunpack.c.h.b16 %v132
  %v1675 = vunpack.c.l.b16 %v133
  %v1676 = vunpack.c.h.b16 %v133
  %v1677 = vunpack.c.l.b16 %v134
  %v1678 = vunpack.c.l.b16 %v135
  %v1679 = vunpack.c.h.b16 %v135
  %v1680 = vunpack.c.l.b16 %v136
  %v1681 = vunpack.c.h.b16 %v136
  %v1682 = vunpack.c.l.b16 %v137
  %v1683 = vunpack.c.h.b16 %v137
  %v1684 = vunpack.c.l.b16 %v138
  %v1685 = vunpack.c.h.b16 %v138
  %v1686 = vunpack.c.l.b16 %v139
  %v1687 = vunpack.c.h.b16 %v139
  %v1688 = vunpack.c.l.b16 %v140
  %v1689 = vunpack.c.h.b16 %v140
  %v1690 = vunpack.c.l.b16 %v141
  %v1691 = vunpack.c.l.b16 %v142
  %v1692 = vunpack.c.h.b16 %v142
  %v1693 = vunpack.c.l.b16 %v143
  %v1694 = vunpack.c.h.b16 %v143
  %v1695 = vunpack.c.l.b16 %v144
  %v1696 = vunpack.c.h.b16 %v144
  %v1697 = vunpack.c.l.b16 %v145
  %v1698 = vunpack.c.h.b16 %v145
  %v1699 = vunpack.c.l.b16 %v146
  %v1700 = vunpack.c.h.b16 %v146
  %v1701 = vunpack.c.l.b16 %v147
  %v1702 = vunpack.c.h.b16 %v147
  %v1703 = vunpack.c.l.b16 %v148
  %v1704 = vunpack.c.l.b16 %v149
  %v1705 = vunpack.c.h.b16 %v149
  %v1706 = vunpack.c.l.b16 %v150
  %v1707 = vunpack.c.h.b16 %v150
  %v1708 = vunpack.c.l.b16 %v151
  %v1709 = vunpack.c.h.b16 %v151
  %v1710 = vunpack.c.l.b16 %v152
  %v1711 = vunpack.c.h.b16 %v152
  %v1712 = vunpack.c.l.b16 %v153
  %v1713 = vunpack.c.h.b16 %v153
  %v1714 = vunpack.c.l.b16 %v154
  %v1715 = vunpack.c.h.b16 %v154
  %v1716 = vunpack.c.l.b16 %v155
  %v1717 = vunpack.c.l.b16 %v156
  %v1718 = vunpack.c.h.b16 %v156
  %v1719 = vunpack.c.l.b16 %v157
  %v1720 = vunpack.c.h.b16 %v157
  %v1721 = vunpack.c.l.b16 %v158
  %v1722 = vunpack.c.h.b16 %v158
  %v1723 = vunpack.c.l.b16 %v159
  %v1724 = vunpack.c.h.b16 %v159
  %v1725 = vunpack.c.l.b16 %v160
  %v1726 = vunpack.c.h.b16 %v160
  %v1727 = vunpack.c.l.b16 %v161
  %v1728 = vunpack.c.h.b16 %v161
  %v1729 = vunpack.c.l.b16 %v162
  %v1730 = vunpack.c.l.b16 %v163
  %v1731 = vunpack.c.h.b16 %v163
  %v1732 = vunpack.c.l.b16 %v164
  %v1733 = vunpack.c.h.b16 %v164
  %v1734 = vunpack.c.l.b16 %v165
  %v1735 = vunpack.c.h.b16 %v165
  %v1736 = vunpack.c.l.b16 %v166
  %v1737 = vunpack.c.h.b16 %v166
  %v1738 = vunpack.c.l.b16 %v167
  %v1739 = vunpack.c.h.b16 %v167
  %v1740 = vunpack.c.l.b16 %v168
  %v1741 = vunpack.c.h.b16 %v168
  %v1742 = vunpack.c.l.b16 %v169
  %v1743 = vunpack.c.l.b16 %v170
  %v1744 = vunpack.c.h.b16 %v170
  %v1745 = vunpack.c.l.b16 %v171
  %v1746 = vunpack.c.h.b16 %v171
  %v1747 = vunpack.c.l.b16 %v172
  %v1748 = vunpack.c.h.b16 %v172
  %v1749 = vunpack.c.l.b16 %v173
  %v1750 = vunpack.c.h.b16 %v173
  %v1751 = vunpack.c.l.b16 %v174
  %v1752 = vunpack.c.h.b16 %v174
  %v1753 = vunpack.c.l.b16 %v175
  %v1754 = vunpack.c.h.b16 %v175
  %v1755 = vunpack.c.l.b16 %v176
  %v1756 = vunpack.c.l.b16 %v177
  %v1757 = vunpack.c.h.b16 %v177
  %v1758 = vunpack.c.l.b16 %v178
  %v1759 = vunpack.c.h.b16 %v178
  %v1760 = vunpack.c.l.b16 %v179
  %v1761 = vunpack.c.h.b16 %v179
  %v1762 = vunpack.c.l.b16 %v180
  %v1763 = vunpack.c.h.b16 %v180
  %v1764 = vunpack.c.l.b16 %v181
  %v1765 = vunpack.c.h.b16 %v181
  %v1766 = vunpack.c.l.b16 %v182
  %v1767 = vunpack.c.h.b16 %v182
  %v1768 = vunpack.c.l.b16 %v183
  %v1769 = vunpack.c.l.b16 %v184
  %v1770 = vunpack.c.h.b16 %v184
  %v1771 = vunpack.c.l.b16 %v185
  %v1772 = vunpack.c.h.b16 %v185
  %v1773 = vunpack.c.l.b16 %v186
  %v1774 = vunpack.c.h.b16 %v186
  %v1775 = vunpack.c.l.b16 %v187
  %v1776 = vunpack.c.h.b16 %v187
  %v1777 = vunpack.c.l.b16 %v188
  %v1778 = vunpack.c.h.b16 %v188
  %v1779 = vunpack.c.l.b16 %v189
  %v1780 = vunpack.c.h.b16 %v189
  %v1781 = vunpack.c.l.b16 %v190
  %v1782 = vunpack.c.l.b16 %v191
  %v1783 = vunpack.c.h.b16 %v191
  %v1784 = vunpack.c.l.b16 %v192
  %v1785 = vunpack.c.h.b16 %v192
  %v1786 = vunpack.c.l.b16 %v193
  %v1787 = vunpack.c.h.b16 %v193
  %v1788 = vunpack.c.l.b16 %v194
  %v1789 = vunpack.c.h.b16 %v194
  %v1790 = vunpack.c.l.b16 %v195
  %v1791 = vunpack.c.h.b16 %v195
  %v1792 = vunpack.c.l.b16 %v196
  %v1793 = vunpack.c.h.b16 %v196
  %v1794 = vunpack.c.l.b16 %v197
  %v1795 = vunpack.c.l.b16 %v198
  %v1796 = vunpack.c.h.b16 %v198
  %v1797 = vunpack.c.l.b16 %v199
  %v1798 = vunpack.c.h.b16 %v199
  %v1799 = vunpack.c.l.b16 %v200
  %v1800 = vunpack.c.h.b16 %v200
  %v1801 = vunpack.c.l.b16 %v201
  %v1802 = vunpack.c.h.b16 %v201
  %v1803 = vunpack.c.l.b16 %v202
  %v1804 = vunpack.c.h.b16 %v202
  %v1805 = vunpack.c.l.b16 %v203
  %v1806 = vunpack.c.h.b16 %v203
  %v1807 = vunpack.c.l.b16 %v204
  %v1808 = vunpack.c.l.b16 %v205
  %v1809 = vunpack.c.h.b16 %v205
  %v1810 = vunpack.c.l.b16 %v206
  %v1811 = vunpack.c.h.b16 %v206
  %v1812 = vunpack.c.l.b16 %v207
  %v1813 = vunpack.c.h.b16 %v207
  %v1814 = vunpack.c.l.b16 %v208
  %v1815 = vunpack.c.h.b16 %v208
  %v1816 = vunpack.c.l.b16 %v209
  %v1817 = vunpack.c.h.b16 %v209
  %v1818 = vunpack.c.l.b16 %v210
  %v1819 = vunpack.c.h.b16 %v210
  %v1820 = vunpack.c.l.b16 %v211
  %v1821 = vunpack.c.l.b16 %v212
  %v1822 = vunpack.c.h.b16 %v212
  %v1823 = vunpack.c.l.b16 %v213
  %v1824 = vunpack.c.h.b16 %v213
  %v1825 = vunpack.c.l.b16 %v214
  %v1826 = vunpack.c.h.b16 %v214
  %v1827 = vunpack.c.l.b16 %v215
  %v1828 = vunpack.c.h.b16 %v215
  %v1829 = vunpack.c.l.b16 %v216
  %v1830 = vunpack.c.h.b16 %v216
  %v1831 = vunpack.c.l.b16 %v217
  %v1832 = vunpack.c.h.b16 %v217
  %v1833 = vunpack.c.l.b16 %v218
  %v1834 = vunpack.c.l.b16 %v219
  %v1835 = vunpack.c.h.b16 %v219
  %v1836 = vunpack.c.l.b16 %v220
  %v1837 = vunpack.c.h.b16 %v220
  %v1838 = vunpack.c.l.b16 %v221
  %v1839 = vunpack.c.h.b16 %v221
  %v1840 = vunpack.c.l.b16 %v222
  %v1841 = vunpack.c.h.b16 %v222
  %v1842 = vunpack.c.l.b16 %v223
  %v1843 = vunpack.c.h.b16 %v223
  %v1844 = vunpack.c.l.b16 %v224
  %v1845 = vunpack.c.h.b16 %v224
  %v1846 = vunpack.c.l.b16 %v225
  %v1847 = vunpack.c.l.b16 %v226
  %v1848 = vunpack.c.h.b16 %v226
  %v1849 = vunpack.c.l.b16 %v227
  %v1850 = vunpack.c.h.b16 %v227
  %v1851 = vunpack.c.l.b16 %v228
  %v1852 = vunpack.c.h.b16 %v228
  %v1853 = vunpack.c.l.b16 %v229
  %v1854 = vunpack.c.h.b16 %v229
  %v1855 = vunpack.c.l.b16 %v230
  %v1856 = vunpack.c.h.b16 %v230
  %v1857 = vunpack.c.l.b16 %v231
  %v1858 = vunpack.c.h.b16 %v231
  %v1859 = vunpack.c.l.b16 %v232
  %v1860 = vunpack.c.l.b16 %v233
  %v1861 = vunpack.c.h.b16 %v233
  %v1862 = vunpack.c.l.b16 %v234
  %v1863 = vunpack.c.h.b16 %v234
  %v1864 = vunpack.c.l.b16 %v235
  %v1865 = vunpack.c.h.b16 %v235
  %v1866 = vunpack.c.l.b16 %v236
  %v1867 = vunpack.c.h.b16 %v236
  %v1868 = vunpack.c.l.b16 %v237
  %v1869 = vunpack.c.h.b16 %v237
  %v1870 = vunpack.c.l.b16 %v238
  %v1871 = vunpack.c.h.b16 %v238
  %v1872 = vunpack.c.l.b16 %v239
  %v1873 = vunpack.c.l.b16 %v240
  %v1874 = vunpack.c.h.b16 %v240
  %v1875 = vunpack.c.l.b16 %v241
  %v1876 = vunpack.c.h.b16 %v241
  %v1877 = vunpack.c.l.b16 %v242
  %v1878 = vunpack.c.h.b16 %v242
  %v1879 = vunpack.c.l.b16 %v243
  %v1880 = vunpack.c.h.b16 %v243
  %v1881 = vunpack.c.l.b16 %v244
  %v1882 = vunpack.c.h.b16 %v244
  %v1883 = vunpack.c.l.b16 %v245
  %v1884 = vunpack.c.h.b16 %v245
  %v1885 = vunpack.c.l.b16 %v246
  %v1886 = vunpack.c.l.b16 %v247
  %v1887 = vunpack.c.h.b16 %v247
  %v1888 = vunpack.c.l.b16 %v248
  %v1889 = vunpack.c.h.b16 %v248
  %v1890 = vunpack.c.l.b16 %v249
  %v1891 = vunpack.c.h.b16 %v249
  %v1892 = vunpack.c.l.b16 %v250
  %v1893 = vunpack.c.h.b16 %v250
  %v1894 = vunpack.c.l.b16 %v251
  %v1895 = vunpack.c.h.b16 %v251
  %v1896 = vunpack.c.l.b16 %v252
  %v1897 = vunpack.c.h.b16 %v252
  %v1898 = vunpack.c.l.b16 %v253
  %v1899 = vunpack.c.l.b16 %v254
  %v1900 = vunpack.c.h.b16 %v254
  %v1901 = vunpack.c.l.b16 %v255
  %v1902 = vunpack.c.h.b16 %v255
  %v1903 = vunpack.c.l.b16 %v256
  %v1904 = vunpack.c.h.b16 %v256
  %v1905 = vunpack.c.l.b16 %v257
  %v1906 = vunpack.c.h.b16 %v257
  %v1907 = vunpack.c.l.b16 %v258
  %v1908 = vunpack.c.h.b16 %v258
  %v1909 = vunpack.c.l.b16 %v259
  %v1910 = vunpack.c.h.b16 %v259
  %v1911 = vunpack.c.l.b16 %v260
  %v1912 = vunpack.c.l.b16 %v261
  %v1913 = vunpack.c.h.b16 %v261
  %v1914 = vunpack.c.l.b16 %v262
  %v1915 = vunpack.c.h.b16 %v262
  %v1916 = vunpack.c.l.b16 %v263
  %v1917 = vunpack.c.h.b16 %v263
  %v1918 = vunpack.c.l.b16 %v264
  %v1919 = vunpack.c.h.b16 %v264
  %v1920 = vunpack.c.l.b16 %v265
  %v1921 = vunpack.c.h.b16 %v265
  %v1922 = vunpack.c.l.b16 %v266
  %v1923 = vunpack.c.h.b16 %v266
  %v1924 = vunpack.c.l.b16 %v267
  %v1925 = vunpack.c.l.b16 %v268
  %v1926 = vunpack.c.h.b16 %v268
  %v1927 = vunpack.c.l.b16 %v269
  %v1928 = vunpack.c.h.b16 %v269
  %v1929 = vunpack.c.l.b16 %v270
  %v1930 = vunpack.c.h.b16 %v270
  %v1931 = vunpack.c.l.b16 %v271
  %v1932 = vunpack.c.h.b16 %v271
  %v1933 = vunpack.c.l.b16 %v272
  %v1934 = vunpack.c.h.b16 %v272
  %v1935 = vunpack.c.l.b16 %v273
  %v1936 = vunpack.c.h.b16 %v273
  %v1937 = vunpack.c.l.b16 %v274
  %v1938 = vunpack.c.l.b16 %v275
  %v1939 = vunpack.c.h.b16 %v275
  %v1940 = vunpack.c.l.b16 %v276
  %v1941 = vunpack.c.h.b16 %v276
  %v1942 = vunpack.c.l.b16 %v277
  %v1943 = vunpack.c.h.b16 %v277
  %v1944 = vunpack.c.l.b16 %v278
  %v1945 = vunpack.c.h.b16 %v278
  %v1946 = vunpack.c.l.b16 %v279
  %v1947 = vunpack.c.h.b16 %v279
  %v1948 = vunpack.c.l.b16 %v280
  %v1949 = vunpack.c.h.b16 %v280
  %v1950 = vunpack.c.l.b16 %v281
  %v1951 = vunpack.c.l.b16 %v282
  %v1952 = vunpack.c.h.b16 %v282
  %v1953 = vunpack.c.l.b16 %v283
  %v1954 = vunpack.c.h.b16 %v283
  %v1955 = vunpack.c.l.b16 %v284
  %v1956 = vunpack.c.h.b16 %v284
  %v1957 = vunpack.c.l.b16 %v285
  %v1958 = vunpack.c.h.b16 %v285
  %v1959 = vunpack.c.l.b16 %v286
  %v1960 = vunpack.c.h.b16 %v286
  %v1961 = vunpack.c.l.b16 %v287
  %v1962 = vunpack.c.h.b16 %v287
  %v1963 = vunpack.c.l.b16 %v288
  %v1964 = vunpack.c.l.b16 %v289
  %v1965 = vunpack.c.h.b16 %v289
  %v1966 = vunpack.c.l.b16 %v290
  %v1967 = vunpack.c.h.b16 %v290
  %v1968 = vunpack.c.l.b16 %v291
  %v1969 = vunpack.c.h.b16 %v291
  %v1970 = vunpack.c.l.b16 %v292
  %v1971 = vunpack.c.h.b16 %v292
  %v1972 = vunpack.c.l.b16 %v293
  %v1973 = vunpack.c.h.b16 %v293
  %v1974 = vunpack.c.l.b16 %v294
  %v1975 = vunpack.c.h.b16 %v294
  %v1976 = vunpack.c.l.b16 %v295
  %v1977 = vunpack.c.l.b16 %v296
  %v1978 = vunpack.c.h.b16 %v296
  %v1979 = vunpack.c.l.b16 %v297
  %v1980 = vunpack.c.h.b16 %v297
  %v1981 = vunpack.c.l.b16 %v298
  %v1982 = vunpack.c.h.b16 %v298
  %v1983 = vunpack.c.l.b16 %v299
  %v1984 = vunpack.c.h.b16 %v299
  %v1985 = vunpack.c.l.b16 %v300
  %v1986 = vunpack.c.h.b16 %v300
  %v1987 = vunpack.c.l.b16 %v301
  %v1988 = vunpack.c.h.b16 %v301
  %v1989 = vunpack.c.l.b16 %v302
  %v1990 = vunpack.c.l.b16 %v303
  %v1991 = vunpack.c.h.b16 %v303
  %v1992 = vunpack.c.l.b16 %v304
  %v1993 = vunpack.c.h.b16 %v304
  %v1994 = vunpack.c.l.b16 %v305
  %v1995 = vunpack.c.h.b16 %v305
  %v1996 = vunpack.c.l.b16 %v306
  %v1997 = vunpack.c.h.b16 %v306
  %v1998 = vunpack.c.l.b16 %v307
  %v1999 = vunpack.c.h.b16 %v307
  %v2000 = vunpack.c.l.b16 %v308
  %v2001 = vunpack.c.h.b16 %v308
  %v2002 = vunpack.c.l.b16 %v309
  %v2003 = vunpack.c.l.b16 %v310
  %v2004 = vunpack.c.h.b16 %v310
  %v2005 = vunpack.c.l.b16 %v311
  %v2006 = vunpack.c.h.b16 %v311
  %v2007 = vunpack.c.l.b16 %v312
  %v2008 = vunpack.c.h.b16 %v312
  %v2009 = vunpack.c.l.b16 %v313
  %v2010 = vunpack.c.h.b16 %v313
  %v2011 = vunpack.c.l.b16 %v314
  %v2012 = vunpack.c.h.b16 %v314
  %v2013 = vunpack.c.l.b16 %v315
  %v2014 = vunpack.c.h.b16 %v315
  %v2015 = vunpack.c.l.b16 %v316
  %v2016 = vunpack.c.l.b16 %v317
  %v2017 = vunpack.c.h.b16 %v317
  %v2018 = vunpack.c.l.b16 %v318
  %v2019 = vunpack.c.h.b16 %v318
  %v2020 = vunpack.c.l.b16 %v319
  %v2021 = vunpack.c.h.b16 %v319
  %v2022 = vunpack.c.l.b16 %v320
  %v2023 = vunpack.c.h.b16 %v320
  %v2024 = vunpack.c.l.b16 %v321
  %v2025 = vunpack.c.h.b16 %v321
  %v2026 = vunpack.c.l.b16 %v322
  %v2027 = vunpack.c.h.b16 %v322
  %v2028 = vunpack.c.l.b16 %v323
  %v2029 = vunpack.c.l.b16 %v324
  %v2030 = vunpack.c.h.b16 %v324
  %v2031 = vunpack.c.l.b16 %v325
  %v2032 = vunpack.c.h.b16 %v325
  %v2033 = vunpack.c.l.b16 %v326
  %v2034 = vunpack.c.h.b16 %v326
  %v2035 = vunpack.c.l.b16 %v327
  %v2036 = vunpack.c.h.b16 %v327
  %v2037 = vunpack.c.l.b16 %v328
  %v2038 = vunpack.c.h.b16 %v328
  %v2039 = vunpack.c.l.b16 %v329
  %v2040 = vunpack.c.h.b16 %v329
  %v2041 = vunpack.c.l.b16 %v330
  %v2042 = vunpack.c.l.b16 %v331
  %v2043 = vunpack.c.h.b16 %v331
  %v2044 = vunpack.c.l.b16 %v332
  %v2045 = vunpack.c.h.b16 %v332
  %v2046 = vunpack.c.l.b16 %v333
  %v2047 = vunpack.c.h.b16 %v333
  %v2048 = vunpack.c.l.b16 %v334
  %v2049 = vunpack.c.h.b16 %v334
  %v2050 = vunpack.c.l.b16 %v335
  %v2051 = vunpack.c.h.b16 %v335
  %v2052 = vunpack.c.l.b16 %v336
  %v2053 = vunpack.c.h.b16 %v336
  %v2054 = vunpack.c.l.b16 %v337
  %v2055 = vunpack.c.l.b16 %v338
  %v2056 = vunpack.c.h.b16 %v338
  %v2057 = vunpack.c.l.b16 %v339
  %v2058 = vunpack.c.h.b16 %v339
  %v2059 = vunpack.c.l.b16 %v340
  %v2060 = vunpack.c.h.b16 %v340
  %v2061 = vunpack.c.l.b16 %v341
  %v2062 = vunpack.c.h.b16 %v341
  %v2063 = vunpack.c.l.b16 %v342
  %v2064 = vunpack.c.h.b16 %v342
  %v2065 = vunpack.c.l.b16 %v343
  %v2066 = vunpack.c.h.b16 %v343
  %v2067 = vunpack.c.l.b16 %v344
  %v2068 = vunpack.c.l.b16 %v345
  %v2069 = vunpack.c.h.b16 %v345
  %v2070 = vunpack.c.l.b16 %v346
  %v2071 = vunpack.c.h.b16 %v346
  %v2072 = vunpack.c.l.b16 %v347
  %v2073 = vunpack.c.h.b16 %v347
  %v2074 = vunpack.c.l.b16 %v348
  %v2075 = vunpack.c.h.b16 %v348
  %v2076 = vunpack.c.l.b16 %v349
  %v2077 = vunpack.c.h.b16 %v349
  %v2078 = vunpack.c.l.b16 %v350
  %v2079 = vunpack.c.h.b16 %v350
  %v2080 = vunpack.c.l.b16 %v351
  %v2081 = vunpack.c.l.b16 %v352
  %v2082 = vunpack.c.h.b16 %v352
  %v2083 = vunpack.c.l.b16 %v353
  %v2084 = vunpack.c.h.b16 %v353
  %v2085 = vunpack.c.l.b16 %v354
  %v2086 = vunpack.c.h.b16 %v354
  %v2087 = vunpack.c.l.b16 %v355
  %v2088 = vunpack.c.h.b16 %v355
  %v2089 = vunpack.c.l.b16 %v356
  %v2090 = vunpack.c.h.b16 %v356
  %v2091 = vunpack.c.l.b16 %v357
  %v2092 = vunpack.c.h.b16 %v357
  %v2093 = vunpack.c.l.b16 %v358
  %v2094 = vunpack.c.l.b16 %v359
  %v2095 = vunpack.c.h.b16 %v359
  %v2096 = vunpack.c.l.b16 %v360
  %v2097 = vunpack.c.h.b16 %v360
  %v2098 = vunpack.c.l.b16 %v361
  %v2099 = vunpack.c.h.b16 %v361
  %v2100 = vunpack.c.l.b16 %v362
  %v2101 = vunpack.c.h.b16 %v362
  %v2102 = vunpack.c.l.b16 %v363
  %v2103 = vunpack.c.h.b16 %v363
  %v2104 = vunpack.c.l.b16 %v364
  %v2105 = vunpack.c.h.b16 %v364
  %v2106 = vunpack.c.l.b16 %v365
  %v2107 = vunpack.c.l.b16 %v366
  %v2108 = vunpack.c.h.b16 %v366
  %v2109 = vunpack.c.l.b16 %v367
  %v2110 = vunpack.c.h.b16 %v367
  %v2111 = vunpack.c.l.b16 %v368
  %v2112 = vunpack.c.h.b16 %v368
  %v2113 = vunpack.c.l.b16 %v369
  %v2114 = vunpack.c.h.b16 %v369
  %v2115 = vunpack.c.l.b16 %v370
  %v2116 = vunpack.c.h.b16 %v370
  %v2117 = vunpack.c.l.b16 %v371
  %v2118 = vunpack.c.h.b16 %v371
  %v2119 = vunpack.c.l.b16 %v372
  %v2120 = vunpack.c.l.b16 %v373
  %v2121 = vunpack.c.h.b16 %v373
  %v2122 = vunpack.c.l.b16 %v374
  %v2123 = vunpack.c.h.b16 %v374
  %v2124 = vunpack.c.l.b16 %v375
  %v2125 = vunpack.c.h.b16 %v375
  %v2126 = vunpack.c.l.b16 %v376
  %v2127 = vunpack.c.h.b16 %v376
  %v2128 = vunpack.c.l.b16 %v377
  %v2129 = vunpack.c.h.b16 %v377
  %v2130 = vunpack.c.l.b16 %v378
  %v2131 = vunpack.c.h.b16 %v378
  %v2132 = vunpack.c.l.b16 %v379
  %v2133 = vunpack.c.l.b16 %v380
  %v2134 = vunpack.c.h.b16 %v380
  %v2135 = vunpack.c.l.b16 %v381
  %v2136 = vunpack.c.h.b16 %v381
  %v2137 = vunpack.c.l.b16 %v382
  %v2138 = vunpack.c.h.b16 %v382
  %v2139 = vunpack.c.l.b16 %v383
  %v2140 = vunpack.c.h.b16 %v383
  %v2141 = vunpack.c.l.b16 %v384
  %v2142 = vunpack.c.h.b16 %v384
  %v2143 = vunpack.c.l.b16 %v385
  %v2144 = vunpack.c.h.b16 %v385
  %v2145 = vunpack.c.l.b16 %v386
  %v2146 = vunpack.c.l.b16 %v387
  %v2147 = vunpack.c.h.b16 %v387
  %v2148 = vunpack.c.l.b16 %v388
  %v2149 = vunpack.c.h.b16 %v388
  %v2150 = vunpack.c.l.b16 %v389
  %v2151 = vunpack.c.h.b16 %v389
  %v2152 = vunpack.c.l.b16 %v390
  %v2153 = vunpack.c.h.b16 %v390
  %v2154 = vunpack.c.l.b16 %v391
  %v2155 = vunpack.c.h.b16 %v391
  %v2156 = vunpack.c.l.b16 %v392
  %v2157 = vunpack.c.h.b16 %v392
  %v2158 = vunpack.c.l.b16 %v393
  %v2159 = vunpack.c.l.b16 %v394
  %v2160 = vunpack.c.h.b16 %v394
  %v2161 = vunpack.c.l.b16 %v395
  %v2162 = vunpack.c.h.b16 %v395
  %v2163 = vunpack.c.l.b16 %v396
  %v2164 = vunpack.c.h.b16 %v396
  %v2165 = vunpack.c.l.b16 %v397
  %v2166 = vunpack.c.h.b16 %v397
  %v2167 = vunpack.c.l.b16 %v398
  %v2168 = vunpack.c.h.b16 %v398
  %v2169 = vunpack.c.l.b16 %v399
  %v2170 = vunpack.c.h.b16 %v399
  %v2171 = vunpack.c.l.b16 %v400
  %v2172 = vunpack.c.l.b16 %v401
  %v2173 = vunpack.c.h.b16 %v401
  %v2174 = vunpack.c.l.b16 %v402
  %v2175 = vunpack.c.h.b16 %v402
  %v2176 = vunpack.c.l.b16 %v403
  %v2177 = vunpack.c.h.b16 %v403
  %v2178 = vunpack.c.l.b16 %v404
  %v2179 = vunpack.c.h.b16 %v404
  %v2180 = vunpack.c.l.b16 %v405
  %v2181 = vunpack.c.h.b16 %v405
  %v2182 = vunpack.c.l.b16 %v406
  %v2183 = vunpack.c.h.b16 %v406
  %v2184 = vunpack.c.l.b16 %v407
  %v2185 = vunpack.c.l.b16 %v408
  %v2186 = vunpack.c.h.b16 %v408
  %v2187 = vunpack.c.l.b16 %v409
  %v2188 = vunpack.c.h.b16 %v409
  %v2189 = vunpack.c.l.b16 %v410
  %v2190 = vunpack.c.h.b16 %v410
  %v2191 = vunpack.c.l.b16 %v411
  %v2192 = vunpack.c.h.b16 %v411
  %v2193 = vunpack.c.l.b16 %v412
  %v2194 = vunpack.c.h.b16 %v412
  %v2195 = vunpack.c.l.b16 %v413
  %v2196 = vunpack.c.h.b16 %v413
  %v2197 = vunpack.c.l.b16 %v414
  %v2198 = vunpack.c.l.b16 %v415
  %v2199 = vunpack.c.h.b16 %v415
  %v2200 = vunpack.c.l.b16 %v416
  %v2201 = vunpack.c.h.b16 %v416
  %v2202 = vunpack.c.l.b16 %v417
  %v2203 = vunpack.c.h.b16 %v417
  %v2204 = vunpack.c.l.b16 %v418
  %v2205 = vunpack.c.h.b16 %v418
  %v2206 = vunpack.c.l.b16 %v419
  %v2207 = vunpack.c.h.b16 %v419
  %v2208 = vunpack.c.l.b16 %v420
  %v2209 = vunpack.c.h.b16 %v420
  %v2210 = vunpack.c.l.b16 %v421
  %v2211 = vunpack.c.l.b16 %v422
  %v2212 = vunpack.c.h.b16 %v422
  %v2213 = vunpack.c.l.b16 %v423
  %v2214 = vunpack.c.h.b16 %v423
  %v2215 = vunpack.c.l.b16 %v424
  %v2216 = vunpack.c.h.b16 %v424
  %v2217 = vunpack.c.l.b16 %v425
  %v2218 = vunpack.c.h.b16 %v425
  %v2219 = vunpack.c.l.b16 %v426
  %v2220 = vunpack.c.h.b16 %v426
  %v2221 = vunpack.c.l.b16 %v427
  %v2222 = vunpack.c.h.b16 %v427
  %v2223 = vunpack.c.l.b16 %v428
  %v2224 = vunpack.c.l.b16 %v429
  %v2225 = vunpack.c.h.b16 %v429
  %v2226 = vunpack.c.l.b16 %v430
  %v2227 = vunpack.c.h.b16 %v430
  %v2228 = vunpack.c.l.b16 %v431
  %v2229 = vunpack.c.h.b16 %v431
  %v2230 = vunpack.c.l.b16 %v432
  %v2231 = vunpack.c.h.b16 %v432
  %v2232 = vunpack.c.l.b16 %v433
  %v2233 = vunpack.c.h.b16 %v433
  %v2234 = vunpack.c.l.b16 %v434
  %v2235 = vunpack.c.h.b16 %v434
  %v2236 = vunpack.c.l.b16 %v435
  %v2237 = vunpack.c.l.b16 %v436
  %v2238 = vunpack.c.h.b16 %v436
  %v2239 = vunpack.c.l.b16 %v437
  %v2240 = vunpack.c.h.b16 %v437
  %v2241 = vunpack.c.l.b16 %v438
  %v2242 = vunpack.c.h.b16 %v438
  %v2243 = vunpack.c.l.b16 %v439
  %v2244 = vunpack.c.h.b16 %v439
  %v2245 = vunpack.c.l.b16 %v440
  %v2246 = vunpack.c.h.b16 %v440
  %v2247 = vunpack.c.l.b16 %v441
  %v2248 = vunpack.c.h.b16 %v441
  %v2249 = vunpack.c.l.b16 %v442
  %v2250 = vunpack.c.l.b16 %v443
  %v2251 = vunpack.c.h.b16 %v443
  %v2252 = vunpack.c.l.b16 %v444
  %v2253 = vunpack.c.h.b16 %v444
  %v2254 = vunpack.c.l.b16 %v445
  %v2255 = vunpack.c.h.b16 %v445
  %v2256 = vunpack.c.l.b16 %v446
  %v2257 = vunpack.c.h.b16 %v446
  %v2258 = vunpack.c.l.b16 %v447
  %v2259 = vunpack.c.h.b16 %v447
  %v2260 = vunpack.c.l.b16 %v448
  %v2261 = vunpack.c.h.b16 %v448
  %v2262 = vunpack.c.l.b16 %v449
  %v2263 = vunpack.c.l.b16 %v450
  %v2264 = vunpack.c.h.b16 %v450
  %v2265 = vunpack.c.l.b16 %v451
  %v2266 = vunpack.c.h.b16 %v451
  %v2267 = vunpack.c.l.b16 %v452
  %v2268 = vunpack.c.h.b16 %v452
  %v2269 = vunpack.c.l.b16 %v453
  %v2270 = vunpack.c.h.b16 %v453
  %v2271 = vunpack.c.l.b16 %v454
  %v2272 = vunpack.c.h.b16 %v454
  %v2273 = vunpack.c.l.b16 %v455
  %v2274 = vunpack.c.h.b16 %v455
  %v2275 = vunpack.c.l.b16 %v456
  %v2276 = vunpack.c.l.b16 %v457
  %v2277 = vunpack.c.h.b16 %v457
  %v2278 = vunpack.c.l.b16 %v458
  %v2279 = vunpack.c.h.b16 %v458
  %v2280 = vunpack.c.l.b16 %v459
  %v2281 = vunpack.c.h.b16 %v459
  %v2282 = vunpack.c.l.b16 %v460
  %v2283 = vunpack.c.h.b16 %v460
  %v2284 = vunpack.c.l.b16 %v461
  %v2285 = vunpack.c.h.b16 %v461
  %v2286 = vunpack.c.l.b16 %v462
  %v2287 = vunpack.c.h.b16 %v462
  %v2288 = vunpack.c.l.b16 %v463
  %v2289 = vunpack.c.l.b16 %v464
  %v2290 = vunpack.c.h.b16 %v464
  %v2291 = vunpack.c.l.b16 %v465
  %v2292 = vunpack.c.h.b16 %v465
  %v2293 = vunpack.c.l.b16 %v466
  %v2294 = vunpack.c.h.b16 %v466
  %v2295 = vunpack.c.l.b16 %v467
  %v2296 = vunpack.c.h.b16 %v467
  %v2297 = vunpack.c.l.b16 %v468
  %v2298 = vunpack.c.h.b16 %v468
  %v2299 = vunpack.c.l.b16 %v469
  %v2300 = vunpack.c.h.b16 %v469
  %v2301 = vunpack.c.l.b16 %v470
  %v2302 = vunpack.c.l.b16 %v471
  %v2303 = vunpack.c.h.b16 %v471
  %v2304 = vunpack.c.l.b16 %v472
  %v2305 = vunpack.c.h.b16 %v472
  %v2306 = vunpack.c.l.b16 %v473
  %v2307 = vunpack.c.h.b16 %v473
  %v2308 = vunpack.c.l.b16 %v474
  %v2309 = vunpack.c.h.b16 %v474
  %v2310 = vunpack.c.l.b16 %v475
  %v2311 = vunpack.c.h.b16 %v475
  %v2312 = vunpack.c.l.b16 %v476
  %v2313 = vunpack.c.h.b16 %v476
  %v2314 = vunpack.c.l.b16 %v477
  %v2315 = vunpack.c.l.b16 %v478
  %v2316 = vunpack.c.h.b16 %v478
  %v2317 = vunpack.c.l.b16 %v479
  %v2318 = vunpack.c.h.b16 %v479
  %v2319 = vunpack.c.l.b16 %v480
  %v2320 = vunpack.c.h.b16 %v480
  %v2321 = vunpack.c.l.b16 %v481
  %v2322 = vunpack.c.h.b16 %v481
  %v2323 = vunpack.c.l.b16 %v482
  %v2324 = vunpack.c.h.b16 %v482
  %v2325 = vunpack.c.l.b16 %v483
  %v2326 = vunpack.c.h.b16 %v483
  %v2327 = vunpack.c.l.b16 %v484
  %v2328 = vunpack.c.l.b16 %v485
  %v2329 = vunpack.c.h.b16 %v485
  %v2330 = vunpack.c.l.b16 %v486
  %v2331 = vunpack.c.h.b16 %v486
  %v2332 = vunpack.c.l.b16 %v487
  %v2333 = vunpack.c.h.b16 %v487
  %v2334 = vunpack.c.l.b16 %v488
  %v2335 = vunpack.c.h.b16 %v488
  %v2336 = vunpack.c.l.b16 %v489
  %v2337 = vunpack.c.h.b16 %v489
  %v2338 = vunpack.c.l.b16 %v490
  %v2339 = vunpack.c.h.b16 %v490
  %v2340 = vunpack.c.l.b16 %v491
  %v2341 = vunpack.c.l.b16 %v492
  %v2342 = vunpack.c.h.b16 %v492
  %v2343 = vunpack.c.l.b16 %v493
  %v2344 = vunpack.c.h.b16 %v493
  %v2345 = vunpack.c.l.b16 %v494
  %v2346 = vunpack.c.h.b16 %v494
  %v2347 = vunpack.c.l.b16 %v495
  %v2348 = vunpack.c.h.b16 %v495
  %v2349 = vunpack.c.l.b16 %v496
  %v2350 = vunpack.c.h.b16 %v496
  %v2351 = vunpack.c.l.b16 %v497
  %v2352 = vunpack.c.h.b16 %v497
  %v2353 = vunpack.c.l.b16 %v498
  %v2354 = vunpack.c.l.b16 %v499
  %v2355 = vunpack.c.h.b16 %v499
  %v2356 = vunpack.c.l.b16 %v500
  %v2357 = vunpack.c.h.b16 %v500
  %v2358 = vunpack.c.l.b16 %v501
  %v2359 = vunpack.c.h.b16 %v501
  %v2360 = vunpack.c.l.b16 %v502
  %v2361 = vunpack.c.h.b16 %v502
  %v2362 = vunpack.c.l.b16 %v503
  %v2363 = vunpack.c.h.b16 %v503
  %v2364 = vunpack.c.l.b16 %v504
  %v2365 = vunpack.c.h.b16 %v504
  %v2366 = vunpack.c.l.b16 %v505
  %v2367 = vunpack.c.l.b16 %v506
  %v2368 = vunpack.c.h.b16 %v506
  %v2369 = vunpack.c.l.b16 %v507
  %v2370 = vunpack.c.h.b16 %v507
  %v2371 = vunpack.c.l.b16 %v508
  %v2372 = vunpack.c.h.b16 %v508
  %v2373 = vunpack.c.l.b16 %v509
  %v2374 = vunpack.c.h.b16 %v509
  %v2375 = vunpack.c.l.b16 %v510
  %v2376 = vunpack.c.h.b16 %v510
  %v2377 = vunpack.c.l.b16 %v511
  %v2378 = vunpack.c.h.b16 %v511
  %v2379 = vunpack.c.l.b16 %v512
  %v2380 = vunpack.c.l.b16 %v513
  %v2381 = vunpack.c.h.b16 %v513
  %v2382 = vunpack.c.l.b16 %v514
  %v2383 = vunpack.c.h.b16 %v514
  %v2384 = vunpack.c.l.b16 %v515
  %v2385 = vunpack.c.h.b16 %v515
  %v2386 = vunpack.c.l.b16 %v516
  %v2387 = vunpack.c.h.b16 %v516
  %v2388 = vunpack.c.l.b16 %v517
  %v2389 = vunpack.c.h.b16 %v517
  %v2390 = vunpack.c.l.b16 %v518
  %v2391 = vunpack.c.h.b16 %v518
  %v2392 = vunpack.c.l.b16 %v519
  %v2393 = vunpack.c.l.b16 %v520
  %v2394 = vunpack.c.h.b16 %v520
  %v2395 = vunpack.c.l.b16 %v521
  %v2396 = vunpack.c.h.b16 %v521
  %v2397 = vunpack.c.l.b16 %v522
  %v2398 = vunpack.c.h.b16 %v522
  %v2399 = vunpack.c.l.b16 %v523
  %v2400 = vunpack.c.h.b16 %v523
  %v2401 = vunpack.c.l.b16 %v524
  %v2402 = vunpack.c.h.b16 %v524
  %v2403 = vunpack.c.l.b16 %v525
  %v2404 = vunpack.c.h.b16 %v525
  %v2405 = vunpack.c.l.b16 %v526
  %v2406 = vunpack.c.l.b16 %v527
  %v2407 = vunpack.c.h.b16 %v527
  %v2408 = vunpack.c.l.b16 %v528
  %v2409 = vunpack.c.h.b16 %v528
  %v2410 = vunpack.c.l.b16 %v529
  %v2411 = vunpack.c.h.b16 %v529
  %v2412 = vunpack.c.l.b16 %v530
  %v2413 = vunpack.c.h.b16 %v530
  %v2414 = vunpack.c.l.b16 %v531
  %v2415 = vunpack.c.h.b16 %v531
  %v2416 = vunpack.c.l.b16 %v532
  %v2417 = vunpack.c.h.b16 %v532
  %v2418 = vunpack.c.l.b16 %v533
  %v2419 = vunpack.c.l.b16 %v534
  %v2420 = vunpack.c.h.b16 %v534
  %v2421 = vunpack.c.l.b16 %v535
  %v2422 = vunpack.c.h.b16 %v535
  %v2423 = vunpack.c.l.b16 %v536
  %v2424 = vunpack.c.h.b16 %v536
  %v2425 = vunpack.c.l.b16 %v537
  %v2426 = vunpack.c.h.b16 %v537
  %v2427 = vunpack.c.l.b16 %v538
  %v2428 = vunpack.c.h.b16 %v538
  %v2429 = vunpack.c.l.b16 %v539
  %v2430 = vunpack.c.h.b16 %v539
  %v2431 = vunpack.c.l.b16 %v540
  %v2432 = vunpack.c.l.b16 %v541
  %v2433 = vunpack.c.h.b16 %v541
  %v2434 = vunpack.c.l.b16 %v542
  %v2435 = vunpack.c.h.b16 %v542
  %v2436 = vunpack.c.l.b16 %v543
  %v2437 = vunpack.c.h.b16 %v543
  %v2438 = vunpack.c.l.b16 %v544
  %v2439 = vunpack.c.h.b16 %v544
  %v2440 = vunpack.c.l.b16 %v545
  %v2441 = vunpack.c.h.b16 %v545
  %v2442 = vunpack.c.l.b16 %v546
  %v2443 = vunpack.c.h.b16 %v546
  %v2444 = vunpack.c.l.b16 %v547
  %v2445 = vunpack.c.l.b16 %v548
  %v2446 = vunpack.c.h.b16 %v548
  %v2447 = vunpack.c.l.b16 %v549
  %v2448 = vunpack.c.h.b16 %v549
  %v2449 = vunpack.c.l.b16 %v550
  %v2450 = vunpack.c.h.b16 %v550
  %v2451 = vunpack.c.l.b16 %v551
  %v2452 = vunpack.c.h.b16 %v551
  %v2453 = vunpack.c.l.b16 %v552
  %v2454 = vunpack.c.h.b16 %v552
  %v2455 = vunpack.c.l.b16 %v553
  %v2456 = vunpack.c.h.b16 %v553
  %v2457 = vunpack.c.l.b16 %v554
  %v2458 = vunpack.c.l.b16 %v555
  %v2459 = vunpack.c.h.b16 %v555
  %v2460 = vunpack.c.l.b16 %v556
  %v2461 = vunpack.c.h.b16 %v556
  %v2462 = vunpack.c.l.b16 %v557
  %v2463 = vunpack.c.h.b16 %v557
  %v2464 = vunpack.c.l.b16 %v558
  %v2465 = vunpack.c.h.b16 %v558
  %v2466 = vunpack.c.l.b16 %v559
  %v2467 = vunpack.c.h.b16 %v559
  %v2468 = vunpack.c.l.b16 %v560
  %v2469 = vunpack.c.h.b16 %v560
  %v2470 = vunpack.c.l.b16 %v561
  %v2471 = vunpack.c.l.b16 %v562
  %v2472 = vunpack.c.h.b16 %v562
  %v2473 = vunpack.c.l.b16 %v563
  %v2474 = vunpack.c.h.b16 %v563
  %v2475 = vunpack.c.l.b16 %v564
  %v2476 = vunpack.c.h.b16 %v564
  %v2477 = vunpack.c.l.b16 %v565
  %v2478 = vunpack.c.h.b16 %v565
  %v2479 = vunpack.c.l.b16 %v566
  %v2480 = vunpack.c.h.b16 %v566
  %v2481 = vunpack.c.l.b16 %v567
  %v2482 = vunpack.c.h.b16 %v567
  %v2483 = vunpack.c.l.b16 %v568
  %v2484 = vunpack.c.l.b16 %v569
  %v2485 = vunpack.c.h.b16 %v569
  %v2486 = vunpack.c.l.b16 %v570
  %v2487 = vunpack.c.h.b16 %v570
  %v2488 = vunpack.c.l.b16 %v571
  %v2489 = vunpack.c.h.b16 %v571
  %v2490 = vunpack.c.l.b16 %v572
  %v2491 = vunpack.c.h.b16 %v572
  %v2492 = vunpack.c.l.b16 %v573
  %v2493 = vunpack.c.h.b16 %v573
  %v2494 = vunpack.c.l.b16 %v574
  %v2495 = vunpack.c.h.b16 %v574
  %v2496 = vunpack.c.l.b16 %v575
  %v2497 = vunpack.c.l.b16 %v576
  %v2498 = vunpack.c.h.b16 %v576
  %v2499 = vunpack.c.l.b16 %v577
  %v2500 = vunpack.c.h.b16 %v577
  %v2501 = vunpack.c.l.b16 %v578
  %v2502 = vunpack.c.h.b16 %v578
  %v2503 = vunpack.c.l.b16 %v579
  %v2504 = vunpack.c.h.b16 %v579
  %v2505 = vunpack.c.l.b16 %v580
  %v2506 = vunpack.c.h.b16 %v580
  %v2507 = vunpack.c.l.b16 %v581
  %v2508 = vunpack.c.h.b16 %v581
  %v2509 = vunpack.c.l.b16 %v582
  %v2510 = vunpack.c.l.b16 %v583
  %v2511 = vunpack.c.h.b16 %v583
  %v2512 = vunpack.c.l.b16 %v584
  %v2513 = vunpack.c.h.b16 %v584
  %v2514 = vunpack.c.l.b16 %v585
  %v2515 = vunpack.c.h.b16 %v585
  %v2516 = vunpack.c.l.b16 %v586
  %v2517 = vunpack.c.h.b16 %v586
  %v2518 = vunpack.c.l.b16 %v587
  %v2519 = vunpack.c.h.b16 %v587
  %v2520 = vunpack.c.l.b16 %v588
  %v2521 = vunpack.c.h.b16 %v588
  %v2522 = vunpack.c.l.b16 %v589
  %v2523 = vunpack.c.l.b16 %v590
  %v2524 = vunpack.c.h.b16 %v590
  %v2525 = vunpack.c.l.b16 %v591
  %v2526 = vunpack.c.h.b16 %v591
  %v2527 = vunpack.c.l.b16 %v592
  %v2528 = vunpack.c.h.b16 %v592
  %v2529 = vunpack.c.l.b16 %v593
  %v2530 = vunpack.c.h.b16 %v593
  %v2531 = vunpack.c.l.b16 %v594
  %v2532 = vunpack.c.h.b16 %v594
  %v2533 = vunpack.c.l.b16 %v595
  %v2534 = vunpack.c.h.b16 %v595
  %v2535 = vunpack.c.l.b16 %v596
  %v2536 = vunpack.c.l.b16 %v597
  %v2537 = vunpack.c.h.b16 %v597
  %v2538 = vunpack.c.l.b16 %v598
  %v2539 = vunpack.c.h.b16 %v598
  %v2540 = vunpack.c.l.b16 %v599
  %v2541 = vunpack.c.h.b16 %v599
  %v2542 = vunpack.c.l.b16 %v600
  %v2543 = vunpack.c.h.b16 %v600
  %v2544 = vunpack.c.l.b16 %v601
  %v2545 = vunpack.c.h.b16 %v601
  %v2546 = vunpack.c.l.b16 %v602
  %v2547 = vunpack.c.h.b16 %v602
  %v2548 = vunpack.c.l.b16 %v603
  %v2549 = vunpack.c.l.b16 %v604
  %v2550 = vunpack.c.h.b16 %v604
  %v2551 = vunpack.c.l.b16 %v605
  %v2552 = vunpack.c.h.b16 %v605
  %v2553 = vunpack.c.l.b16 %v606
  %v2554 = vunpack.c.h.b16 %v606
  %v2555 = vunpack.c.l.b16 %v607
  %v2556 = vunpack.c.h.b16 %v607
  %v2557 = vunpack.c.l.b16 %v608
  %v2558 = vunpack.c.h.b16 %v608
  %v2559 = vunpack.c.l.b16 %v609
  %v2560 = vunpack.c.h.b16 %v609
  %v2561 = vunpack.c.l.b16 %v610
  %v2562 = vunpack.c.l.b16 %v611
  %v2563 = vunpack.c.h.b16 %v611
  %v2564 = vunpack.c.l.b16 %v612
  %v2565 = vunpack.c.h.b16 %v612
  %v2566 = vunpack.c.l.b16 %v613
  %v2567 = vunpack.c.h.b16 %v613
  %v2568 = vunpack.c.l.b16 %v614
  %v2569 = vunpack.c.h.b16 %v614
  %v2570 = vunpack.c.l.b16 %v615
  %v2571 = vunpack.c.h.b16 %v615
  %v2572 = vunpack.c.l.b16 %v616
  %v2573 = vunpack.c.h.b16 %v616
  %v2574 = vunpack.c.l.b16 %v617
  %v2575 = vunpack.c.l.b16 %v618
  %v2576 = vunpack.c.h.b16 %v618
  %v2577 = vunpack.c.l.b16 %v619
  %v2578 = vunpack.c.h.b16 %v619
  %v2579 = vunpack.c.l.b16 %v620
  %v2580 = vunpack.c.h.b16 %v620
  %v2581 = vunpack.c.l.b16 %v621
  %v2582 = vunpack.c.h.b16 %v621
  %v2583 = vunpack.c.l.b16 %v622
  %v2584 = vunpack.c.h.b16 %v622
  %v2585 = vunpack.c.l.b16 %v623
  %v2586 = vunpack.c.h.b16 %v623
  %v2587 = vunpack.c.l.b16 %v624
  %v2588 = vunpack.c.l.b16 %v625
  %v2589 = vunpack.c.h.b16 %v625
  %v2590 = vunpack.c.l.b16 %v626
  %v2591 = vunpack.c.h.b16 %v626
  %v2592 = vunpack.c.l.b16 %v627
  %v2593 = vunpack.c.h.b16 %v627
  %v2594 = vunpack.c.l.b16 %v628
  %v2595 = vunpack.c.h.b16 %v628
  %v2596 = vunpack.c.l.b16 %v629
  %v2597 = vunpack.c.h.b16 %v629
  %v2598 = vunpack.c.l.b16 %v630
  %v2599 = vunpack.c.h.b16 %v630
  %v2600 = vunpack.c.l.b16 %v631
  %v2601 = vunpack.c.l.b16 %v632
  %v2602 = vunpack.c.h.b16 %v632
  %v2603 = vunpack.c.l.b16 %v633
  %v2604 = vunpack.c.h.b16 %v633
  %v2605 = vunpack.c.l.b16 %v634
  %v2606 = vunpack.c.h.b16 %v634
  %v2607 = vunpack.c.l.b16 %v635
  %v2608 = vunpack.c.h.b16 %v635
  %v2609 = vunpack.c.l.b16 %v636
  %v2610 = vunpack.c.h.b16 %v636
  %v2611 = vunpack.c.l.b16 %v637
  %v2612 = vunpack.c.h.b16 %v637
  %v2613 = vunpack.c.l.b16 %v638
  %v2614 = vunpack.c.l.b16 %v639
  %v2615 = vunpack.c.h.b16 %v639
  %v2616 = vunpack.c.l.b16 %v640
  %v2617 = vunpack.c.h.b16 %v640
  %v2618 = vunpack.c.l.b16 %v641
  %v2619 = vunpack.c.h.b16 %v641
  %v2620 = vunpack.c.l.b16 %v642
  %v2621 = vunpack.c.h.b16 %v642
  %v2622 = vunpack.c.l.b16 %v643
  %v2623 = vunpack.c.h.b16 %v643
  %v2624 = vunpack.c.l.b16 %v644
  %v2625 = vunpack.c.h.b16 %v644
  %v2626 = vunpack.c.l.b16 %v645
  %v2627 = vunpack.c.l.b16 %v646
  %v2628 = vunpack.c.h.b16 %v646
  %v2629 = vunpack.c.l.b16 %v647
  %v2630 = vunpack.c.h.b16 %v647
  %v2631 = vunpack.c.l.b16 %v648
  %v2632 = vunpack.c.h.b16 %v648
  %v2633 = vunpack.c.l.b16 %v649
  %v2634 = vunpack.c.h.b16 %v649
  %v2635 = vunpack.c.l.b16 %v650
  %v2636 = vunpack.c.h.b16 %v650
  %v2637 = vunpack.c.l.b16 %v651
  %v2638 = vunpack.c.h.b16 %v651
  %v2639 = vunpack.c.l.b16 %v652
  %v2640 = vunpack.c.l.b16 %v653
  %v2641 = vunpack.c.h.b16 %v653
  %v2642 = vunpack.c.l.b16 %v654
  %v2643 = vunpack.c.h.b16 %v654
  %v2644 = vunpack.c.l.b16 %v655
  %v2645 = vunpack.c.h.b16 %v655
  %v2646 = vunpack.c.l.b16 %v656
  %v2647 = vunpack.c.h.b16 %v656
  %v2648 = vunpack.c.l.b16 %v657
  %v2649 = vunpack.c.h.b16 %v657
  %v2650 = vunpack.c.l.b16 %v658
  %v2651 = vunpack.c.h.b16 %v658
  %v2652 = vunpack.c.l.b16 %v659
  %v2653 = vunpack.c.l.b16 %v660
  %v2654 = vunpack.c.h.b16 %v660
  %v2655 = vunpack.c.l.b16 %v661
  %v2656 = vunpack.c.h.b16 %v661
  %v2657 = vunpack.c.l.b16 %v662
  %v2658 = vunpack.c.h.b16 %v662
  %v2659 = vunpack.c.l.b16 %v663
  %v2660 = vunpack.c.h.b16 %v663
  %v2661 = vunpack.c.l.b16 %v664
  %v2662 = vunpack.c.h.b16 %v664
  %v2663 = vunpack.c.l.b16 %v665
  %v2664 = vunpack.c.h.b16 %v665
  %v2665 = vunpack.c.l.b16 %v666
  %v2666 = vunpack.c.l.b16 %v667
  %v2667 = vunpack.c.h.b16 %v667
  %v2668 = vunpack.c.l.b16 %v668
  %v2669 = vunpack.c.h.b16 %v668
  %v2670 = vunpack.c.l.b16 %v669
  %v2671 = vunpack.c.h.b16 %v669
  %v2672 = vunpack.c.l.b16 %v670
  %v2673 = vunpack.c.h.b16 %v670
  %v2674 = vunpack.c.l.b16 %v671
  %v2675 = vunpack.c.h.b16 %v671
  %v2676 = vunpack.c.l.b16 %v672
  %v2677 = vunpack.c.h.b16 %v672
  %v2678 = vunpack.c.l.b16 %v673
  %v2679 = vunpack.c.l.b16 %v674
  %v2680 = vunpack.c.h.b16 %v674
  %v2681 = vunpack.c.l.b16 %v675
  %v2682 = vunpack.c.h.b16 %v675
  %v2683 = vunpack.c.l.b16 %v676
  %v2684 = vunpack.c.h.b16 %v676
  %v2685 = vunpack.c.l.b16 %v677
  %v2686 = vunpack.c.h.b16 %v677
  %v2687 = vunpack.c.l.b16 %v678
  %v2688 = vunpack.c.h.b16 %v678
  %v2689 = vunpack.c.l.b16 %v679
  %v2690 = vunpack.c.h.b16 %v679
  %v2691 = vunpack.c.l.b16 %v680
  %v2692 = vunpack.c.l.b16 %v681
  %v2693 = vunpack.c.h.b16 %v681
  %v2694 = vunpack.c.l.b16 %v682
  %v2695 = vunpack.c.h.b16 %v682
  %v2696 = vunpack.c.l.b16 %v683
  %v2697 = vunpack.c.h.b16 %v683
  %v2698 = vunpack.c.l.b16 %v684
  %v2699 = vunpack.c.h.b16 %v684
  %v2700 = vunpack.c.l.b16 %v685
  %v2701 = vunpack.c.h.b16 %v685
  %v2702 = vunpack.c.l.b16 %v686
  %v2703 = vunpack.c.h.b16 %v686
  %v2704 = vunpack.c.l.b16 %v687
  %v2705 = vunpack.c.l.b16 %v688
  %v2706 = vunpack.c.h.b16 %v688
  %v2707 = vunpack.c.l.b16 %v689
  %v2708 = vunpack.c.h.b16 %v689
  %v2709 = vunpack.c.l.b16 %v690
  %v2710 = vunpack.c.h.b16 %v690
  %v2711 = vunpack.c.l.b16 %v691
  %v2712 = vunpack.c.h.b16 %v691
  %v2713 = vunpack.c.l.b16 %v692
  %v2714 = vunpack.c.h.b16 %v692
  %v2715 = vunpack.c.l.b16 %v693
  %v2716 = vunpack.c.h.b16 %v693
  %v2717 = vunpack.c.l.b16 %v694
  %v2718 = vunpack.c.l.b16 %v695
  %v2719 = vunpack.c.h.b16 %v695
  %v2720 = vunpack.c.l.b16 %v696
  %v2721 = vunpack.c.h.b16 %v696
  %v2722 = vunpack.c.l.b16 %v697
  %v2723 = vunpack.c.h.b16 %v697
  %v2724 = vunpack.c.l.b16 %v698
  %v2725 = vunpack.c.h.b16 %v698
  %v2726 = vunpack.c.l.b16 %v699
  %v2727 = vunpack.c.h.b16 %v699
  %v2728 = vunpack.c.l.b16 %v700
  %v2729 = vunpack.c.h.b16 %v700
  %v2730 = vunpack.c.l.b16 %v701
  %v2731 = vunpack.c.l.b16 %v702
  %v2732 = vunpack.c.h.b16 %v702
  %v2733 = vunpack.c.l.b16 %v703
  %v2734 = vunpack.c.h.b16 %v703
  %v2735 = vunpack.c.l.b16 %v704
  %v2736 = vunpack.c.h.b16 %v704
  %v2737 = vunpack.c.l.b16 %v705
  %v2738 = vunpack.c.h.b16 %v705
  %v2739 = vunpack.c.l.b16 %v706
  %v2740 = vunpack.c.h.b16 %v706
  %v2741 = vunpack.c.l.b16 %v707
  %v2742 = vunpack.c.h.b16 %v707
  %v2743 = vunpack.c.l.b16 %v708
  %v2744 = vunpack.c.l.b16 %v709
  %v2745 = vunpack.c.h.b16 %v709
  %v2746 = vunpack.c.l.b16 %v710
  %v2747 = vunpack.c.h.b16 %v710
  %v2748 = vunpack.c.l.b16 %v711
  %v2749 = vunpack.c.h.b16 %v711
  %v2750 = vunpack.c.l.b16 %v712
  %v2751 = vunpack.c.h.b16 %v712
  %v2752 = vunpack.c.l.b16 %v713
  %v2753 = vunpack.c.h.b16 %v713
  %v2754 = vunpack.c.l.b16 %v714
  %v2755 = vunpack.c.h.b16 %v714
  %v2756 = vunpack.c.l.b16 %v715
  %v2757 = vunpack.c.l.b16 %v716
  %v2758 = vunpack.c.h.b16 %v716
  %v2759 = vunpack.c.l.b16 %v717
  %v2760 = vunpack.c.h.b16 %v717
  %v2761 = vunpack.c.l.b16 %v718
  %v2762 = vunpack.c.h.b16 %v718
  %v2763 = vunpack.c.l.b16 %v719
  %v2764 = vunpack.c.h.b16 %v719
  %v2765 = vunpack.c.l.b16 %v720
  %v2766 = vunpack.c.h.b16 %v720
  %v2767 = vunpack.c.l.b16 %v721
  %v2768 = vunpack.c.h.b16 %v721
  %v2769 = vunpack.c.l.b16 %v722
  %v2770 = vpack.c.b16 %v1483, %v1470
  %v2771 = vpack.c.b16 %v1484, %v1471
  %v2772 = vpack.c.b16 %v1485, %v1472
  %v2773 = vpack.c.b16 %v1486, %v1473
  %v2774 = vpack.c.b16 %v1487, %v1474
  %v2775 = vpack.c.b16 %v1488, %v1475
  %v2776 = vpack.c.b16 %v1489, %v1476
  %v2777 = vpack.c.b16 %v1490, %v1477
  %v2778 = vpack.c.b16 %v1491, %v1478
  %v2779 = vpack.c.b16 %v1492, %v1479
  %v2780 = vpack.c.b16 %v1493, %v1480
  %v2781 = vpack.c.b16 %v1494, %v1481
  %v2782 = vpack.c.b16 %v1495, %v1482
  %v2783 = vpack.c.b16 %v1509, %v1496
  %v2784 = vpack.c.b16 %v1510, %v1497
  %v2785 = vpack.c.b16 %v1511, %v1498
  %v2786 = vpack.c.b16 %v1512, %v1499
  %v2787 = vpack.c.b16 %v1513, %v1500
  %v2788 = vpack.c.b16 %v1514, %v1501
  %v2789 = vpack.c.b16 %v1515, %v1502
  %v2790 = vpack.c.b16 %v1516, %v1503
  %v2791 = vpack.c.b16 %v1517, %v1504
  %v2792 = vpack.c.b16 %v1518, %v1505
  %v2793 = vpack.c.b16 %v1519, %v1506
  %v2794 = vpack.c.b16 %v1520, %v1507
  %v2795 = vpack.c.b16 %v1521, %v1508
  %v2796 = vpack.c.b16 %v1535, %v1522
  %v2797 = vpack.c.b16 %v1536, %v1523
  %v2798 = vpack.c.b16 %v1537, %v1524
  %v2799 = vpack.c.b16 %v1538, %v1525
  %v2800 = vpack.c.b16 %v1539, %v1526
  %v2801 = vpack.c.b16 %v1540, %v1527
  %v2802 = vpack.c.b16 %v1541, %v1528
  %v2803 = vpack.c.b16 %v1542, %v1529
  %v2804 = vpack.c.b16 %v1543, %v1530
  %v2805 = vpack.c.b16 %v1544, %v1531
  %v2806 = vpack.c.b16 %v1545, %v1532
  %v2807 = vpack.c.b16 %v1546, %v1533
  %v2808 = vpack.c.b16 %v1547, %v1534
  %v2809 = vpack.c.b16 %v1561, %v1548
  %v2810 = vpack.c.b16 %v1562, %v1549
  %v2811 = vpack.c.b16 %v1563, %v1550
  %v2812 = vpack.c.b16 %v1564, %v1551
  %v2813 = vpack.c.b16 %v1565, %v1552
  %v2814 = vpack.c.b16 %v1566, %v1553
  %v2815 = vpack.c.b16 %v1567, %v1554
  %v2816 = vpack.c.b16 %v1568, %v1555
  %v2817 = vpack.c.b16 %v1569, %v1556
  %v2818 = vpack.c.b16 %v1570, %v1557
  %v2819 = vpack.c.b16 %v1571, %v1558
  %v2820 = vpack.c.b16 %v1572, %v1559
  %v2821 = vpack.c.b16 %v1573, %v1560
  %v2822 = vpack.c.b16 %v1587, %v1574
  %v2823 = vpack.c.b16 %v1588, %v1575
  %v2824 = vpack.c.b16 %v1589, %v1576
  %v2825 = vpack.c.b16 %v1590, %v1577
  %v2826 = vpack.c.b16 %v1591, %v1578
  %v2827 = vpack.c.b16 %v1592, %v1579
  %v2828 = vpack.c.b16 %v1593, %v1580
  %v2829 = vpack.c.b16 %v1594, %v1581
  %v2830 = vpack.c.b16 %v1595, %v1582
  %v2831 = vpack.c.b16 %v1596, %v1583
  %v2832 = vpack.c.b16 %v1597, %v1584
  %v2833 = vpack.c.b16 %v1598, %v1585
  %v2834 = vpack.c.b16 %v1599, %v1586
  %v2835 = vpack.c.b16 %v1613, %v1600
  %v2836 = vpack.c.b16 %v1614, %v1601
  %v2837 = vpack.c.b16 %v1615, %v1602
  %v2838 = vpack.c.b16 %v1616, %v1603
  %v2839 = vpack.c.b16 %v1617, %v1604
  %v2840 = vpack.c.b16 %v1618, %v1605
  %v2841 = vpack.c.b16 %v1619, %v1606
  %v2842 = vpack.c.b16 %v1620, %v1607
  %v2843 = vpack.c.b16 %v1621, %v1608
  %v2844 = vpack.c.b16 %v1622, %v1609
  %v2845 = vpack.c.b16 %v1623, %v1610
  %v2846 = vpack.c.b16 %v1624, %v1611
  %v2847 = vpack.c.b16 %v1625, %v1612
  %v2848 = vpack.c.b16 %v1639, %v1626
  %v2849 = vpack.c.b16 %v1640, %v1627
  %v2850 = vpack.c.b16 %v1641, %v1628
  %v2851 = vpack.c.b16 %v1642, %v1629
  %v2852 = vpack.c.b16 %v1643, %v1630
  %v2853 = vpack.c.b16 %v1644, %v1631
  %v2854 = vpack.c.b16 %v1645, %v1632
  %v2855 = vpack.c.b16 %v1646, %v1633
  %v2856 = vpack.c.b16 %v1647, %v1634
  %v2857 = vpack.c.b16 %v1648, %v1635
  %v2858 = vpack.c.b16 %v1649, %v1636
  %v2859 = vpack.c.b16 %v1650, %v1637
  %v2860 = vpack.c.b16 %v1651, %v1638
  %v2861 = vpack.c.b16 %v1665, %v1652
  %v2862 = vpack.c.b16 %v1666, %v1653
  %v2863 = vpack.c.b16 %v1667, %v1654
  %v2864 = vpack.c.b16 %v1668, %v1655
  %v2865 = vpack.c.b16 %v1669, %v1656
  %v2866 = vpack.c.b16 %v1670, %v1657
  %v2867 = vpack.c.b16 %v1671, %v1658
  %v2868 = vpack.c.b16 %v1672, %v1659
  %v2869 = vpack.c.b16 %v1673, %v1660
  %v2870 = vpack.c.b16 %v1674, %v1661
  %v2871 = vpack.c.b16 %v1675, %v1662
  %v2872 = vpack.c.b16 %v1676, %v1663
  %v2873 = vpack.c.b16 %v1677, %v1664
  %v2874 = vpack.c.b16 %v1691, %v1678
  %v2875 = vpack.c.b16 %v1692, %v1679
  %v2876 = vpack.c.b16 %v1693, %v1680
  %v2877 = vpack.c.b16 %v1694, %v1681
  %v2878 = vpack.c.b16 %v1695, %v1682
  %v2879 = vpack.c.b16 %v1696, %v1683
  %v2880 = vpack.c.b16 %v1697, %v1684
  %v2881 = vpack.c.b16 %v1698, %v1685
  %v2882 = vpack.c.b16 %v1699, %v1686
  %v2883 = vpack.c.b16 %v1700, %v1687
  %v2884 = vpack.c.b16 %v1701, %v1688
  %v2885 = vpack.c.b16 %v1702, %v1689
  %v2886 = vpack.c.b16 %v1703, %v1690
  %v2887 = vpack.c.b16 %v1717, %v1704
  %v2888 = vpack.c.b16 %v1718, %v1705
  %v2889 = vpack.c.b16 %v1719, %v1706
  %v2890 = vpack.c.b16 %v1720, %v1707
  %v2891 = vpack.c.b16 %v1721, %v1708
  %v2892 = vpack.c.b16 %v1722, %v1709
  %v2893 = vpack.c.b16 %v1723, %v1710
  %v2894 = vpack.c.b16 %v1724, %v1711
  %v2895 = vpack.c.b16 %v1725, %v1712
  %v2896 = vpack.c.b16 %v1726, %v1713
  %v2897 = vpack.c.b16 %v1727, %v1714
  %v2898 = vpack.c.b16 %v1728, %v1715
  %v2899 = vpack.c.b16 %v1729, %v1716
  %v2900 = vpack.c.b16 %v1743, %v1730
  %v2901 = vpack.c.b16 %v1744, %v1731
  %v2902 = vpack.c.b16 %v1745, %v1732
  %v2903 = vpack.c.b16 %v1746, %v1733
  %v2904 = vpack.c.b16 %v1747, %v1734
  %v2905 = vpack.c.b16 %v1748, %v1735
  %v2906 = vpack.c.b16 %v1749, %v1736
  %v2907 = vpack.c.b16 %v1750, %v1737
  %v2908 = vpack.c.b16 %v1751, %v1738
  %v2909 = vpack.c.b16 %v1752, %v1739
  %v2910 = vpack.c.b16 %v1753, %v1740
  %v2911 = vpack.c.b16 %v1754, %v1741
  %v2912 = vpack.c.b16 %v1755, %v1742
  %v2913 = vpack.c.b16 %v1769, %v1756
  %v2914 = vpack.c.b16 %v1770, %v1757
  %v2915 = vpack.c.b16 %v1771, %v1758
  %v2916 = vpack.c.b16 %v1772, %v1759
  %v2917 = vpack.c.b16 %v1773, %v1760
  %v2918 = vpack.c.b16 %v1774, %v1761
  %v2919 = vpack.c.b16 %v1775, %v1762
  %v2920 = vpack.c.b16 %v1776, %v1763
  %v2921 = vpack.c.b16 %v1777, %v1764
  %v2922 = vpack.c.b16 %v1778, %v1765
  %v2923 = vpack.c.b16 %v1779, %v1766
  %v2924 = vpack.c.b16 %v1780, %v1767
  %v2925 = vpack.c.b16 %v1781, %v1768
  %v2926 = vpack.c.b16 %v1795, %v1782
  %v2927 = vpack.c.b16 %v1796, %v1783
  %v2928 = vpack.c.b16 %v1797, %v1784
  %v2929 = vpack.c.b16 %v1798, %v1785
  %v2930 = vpack.c.b16 %v1799, %v1786
  %v2931 = vpack.c.b16 %v1800, %v1787
  %v2932 = vpack.c.b16 %v1801, %v1788
  %v2933 = vpack.c.b16 %v1802, %v1789
  %v2934 = vpack.c.b16 %v1803, %v1790
  %v2935 = vpack.c.b16 %v1804, %v1791
  %v2936 = vpack.c.b16 %v1805, %v1792
  %v2937 = vpack.c.b16 %v1806, %v1793
  %v2938 = vpack.c.b16 %v1807, %v1794
  %v2939 = vpack.c.b16 %v1821, %v1808
  %v2940 = vpack.c.b16 %v1822, %v1809
  %v2941 = vpack.c.b16 %v1823, %v1810
  %v2942 = vpack.c.b16 %v1824, %v1811
  %v2943 = vpack.c.b16 %v1825, %v1812
  %v2944 = vpack.c.b16 %v1826, %v1813
  %v2945 = vpack.c.b16 %v1827, %v1814
  %v2946 = vpack.c.b16 %v1828, %v1815
  %v2947 = vpack.c.b16 %v1829, %v1816
  %v2948 = vpack.c.b16 %v1830, %v1817
  %v2949 = vpack.c.b16 %v1831, %v1818
  %v2950 = vpack.c.b16 %v1832, %v1819
  %v2951 = vpack.c.b16 %v1833, %v1820
  %v2952 = vpack.c.b16 %v1847, %v1834
  %v2953 = vpack.c.b16 %v1848, %v1835
  %v2954 = vpack.c.b16 %v1849, %v1836
  %v2955 = vpack.c.b16 %v1850, %v1837
  %v2956 = vpack.c.b16 %v1851, %v1838
  %v2957 = vpack.c.b16 %v1852, %v1839
  %v2958 = vpack.c.b16 %v1853, %v1840
  %v2959 = vpack.c.b16 %v1854, %v1841
  %v2960 = vpack.c.b16 %v1855, %v1842
  %v2961 = vpack.c.b16 %v1856, %v1843
  %v2962 = vpack.c.b16 %v1857, %v1844
  %v2963 = vpack.c.b16 %v1858, %v1845
  %v2964 = vpack.c.b16 %v1859, %v1846
  %v2965 = vpack.c.b16 %v1873, %v1860
  %v2966 = vpack.c.b16 %v1874, %v1861
  %v2967 = vpack.c.b16 %v1875, %v1862
  %v2968 = vpack.c.b16 %v1876, %v1863
  %v2969 = vpack.c.b16 %v1877, %v1864
  %v2970 = vpack.c.b16 %v1878, %v1865
  %v2971 = vpack.c.b16 %v1879, %v1866
  %v2972 = vpack.c.b16 %v1880, %v1867
  %v2973 = vpack.c.b16 %v1881, %v1868
  %v2974 = vpack.c.b16 %v1882, %v1869
  %v2975 = vpack.c.b16 %v1883, %v1870
  %v2976 = vpack.c.b16 %v1884, %v1871
  %v2977 = vpack.c.b16 %v1885, %v1872
  %v2978 = vpack.c.b16 %v1899, %v1886
  %v2979 = vpack.c.b16 %v1900, %v1887
  %v2980 = vpack.c.b16 %v1901, %v1888
  %v2981 = vpack.c.b16 %v1902, %v1889
  %v2982 = vpack.c.b16 %v1903, %v1890
  %v2983 = vpack.c.b16 %v1904, %v1891
  %v2984 = vpack.c.b16 %v1905, %v1892
  %v2985 = vpack.c.b16 %v1906, %v1893
  %v2986 = vpack.c.b16 %v1907, %v1894
  %v2987 = vpack.c.b16 %v1908, %v1895
  %v2988 = vpack.c.b16 %v1909, %v1896
  %v2989 = vpack.c.b16 %v1910, %v1897
  %v2990 = vpack.c.b16 %v1911, %v1898
  %v2991 = vpack.c.b16 %v1925, %v1912
  %v2992 = vpack.c.b16 %v1926, %v1913
  %v2993 = vpack.c.b16 %v1927, %v1914
  %v2994 = vpack.c.b16 %v1928, %v1915
  %v2995 = vpack.c.b16 %v1929, %v1916
  %v2996 = vpack.c.b16 %v1930, %v1917
  %v2997 = vpack.c.b16 %v1931, %v1918
  %v2998 = vpack.c.b16 %v1932, %v1919
  %v2999 = vpack.c.b16 %v1933, %v1920
  %v3000 = vpack.c.b16 %v1934, %v1921
  %v3001 = vpack.c.b16 %v1935, %v1922
  %v3002 = vpack.c.b16 %v1936, %v1923
  %v3003 = vpack.c.b16 %v1937, %v1924
  %v3004 = vpack.c.b16 %v1951, %v1938
  %v3005 = vpack.c.b16 %v1952, %v1939
  %v3006 = vpack.c.b16 %v1953, %v1940
  %v3007 = vpack.c.b16 %v1954, %v1941
  %v3008 = vpack.c.b16 %v1955, %v1942
  %v3009 = vpack.c.b16 %v1956, %v1943
  %v3010 = vpack.c.b16 %v1957, %v1944
  %v3011 = vpack.c.b16 %v1958, %v1945
  %v3012 = vpack.c.b16 %v1959, %v1946
  %v3013 = vpack.c.b16 %v1960, %v1947
  %v3014 = vpack.c.b16 %v1961, %v1948
  %v3015 = vpack.c.b16 %v1962, %v1949
  %v3016 = vpack.c.b16 %v1963, %v1950
  %v3017 = vpack.c.b16 %v1977, %v1964
  %v3018 = vpack.c.b16 %v1978, %v1965
  %v3019 = vpack.c.b16 %v1979, %v1966
  %v3020 = vpack.c.b16 %v1980, %v1967
  %v3021 = vpack.c.b16 %v1981, %v1968
  %v3022 = vpack.c.b16 %v1982, %v1969
  %v3023 = vpack.c.b16 %v1983, %v1970
  %v3024 = vpack.c.b16 %v1984, %v1971
  %v3025 = vpack.c.b16 %v1985, %v1972
  %v3026 = vpack.c.b16 %v1986, %v1973
  %v3027 = vpack.c.b16 %v1987, %v1974
  %v3028 = vpack.c.b16 %v1988, %v1975
  %v3029 = vpack.c.b16 %v1989, %v1976
  %v3030 = vpack.c.b16 %v2003, %v1990
  %v3031 = vpack.c.b16 %v2004, %v1991
  %v3032 = vpack.c.b16 %v2005, %v1992
  %v3033 = vpack.c.b16 %v2006, %v1993
  %v3034 = vpack.c.b16 %v2007, %v1994
  %v3035 = vpack.c.b16 %v2008, %v1995
  %v3036 = vpack.c.b16 %v2009, %v1996
  %v3037 = vpack.c.b16 %v2010, %v1997
  %v3038 = vpack.c.b16 %v2011, %v1998
  %v3039 = vpack.c.b16 %v2012, %v1999
  %v3040 = vpack.c.b16 %v2013, %v2000
  %v3041 = vpack.c.b16 %v2014, %v2001
  %v3042 = vpack.c.b16 %v2015, %v2002
  %v3043 = vpack.c.b16 %v2029, %v2016
  %v3044 = vpack.c.b16 %v2030, %v2017
  %v3045 = vpack.c.b16 %v2031, %v2018
  %v3046 = vpack.c.b16 %v2032, %v2019
  %v3047 = vpack.c.b16 %v2033, %v2020
  %v3048 = vpack.c.b16 %v2034, %v2021
  %v3049 = vpack.c.b16 %v2035, %v2022
  %v3050 = vpack.c.b16 %v2036, %v2023
  %v3051 = vpack.c.b16 %v2037, %v2024
  %v3052 = vpack.c.b16 %v2038, %v2025
  %v3053 = vpack.c.b16 %v2039, %v2026
  %v3054 = vpack.c.b16 %v2040, %v2027
  %v3055 = vpack.c.b16 %v2041, %v2028
  %v3056 = vpack.c.b16 %v2055, %v2042
  %v3057 = vpack.c.b16 %v2056, %v2043
  %v3058 = vpack.c.b16 %v2057, %v2044
  %v3059 = vpack.c.b16 %v2058, %v2045
  %v3060 = vpack.c.b16 %v2059, %v2046
  %v3061 = vpack.c.b16 %v2060, %v2047
  %v3062 = vpack.c.b16 %v2061, %v2048
  %v3063 = vpack.c.b16 %v2062, %v2049
  %v3064 = vpack.c.b16 %v2063, %v2050
  %v3065 = vpack.c.b16 %v2064, %v2051
  %v3066 = vpack.c.b16 %v2065, %v2052
  %v3067 = vpack.c.b16 %v2066, %v2053
  %v3068 = vpack.c.b16 %v2067, %v2054
  %v3069 = vpack.c.b16 %v2081, %v2068
  %v3070 = vpack.c.b16 %v2082, %v2069
  %v3071 = vpack.c.b16 %v2083, %v2070
  %v3072 = vpack.c.b16 %v2084, %v2071
  %v3073 = vpack.c.b16 %v2085, %v2072
  %v3074 = vpack.c.b16 %v2086, %v2073
  %v3075 = vpack.c.b16 %v2087, %v2074
  %v3076 = vpack.c.b16 %v2088, %v2075
  %v3077 = vpack.c.b16 %v2089, %v2076
  %v3078 = vpack.c.b16 %v2090, %v2077
  %v3079 = vpack.c.b16 %v2091, %v2078
  %v3080 = vpack.c.b16 %v2092, %v2079
  %v3081 = vpack.c.b16 %v2093, %v2080
  %v3082 = vpack.c.b16 %v2107, %v2094
  %v3083 = vpack.c.b16 %v2108, %v2095
  %v3084 = vpack.c.b16 %v2109, %v2096
  %v3085 = vpack.c.b16 %v2110, %v2097
  %v3086 = vpack.c.b16 %v2111, %v2098
  %v3087 = vpack.c.b16 %v2112, %v2099
  %v3088 = vpack.c.b16 %v2113, %v2100
  %v3089 = vpack.c.b16 %v2114, %v2101
  %v3090 = vpack.c.b16 %v2115, %v2102
  %v3091 = vpack.c.b16 %v2116, %v2103
  %v3092 = vpack.c.b16 %v2117, %v2104
  %v3093 = vpack.c.b16 %v2118, %v2105
  %v3094 = vpack.c.b16 %v2119, %v2106
  %v3095 = vpack.c.b16 %v2133, %v2120
  %v3096 = vpack.c.b16 %v2134, %v2121
  %v3097 = vpack.c.b16 %v2135, %v2122
  %v3098 = vpack.c.b16 %v2136, %v2123
  %v3099 = vpack.c.b16 %v2137, %v2124
  %v3100 = vpack.c.b16 %v2138, %v2125
  %v3101 = vpack.c.b16 %v2139, %v2126
  %v3102 = vpack.c.b16 %v2140, %v2127
  %v3103 = vpack.c.b16 %v2141, %v2128
  %v3104 = vpack.c.b16 %v2142, %v2129
  %v3105 = vpack.c.b16 %v2143, %v2130
  %v3106 = vpack.c.b16 %v2144, %v2131
  %v3107 = vpack.c.b16 %v2145, %v2132
  %v3108 = vpack.c.b16 %v2159, %v2146
  %v3109 = vpack.c.b16 %v2160, %v2147
  %v3110 = vpack.c.b16 %v2161, %v2148
  %v3111 = vpack.c.b16 %v2162, %v2149
  %v3112 = vpack.c.b16 %v2163, %v2150
  %v3113 = vpack.c.b16 %v2164, %v2151
  %v3114 = vpack.c.b16 %v2165, %v2152
  %v3115 = vpack.c.b16 %v2166, %v2153
  %v3116 = vpack.c.b16 %v2167, %v2154
  %v3117 = vpack.c.b16 %v2168, %v2155
  %v3118 = vpack.c.b16 %v2169, %v2156
  %v3119 = vpack.c.b16 %v2170, %v2157
  %v3120 = vpack.c.b16 %v2171, %v2158
  %v3121 = vpack.c.b16 %v2185, %v2172
  %v3122 = vpack.c.b16 %v2186, %v2173
  %v3123 = vpack.c.b16 %v2187, %v2174
  %v3124 = vpack.c.b16 %v2188, %v2175
  %v3125 = vpack.c.b16 %v2189, %v2176
  %v3126 = vpack.c.b16 %v2190, %v2177
  %v3127 = vpack.c.b16 %v2191, %v2178
  %v3128 = vpack.c.b16 %v2192, %v2179
  %v3129 = vpack.c.b16 %v2193, %v2180
  %v3130 = vpack.c.b16 %v2194, %v2181
  %v3131 = vpack.c.b16 %v2195, %v2182
  %v3132 = vpack.c.b16 %v2196, %v2183
  %v3133 = vpack.c.b16 %v2197, %v2184
  %v3134 = vpack.c.b16 %v2211, %v2198
  %v3135 = vpack.c.b16 %v2212, %v2199
  %v3136 = vpack.c.b16 %v2213, %v2200
  %v3137 = vpack.c.b16 %v2214, %v2201
  %v3138 = vpack.c.b16 %v2215, %v2202
  %v3139 = vpack.c.b16 %v2216, %v2203
  %v3140 = vpack.c.b16 %v2217, %v2204
  %v3141 = vpack.c.b16 %v2218, %v2205
  %v3142 = vpack.c.b16 %v2219, %v2206
  %v3143 = vpack.c.b16 %v2220, %v2207
  %v3144 = vpack.c.b16 %v2221, %v2208
  %v3145 = vpack.c.b16 %v2222, %v2209
  %v3146 = vpack.c.b16 %v2223, %v2210
  %v3147 = vpack.c.b16 %v2237, %v2224
  %v3148 = vpack.c.b16 %v2238, %v2225
  %v3149 = vpack.c.b16 %v2239, %v2226
  %v3150 = vpack.c.b16 %v2240, %v2227
  %v3151 = vpack.c.b16 %v2241, %v2228
  %v3152 = vpack.c.b16 %v2242, %v2229
  %v3153 = vpack.c.b16 %v2243, %v2230
  %v3154 = vpack.c.b16 %v2244, %v2231
  %v3155 = vpack.c.b16 %v2245, %v2232
  %v3156 = vpack.c.b16 %v2246, %v2233
  %v3157 = vpack.c.b16 %v2247, %v2234
  %v3158 = vpack.c.b16 %v2248, %v2235
  %v3159 = vpack.c.b16 %v2249, %v2236
  %v3160 = vpack.c.b16 %v2263, %v2250
  %v3161 = vpack.c.b16 %v2264, %v2251
  %v3162 = vpack.c.b16 %v2265, %v2252
  %v3163 = vpack.c.b16 %v2266, %v2253
  %v3164 = vpack.c.b16 %v2267, %v2254
  %v3165 = vpack.c.b16 %v2268, %v2255
  %v3166 = vpack.c.b16 %v2269, %v2256
  %v3167 = vpack.c.b16 %v2270, %v2257
  %v3168 = vpack.c.b16 %v2271, %v2258
  %v3169 = vpack.c.b16 %v2272, %v2259
  %v3170 = vpack.c.b16 %v2273, %v2260
  %v3171 = vpack.c.b16 %v2274, %v2261
  %v3172 = vpack.c.b16 %v2275, %v2262
  %v3173 = vpack.c.b16 %v2289, %v2276
  %v3174 = vpack.c.b16 %v2290, %v2277
  %v3175 = vpack.c.b16 %v2291, %v2278
  %v3176 = vpack.c.b16 %v2292, %v2279
  %v3177 = vpack.c.b16 %v2293, %v2280
  %v3178 = vpack.c.b16 %v2294, %v2281
  %v3179 = vpack.c.b16 %v2295, %v2282
  %v3180 = vpack.c.b16 %v2296, %v2283
  %v3181 = vpack.c.b16 %v2297, %v2284
  %v3182 = vpack.c.b16 %v2298, %v2285
  %v3183 = vpack.c.b16 %v2299, %v2286
  %v3184 = vpack.c.b16 %v2300, %v2287
  %v3185 = vpack.c.b16 %v2301, %v2288
  %v3186 = vpack.c.b16 %v2315, %v2302
  %v3187 = vpack.c.b16 %v2316, %v2303
  %v3188 = vpack.c.b16 %v2317, %v2304
  %v3189 = vpack.c.b16 %v2318, %v2305
  %v3190 = vpack.c.b16 %v2319, %v2306
  %v3191 = vpack.c.b16 %v2320, %v2307
  %v3192 = vpack.c.b16 %v2321, %v2308
  %v3193 = vpack.c.b16 %v2322, %v2309
  %v3194 = vpack.c.b16 %v2323, %v2310
  %v3195 = vpack.c.b16 %v2324, %v2311
  %v3196 = vpack.c.b16 %v2325, %v2312
  %v3197 = vpack.c.b16 %v2326, %v2313
  %v3198 = vpack.c.b16 %v2327, %v2314
  %v3199 = vpack.c.b16 %v2341, %v2328
  %v3200 = vpack.c.b16 %v2342, %v2329
  %v3201 = vpack.c.b16 %v2343, %v2330
  %v3202 = vpack.c.b16 %v2344, %v2331
  %v3203 = vpack.c.b16 %v2345, %v2332
  %v3204 = vpack.c.b16 %v2346, %v2333
  %v3205 = vpack.c.b16 %v2347, %v2334
  %v3206 = vpack.c.b16 %v2348, %v2335
  %v3207 = vpack.c.b16 %v2349, %v2336
  %v3208 = vpack.c.b16 %v2350, %v2337
  %v3209 = vpack.c.b16 %v2351, %v2338
  %v3210 = vpack.c.b16 %v2352, %v2339
  %v3211 = vpack.c.b16 %v2353, %v2340
  %v3212 = vpack.c.b16 %v2367, %v2354
  %v3213 = vpack.c.b16 %v2368, %v2355
  %v3214 = vpack.c.b16 %v2369, %v2356
  %v3215 = vpack.c.b16 %v2370, %v2357
  %v3216 = vpack.c.b16 %v2371, %v2358
  %v3217 = vpack.c.b16 %v2372, %v2359
  %v3218 = vpack.c.b16 %v2373, %v2360
  %v3219 = vpack.c.b16 %v2374, %v2361
  %v3220 = vpack.c.b16 %v2375, %v2362
  %v3221 = vpack.c.b16 %v2376, %v2363
  %v3222 = vpack.c.b16 %v2377, %v2364
  %v3223 = vpack.c.b16 %v2378, %v2365
  %v3224 = vpack.c.b16 %v2379, %v2366
  %v3225 = vpack.c.b16 %v2393, %v2380
  %v3226 = vpack.c.b16 %v2394, %v2381
  %v3227 = vpack.c.b16 %v2395, %v2382
  %v3228 = vpack.c.b16 %v2396, %v2383
  %v3229 = vpack.c.b16 %v2397, %v2384
  %v3230 = vpack.c.b16 %v2398, %v2385
  %v3231 = vpack.c.b16 %v2399, %v2386
  %v3232 = vpack.c.b16 %v2400, %v2387
  %v3233 = vpack.c.b16 %v2401, %v2388
  %v3234 = vpack.c.b16 %v2402, %v2389
  %v3235 = vpack.c.b16 %v2403, %v2390
  %v3236 = vpack.c.b16 %v2404, %v2391
  %v3237 = vpack.c.b16 %v2405, %v2392
  %v3238 = vpack.c.b16 %v2419, %v2406
  %v3239 = vpack.c.b16 %v2420, %v2407
  %v3240 = vpack.c.b16 %v2421, %v2408
  %v3241 = vpack.c.b16 %v2422, %v2409
  %v3242 = vpack.c.b16 %v2423, %v2410
  %v3243 = vpack.c.b16 %v2424, %v2411
  %v3244 = vpack.c.b16 %v2425, %v2412
  %v3245 = vpack.c.b16 %v2426, %v2413
  %v3246 = vpack.c.b16 %v2427, %v2414
  %v3247 = vpack.c.b16 %v2428, %v2415
  %v3248 = vpack.c.b16 %v2429, %v2416
  %v3249 = vpack.c.b16 %v2430, %v2417
  %v3250 = vpack.c.b16 %v2431, %v2418
  %v3251 = vpack.c.b16 %v2445, %v2432
  %v3252 = vpack.c.b16 %v2446, %v2433
  %v3253 = vpack.c.b16 %v2447, %v2434
  %v3254 = vpack.c.b16 %v2448, %v2435
  %v3255 = vpack.c.b16 %v2449, %v2436
  %v3256 = vpack.c.b16 %v2450, %v2437
  %v3257 = vpack.c.b16 %v2451, %v2438
  %v3258 = vpack.c.b16 %v2452, %v2439
  %v3259 = vpack.c.b16 %v2453, %v2440
  %v3260 = vpack.c.b16 %v2454, %v2441
  %v3261 = vpack.c.b16 %v2455, %v2442
  %v3262 = vpack.c.b16 %v2456, %v2443
  %v3263 = vpack.c.b16 %v2457, %v2444
  %v3264 = vpack.c.b16 %v2471, %v2458
  %v3265 = vpack.c.b16 %v2472, %v2459
  %v3266 = vpack.c.b16 %v2473, %v2460
  %v3267 = vpack.c.b16 %v2474, %v2461
  %v3268 = vpack.c.b16 %v2475, %v2462
  %v3269 = vpack.c.b16 %v2476, %v2463
  %v3270 = vpack.c.b16 %v2477, %v2464
  %v3271 = vpack.c.b16 %v2478, %v2465
  %v3272 = vpack.c.b16 %v2479, %v2466
  %v3273 = vpack.c.b16 %v2480, %v2467
  %v3274 = vpack.c.b16 %v2481, %v2468
  %v3275 = vpack.c.b16 %v2482, %v2469
  %v3276 = vpack.c.b16 %v2483, %v2470
  %v3277 = vpack.c.b16 %v2497, %v2484
  %v3278 = vpack.c.b16 %v2498, %v2485
  %v3279 = vpack.c.b16 %v2499, %v2486
  %v3280 = vpack.c.b16 %v2500, %v2487
  %v3281 = vpack.c.b16 %v2501, %v2488
  %v3282 = vpack.c.b16 %v2502, %v2489
  %v3283 = vpack.c.b16 %v2503, %v2490
  %v3284 = vpack.c.b16 %v2504, %v2491
  %v3285 = vpack.c.b16 %v2505, %v2492
  %v3286 = vpack.c.b16 %v2506, %v2493
  %v3287 = vpack.c.b16 %v2507, %v2494
  %v3288 = vpack.c.b16 %v2508, %v2495
  %v3289 = vpack.c.b16 %v2509, %v2496
  %v3290 = vpack.c.b16 %v2523, %v2510
  %v3291 = vpack.c.b16 %v2524, %v2511
  %v3292 = vpack.c.b16 %v2525, %v2512
  %v3293 = vpack.c.b16 %v2526, %v2513
  %v3294 = vpack.c.b16 %v2527, %v2514
  %v3295 = vpack.c.b16 %v2528, %v2515
  %v3296 = vpack.c.b16 %v2529, %v2516
  %v3297 = vpack.c.b16 %v2530, %v2517
  %v3298 = vpack.c.b16 %v2531, %v2518
  %v3299 = vpack.c.b16 %v2532, %v2519
  %v3300 = vpack.c.b16 %v2533, %v2520
  %v3301 = vpack.c.b16 %v2534, %v2521
  %v3302 = vpack.c.b16 %v2535, %v2522
  %v3303 = vpack.c.b16 %v2549, %v2536
  %v3304 = vpack.c.b16 %v2550, %v2537
  %v3305 = vpack.c.b16 %v2551, %v2538
  %v3306 = vpack.c.b16 %v2552, %v2539
  %v3307 = vpack.c.b16 %v2553, %v2540
  %v3308 = vpack.c.b16 %v2554, %v2541
  %v3309 = vpack.c.b16 %v2555, %v2542
  %v3310 = vpack.c.b16 %v2556, %v2543
  %v3311 = vpack.c.b16 %v2557, %v2544
  %v3312 = vpack.c.b16 %v2558, %v2545
  %v3313 = vpack.c.b16 %v2559, %v2546
  %v3314 = vpack.c.b16 %v2560, %v2547
  %v3315 = vpack.c.b16 %v2561, %v2548
  %v3316 = vpack.c.b16 %v2575, %v2562
  %v3317 = vpack.c.b16 %v2576, %v2563
  %v3318 = vpack.c.b16 %v2577, %v2564
  %v3319 = vpack.c.b16 %v2578, %v2565
  %v3320 = vpack.c.b16 %v2579, %v2566
  %v3321 = vpack.c.b16 %v2580, %v2567
  %v3322 = vpack.c.b16 %v2581, %v2568
  %v3323 = vpack.c.b16 %v2582, %v2569
  %v3324 = vpack.c.b16 %v2583, %v2570
  %v3325 = vpack.c.b16 %v2584, %v2571
  %v3326 = vpack.c.b16 %v2585, %v2572
  %v3327 = vpack.c.b16 %v2586, %v2573
  %v3328 = vpack.c.b16 %v2587, %v2574
  %v3329 = vpack.c.b16 %v2601, %v2588
  %v3330 = vpack.c.b16 %v2602, %v2589
  %v3331 = vpack.c.b16 %v2603, %v2590
  %v3332 = vpack.c.b16 %v2604, %v2591
  %v3333 = vpack.c.b16 %v2605, %v2592
  %v3334 = vpack.c.b16 %v2606, %v2593
  %v3335 = vpack.c.b16 %v2607, %v2594
  %v3336 = vpack.c.b16 %v2608, %v2595
  %v3337 = vpack.c.b16 %v2609, %v2596
  %v3338 = vpack.c.b16 %v2610, %v2597
  %v3339 = vpack.c.b16 %v2611, %v2598
  %v3340 = vpack.c.b16 %v2612, %v2599
  %v3341 = vpack.c.b16 %v2613, %v2600
  %v3342 = vpack.c.b16 %v2627, %v2614
  %v3343 = vpack.c.b16 %v2628, %v2615
  %v3344 = vpack.c.b16 %v2629, %v2616
  %v3345 = vpack.c.b16 %v2630, %v2617
  %v3346 = vpack.c.b16 %v2631, %v2618
  %v3347 = vpack.c.b16 %v2632, %v2619
  %v3348 = vpack.c.b16 %v2633, %v2620
  %v3349 = vpack.c.b16 %v2634, %v2621
  %v3350 = vpack.c.b16 %v2635, %v2622
  %v3351 = vpack.c.b16 %v2636, %v2623
  %v3352 = vpack.c.b16 %v2637, %v2624
  %v3353 = vpack.c.b16 %v2638, %v2625
  %v3354 = vpack.c.b16 %v2639, %v2626
  %v3355 = vpack.c.b16 %v2653, %v2640
  %v3356 = vpack.c.b16 %v2654, %v2641
  %v3357 = vpack.c.b16 %v2655, %v2642
  %v3358 = vpack.c.b16 %v2656, %v2643
  %v3359 = vpack.c.b16 %v2657, %v2644
  %v3360 = vpack.c.b16 %v2658, %v2645
  %v3361 = vpack.c.b16 %v2659, %v2646
  %v3362 = vpack.c.b16 %v2660, %v2647
  %v3363 = vpack.c.b16 %v2661, %v2648
  %v3364 = vpack.c.b16 %v2662, %v2649
  %v3365 = vpack.c.b16 %v2663, %v2650
  %v3366 = vpack.c.b16 %v2664, %v2651
  %v3367 = vpack.c.b16 %v2665, %v2652
  %v3368 = vpack.c.b16 %v2679, %v2666
  %v3369 = vpack.c.b16 %v2680, %v2667
  %v3370 = vpack.c.b16 %v2681, %v2668
  %v3371 = vpack.c.b16 %v2682, %v2669
  %v3372 = vpack.c.b16 %v2683, %v2670
  %v3373 = vpack.c.b16 %v2684, %v2671
  %v3374 = vpack.c.b16 %v2685, %v2672
  %v3375 = vpack.c.b16 %v2686, %v2673
  %v3376 = vpack.c.b16 %v2687, %v2674
  %v3377 = vpack.c.b16 %v2688, %v2675
  %v3378 = vpack.c.b16 %v2689, %v2676
  %v3379 = vpack.c.b16 %v2690, %v2677
  %v3380 = vpack.c.b16 %v2691, %v2678
  %v3381 = vpack.c.b16 %v2705, %v2692
  %v3382 = vpack.c.b16 %v2706, %v2693
  %v3383 = vpack.c.b16 %v2707, %v2694
  %v3384 = vpack.c.b16 %v2708, %v2695
  %v3385 = vpack.c.b16 %v2709, %v2696
  %v3386 = vpack.c.b16 %v2710, %v2697
  %v3387 = vpack.c.b16 %v2711, %v2698
  %v3388 = vpack.c.b16 %v2712, %v2699
  %v3389 = vpack.c.b16 %v2713, %v2700
  %v3390 = vpack.c.b16 %v2714, %v2701
  %v3391 = vpack.c.b16 %v2715, %v2702
  %v3392 = vpack.c.b16 %v2716, %v2703
  %v3393 = vpack.c.b16 %v2717, %v2704
  %v3394 = vpack.c.b16 %v2731, %v2718
  %v3395 = vpack.c.b16 %v2732, %v2719
  %v3396 = vpack.c.b16 %v2733, %v2720
  %v3397 = vpack.c.b16 %v2734, %v2721
  %v3398 = vpack.c.b16 %v2735, %v2722
  %v3399 = vpack.c.b16 %v2736, %v2723
  %v3400 = vpack.c.b16 %v2737, %v2724
  %v3401 = vpack.c.b16 %v2738, %v2725
  %v3402 = vpack.c.b16 %v2739, %v2726
  %v3403 = vpack.c.b16 %v2740, %v2727
  %v3404 = vpack.c.b16 %v2741, %v2728
  %v3405 = vpack.c.b16 %v2742, %v2729
  %v3406 = vpack.c.b16 %v2743, %v2730
  %v3407 = vpack.c.b16 %v2757, %v2744
  %v3408 = vpack.c.b16 %v2758, %v2745
  %v3409 = vpack.c.b16 %v2759, %v2746
  %v3410 = vpack.c.b16 %v2760, %v2747
  %v3411 = vpack.c.b16 %v2761, %v2748
  %v3412 = vpack.c.b16 %v2762, %v2749
  %v3413 = vpack.c.b16 %v2763, %v2750
  %v3414 = vpack.c.b16 %v2764, %v2751
  %v3415 = vpack.c.b16 %v2765, %v2752
  %v3416 = vpack.c.b16 %v2766, %v2753
  %v3417 = vpack.c.b16 %v2767, %v2754
  %v3418 = vpack.c.b16 %v2768, %v2755
  %v3419 = vpack.c.b16 %v2769, %v2756
  %vm4070 = vcmask 261120
  %v4072 = vsel %vm4070, %v763, 0
  %4074 = vmatprep.subr.bf16.mxu0 %v2771
  %4075 = vmatpush1.bf16.msra.mxu0 %v2770
  %4076 = vmatprep.subr.bf16.mxu0 %v2784
  %4077 = vmatpush1.bf16.msra.mxu0 %v2783
  %4078 = vmatprep.subr.bf16.mxu0 %v2797
  %4079 = vmatpush1.bf16.msra.mxu0 %v2796
  %4080 = vmatprep.subr.bf16.mxu0 %v2810
  %4081 = vmatpush1.bf16.msra.mxu0 %v2809
  %4082 = vmatprep.subr.bf16.mxu0 %v2823
  %4083 = vmatpush1.bf16.msra.mxu0 %v2822
  %4084 = vmatprep.subr.bf16.mxu0 %v2836
  %4085 = vmatpush1.bf16.msra.mxu0 %v2835
  %4086 = vmatprep.subr.bf16.mxu0 %v2849
  %4087 = vmatpush1.bf16.msra.mxu0 %v2848
  %4088 = vmatprep.subr.bf16.mxu0 %v2862
  %4089 = vmatpush1.bf16.msra.mxu0 %v2861
  %4090 = vmatprep.subr.bf16.mxu0 %v2875
  %4091 = vmatpush1.bf16.msra.mxu0 %v2874
  %4092 = vmatprep.subr.bf16.mxu0 %v2888
  %4093 = vmatpush1.bf16.msra.mxu0 %v2887
  %4094 = vmatprep.subr.bf16.mxu0 %v2901
  %4095 = vmatpush1.bf16.msra.mxu0 %v2900
  %4096 = vmatprep.subr.bf16.mxu0 %v2914
  %4097 = vmatpush1.bf16.msra.mxu0 %v2913
  %4098 = vmatprep.subr.bf16.mxu0 %v2927
  %4099 = vmatpush1.bf16.msra.mxu0 %v2926
  %4100 = vmatprep.subr.bf16.mxu0 %v2940
  %4101 = vmatpush1.bf16.msra.mxu0 %v2939
  %4102 = vmatprep.subr.bf16.mxu0 %v2953
  %4103 = vmatpush1.bf16.msra.mxu0 %v2952
  %4104 = vmatprep.subr.bf16.mxu0 %v2966
  %4105 = vmatpush1.bf16.msra.mxu0 %v2965
  %4106 = vmatprep.mubr.bf16.mxu0 %v758
  %4107 = vmatmul.mubr.bf16.gmra.mrb[0].mxu0 %v757
  %v4108 = vpop.f32.mrb[0].mxu0
  %v4109 = vadd.f32 %v728, %v4108
  %v4110 = vpop.f32.mrb[0].mxu0
  %v4111 = vadd.f32 %v728, %v4110
  %v4112 = vpop.f32.mrb[0].mxu0
  %v4113 = vadd.f32 %v733, %v4112
  %v4114 = vpop.f32.mrb[0].mxu0
  %v4115 = vadd.f32 %v733, %v4114
  %4116 = vdwg.mxu0
  %4117 = vmatprep.subr.bf16.mxu0 %v2979
  %4118 = vmatpush1.bf16.msra.mxu0 %v2978
  %4119 = vmatprep.subr.bf16.mxu0 %v2992
  %4120 = vmatpush1.bf16.msra.mxu0 %v2991
  %4121 = vmatprep.subr.bf16.mxu0 %v3005
  %4122 = vmatpush1.bf16.msra.mxu0 %v3004
  %4123 = vmatprep.subr.bf16.mxu0 %v3018
  %4124 = vmatpush1.bf16.msra.mxu0 %v3017
  %4125 = vmatprep.subr.bf16.mxu0 %v3031
  %4126 = vmatpush1.bf16.msra.mxu0 %v3030
  %4127 = vmatprep.subr.bf16.mxu0 %v3044
  %4128 = vmatpush1.bf16.msra.mxu0 %v3043
  %4129 = vmatprep.subr.bf16.mxu0 %v3057
  %4130 = vmatpush1.bf16.msra.mxu0 %v3056
  %4131 = vmatprep.subr.bf16.mxu0 %v3070
  %4132 = vmatpush1.bf16.msra.mxu0 %v3069
  %4133 = vmatprep.subr.bf16.mxu0 %v3083
  %4134 = vmatpush1.bf16.msra.mxu0 %v3082
  %4135 = vmatprep.subr.bf16.mxu0 %v3096
  %4136 = vmatpush1.bf16.msra.mxu0 %v3095
  %4137 = vmatprep.subr.bf16.mxu0 %v3109
  %4138 = vmatpush1.bf16.msra.mxu0 %v3108
  %4139 = vmatprep.subr.bf16.mxu0 %v3122
  %4140 = vmatpush1.bf16.msra.mxu0 %v3121
  %4141 = vmatprep.subr.bf16.mxu0 %v3135
  %4142 = vmatpush1.bf16.msra.mxu0 %v3134
  %4143 = vmatprep.subr.bf16.mxu0 %v3148
  %4144 = vmatpush1.bf16.msra.mxu0 %v3147
  %4145 = vmatprep.subr.bf16.mxu0 %v3161
  %4146 = vmatpush1.bf16.msra.mxu0 %v3160
  %4147 = vmatprep.subr.bf16.mxu0 %v3174
  %4148 = vmatpush1.bf16.msra.mxu0 %v3173
  %4149 = vmatprep.mubr.bf16.mxu0 %v760
  %4150 = vmatmul.mubr.bf16.gmra.mrb[0].mxu0 %v759
  %v4151 = vpop.f32.mrb[0].mxu0
  %v4152 = vadd.f32 %v4109, %v4151
  %v4153 = vpop.f32.mrb[0].mxu0
  %v4154 = vadd.f32 %v4111, %v4153
  %v4155 = vpop.f32.mrb[0].mxu0
  %v4156 = vadd.f32 %v4113, %v4155
  %v4157 = vpop.f32.mrb[0].mxu0
  %v4158 = vadd.f32 %v4115, %v4157
  %4159 = vdwg.mxu0
  %4160 = vmatprep.subr.bf16.mxu0 %v3187
  %4161 = vmatpush1.bf16.msra.mxu0 %v3186
  %4162 = vmatprep.subr.bf16.mxu0 %v3200
  %4163 = vmatpush1.bf16.msra.mxu0 %v3199
  %4164 = vmatprep.subr.bf16.mxu0 %v3213
  %4165 = vmatpush1.bf16.msra.mxu0 %v3212
  %4166 = vmatprep.subr.bf16.mxu0 %v3226
  %4167 = vmatpush1.bf16.msra.mxu0 %v3225
  %4168 = vmatprep.subr.bf16.mxu0 %v3239
  %4169 = vmatpush1.bf16.msra.mxu0 %v3238
  %4170 = vmatprep.subr.bf16.mxu0 %v3252
  %4171 = vmatpush1.bf16.msra.mxu0 %v3251
  %4172 = vmatprep.subr.bf16.mxu0 %v3265
  %4173 = vmatpush1.bf16.msra.mxu0 %v3264
  %4174 = vmatprep.subr.bf16.mxu0 %v3278
  %4175 = vmatpush1.bf16.msra.mxu0 %v3277
  %4176 = vmatprep.subr.bf16.mxu0 %v3291
  %4177 = vmatpush1.bf16.msra.mxu0 %v3290
  %4178 = vmatprep.subr.bf16.mxu0 %v3304
  %4179 = vmatpush1.bf16.msra.mxu0 %v3303
  %4180 = vmatprep.subr.bf16.mxu0 %v3317
  %4181 = vmatpush1.bf16.msra.mxu0 %v3316
  %4182 = vmatprep.subr.bf16.mxu0 %v3330
  %4183 = vmatpush1.bf16.msra.mxu0 %v3329
  %4184 = vmatprep.subr.bf16.mxu0 %v3343
  %4185 = vmatpush1.bf16.msra.mxu0 %v3342
  %4186 = vmatprep.subr.bf16.mxu0 %v3356
  %4187 = vmatpush1.bf16.msra.mxu0 %v3355
  %4188 = vmatprep.subr.bf16.mxu0 %v3369
  %4189 = vmatpush1.bf16.msra.mxu0 %v3368
  %4190 = vmatprep.subr.bf16.mxu0 %v3382
  %4191 = vmatpush1.bf16.msra.mxu0 %v3381
  %4192 = vmatprep.mubr.bf16.mxu0 %v762
  %4193 = vmatmul.mubr.bf16.gmra.mrb[0].mxu0 %v761
  %v4194 = vpop.f32.mrb[0].mxu0
  %v4195 = vadd.f32 %v4152, %v4194
  %v4196 = vpop.f32.mrb[0].mxu0
  %v4197 = vadd.f32 %v4154, %v4196
  %v4198 = vpop.f32.mrb[0].mxu0
  %v4199 = vadd.f32 %v4156, %v4198
  %v4200 = vpop.f32.mrb[0].mxu0
  %v4201 = vadd.f32 %v4158, %v4200
  %4202 = vdwg.mxu0
  %4203 = vmatprep.subr.bf16.mxu0 %v3395
  %4204 = vmatpush1.bf16.msra.mxu0 %v3394
  %4205 = vmatprep.subr.bf16.mxu0 %v3408
  %4206 = vmatpush1.bf16.msra.mxu0 %v3407
  %4207 = vmatprep.subr.bf16.mxu0 0
  %4208 = vmatpush1.bf16.msra.mxu0 0
  %4209 = vmatprep.subr.bf16.mxu0 0
  %4210 = vmatpush1.bf16.msra.mxu0 0
  %4211 = vmatprep.subr.bf16.mxu0 0
  %4212 = vmatpush1.bf16.msra.mxu0 0
  %4213 = vmatprep.subr.bf16.mxu0 0
  %4214 = vmatpush1.bf16.msra.mxu0 0
  %4215 = vmatprep.subr.bf16.mxu0 0
  %4216 = vmatpush1.bf16.msra.mxu0 0
  %4217 = vmatprep.subr.bf16.mxu0 0
  %4218 = vmatpush1.bf16.msra.mxu0 0
  %4219 = vmatprep.subr.bf16.mxu0 0
  %4220 = vmatpush1.bf16.msra.mxu0 0
  %4221 = vmatprep.subr.bf16.mxu0 0
  %4222 = vmatpush1.bf16.msra.mxu0 0
  %4223 = vmatprep.subr.bf16.mxu0 0
  %4224 = vmatpush1.bf16.msra.mxu0 0
  %4225 = vmatprep.subr.bf16.mxu0 0
  %4226 = vmatpush1.bf16.msra.mxu0 0
  %4227 = vmatprep.subr.bf16.mxu0 0
  %4228 = vmatpush1.bf16.msra.mxu0 0
  %4229 = vmatprep.subr.bf16.mxu0 0
  %4230 = vmatpush1.bf16.msra.mxu0 0
  %4231 = vmatprep.subr.bf16.mxu0 0
  %4232 = vmatpush1.bf16.msra.mxu0 0
  %4233 = vmatprep.subr.bf16.mxu0 0
  %4234 = vmatpush1.bf16.msra.mxu0 0
  %4235 = vmatprep.mubr.bf16.mxu0 0
  %4236 = vmatmul.mubr.bf16.gmra.mrb[0].mxu0 %v4072
  %v4237 = vpop.f32.mrb[0].mxu0
  %v4238 = vadd.f32 %v4195, %v4237
  %v4239 = vpop.f32.mrb[0].mxu0
  %v4240 = vadd.f32 %v4197, %v4239
  %v4241 = vpop.f32.mrb[0].mxu0
  %v4242 = vadd.f32 %v4199, %v4241
  %v4243 = vpop.f32.mrb[0].mxu0
  %v4244 = vadd.f32 %v4201, %v4243
  %4245 = vdwg.mxu0
  %4246 = vmatprep.subr.bf16.mxu0 %v2773
  %4247 = vmatpush1.bf16.msra.mxu0 %v2772
  %4248 = vmatprep.subr.bf16.mxu0 %v2786
  %4249 = vmatpush1.bf16.msra.mxu0 %v2785
  %4250 = vmatprep.subr.bf16.mxu0 %v2799
  %4251 = vmatpush1.bf16.msra.mxu0 %v2798
  %4252 = vmatprep.subr.bf16.mxu0 %v2812
  %4253 = vmatpush1.bf16.msra.mxu0 %v2811
  %4254 = vmatprep.subr.bf16.mxu0 %v2825
  %4255 = vmatpush1.bf16.msra.mxu0 %v2824
  %4256 = vmatprep.subr.bf16.mxu0 %v2838
  %4257 = vmatpush1.bf16.msra.mxu0 %v2837
  %4258 = vmatprep.subr.bf16.mxu0 %v2851
  %4259 = vmatpush1.bf16.msra.mxu0 %v2850
  %4260 = vmatprep.subr.bf16.mxu0 %v2864
  %4261 = vmatpush1.bf16.msra.mxu0 %v2863
  %4262 = vmatprep.subr.bf16.mxu0 %v2877
  %4263 = vmatpush1.bf16.msra.mxu0 %v2876
  %4264 = vmatprep.subr.bf16.mxu0 %v2890
  %4265 = vmatpush1.bf16.msra.mxu0 %v2889
  %4266 = vmatprep.subr.bf16.mxu0 %v2903
  %4267 = vmatpush1.bf16.msra.mxu0 %v2902
  %4268 = vmatprep.subr.bf16.mxu0 %v2916
  %4269 = vmatpush1.bf16.msra.mxu0 %v2915
  %4270 = vmatprep.subr.bf16.mxu0 %v2929
  %4271 = vmatpush1.bf16.msra.mxu0 %v2928
  %4272 = vmatprep.subr.bf16.mxu0 %v2942
  %4273 = vmatpush1.bf16.msra.mxu0 %v2941
  %4274 = vmatprep.subr.bf16.mxu0 %v2955
  %4275 = vmatpush1.bf16.msra.mxu0 %v2954
  %4276 = vmatprep.subr.bf16.mxu0 %v2968
  %4277 = vmatpush1.bf16.msra.mxu0 %v2967
  %4278 = vmatprep.mubr.bf16.mxu0 %v758
  %4279 = vmatmul.mubr.bf16.gmra.mrb[0].mxu0 %v757
  %v4280 = vpop.f32.mrb[0].mxu0
  %v4281 = vadd.f32 %v728, %v4280
  %v4282 = vpop.f32.mrb[0].mxu0
  %v4283 = vadd.f32 %v728, %v4282
  %v4284 = vpop.f32.mrb[0].mxu0
  %v4285 = vadd.f32 %v733, %v4284
  %v4286 = vpop.f32.mrb[0].mxu0
  %v4287 = vadd.f32 %v733, %v4286
  %4288 = vdwg.mxu0
  %4289 = vmatprep.subr.bf16.mxu0 %v2981
  %4290 = vmatpush1.bf16.msra.mxu0 %v2980
  %4291 = vmatprep.subr.bf16.mxu0 %v2994
  %4292 = vmatpush1.bf16.msra.mxu0 %v2993
  %4293 = vmatprep.subr.bf16.mxu0 %v3007
  %4294 = vmatpush1.bf16.msra.mxu0 %v3006
  %4295 = vmatprep.subr.bf16.mxu0 %v3020
  %4296 = vmatpush1.bf16.msra.mxu0 %v3019
  %4297 = vmatprep.subr.bf16.mxu0 %v3033
  %4298 = vmatpush1.bf16.msra.mxu0 %v3032
  %4299 = vmatprep.subr.bf16.mxu0 %v3046
  %4300 = vmatpush1.bf16.msra.mxu0 %v3045
  %4301 = vmatprep.subr.bf16.mxu0 %v3059
  %4302 = vmatpush1.bf16.msra.mxu0 %v3058
  %4303 = vmatprep.subr.bf16.mxu0 %v3072
  %4304 = vmatpush1.bf16.msra.mxu0 %v3071
  %4305 = vmatprep.subr.bf16.mxu0 %v3085
  %4306 = vmatpush1.bf16.msra.mxu0 %v3084
  %4307 = vmatprep.subr.bf16.mxu0 %v3098
  %4308 = vmatpush1.bf16.msra.mxu0 %v3097
  %4309 = vmatprep.subr.bf16.mxu0 %v3111
  %4310 = vmatpush1.bf16.msra.mxu0 %v3110
  %4311 = vmatprep.subr.bf16.mxu0 %v3124
  %4312 = vmatpush1.bf16.msra.mxu0 %v3123
  %4313 = vmatprep.subr.bf16.mxu0 %v3137
  %4314 = vmatpush1.bf16.msra.mxu0 %v3136
  %4315 = vmatprep.subr.bf16.mxu0 %v3150
  %4316 = vmatpush1.bf16.msra.mxu0 %v3149
  %4317 = vmatprep.subr.bf16.mxu0 %v3163
  %4318 = vmatpush1.bf16.msra.mxu0 %v3162
  %4319 = vmatprep.subr.bf16.mxu0 %v3176
  %4320 = vmatpush1.bf16.msra.mxu0 %v3175
  %4321 = vmatprep.mubr.bf16.mxu0 %v760
  %4322 = vmatmul.mubr.bf16.gmra.mrb[0].mxu0 %v759
  %v4323 = vpop.f32.mrb[0].mxu0
  %v4324 = vadd.f32 %v4281, %v4323
  %v4325 = vpop.f32.mrb[0].mxu0
  %v4326 = vadd.f32 %v4283, %v4325
  %v4327 = vpop.f32.mrb[0].mxu0
  %v4328 = vadd.f32 %v4285, %v4327
  %v4329 = vpop.f32.mrb[0].mxu0
  %v4330 = vadd.f32 %v4287, %v4329
  %4331 = vdwg.mxu0
  %4332 = vmatprep.subr.bf16.mxu0 %v3189
  %4333 = vmatpush1.bf16.msra.mxu0 %v3188
  %4334 = vmatprep.subr.bf16.mxu0 %v3202
  %4335 = vmatpush1.bf16.msra.mxu0 %v3201
  %4336 = vmatprep.subr.bf16.mxu0 %v3215
  %4337 = vmatpush1.bf16.msra.mxu0 %v3214
  %4338 = vmatprep.subr.bf16.mxu0 %v3228
  %4339 = vmatpush1.bf16.msra.mxu0 %v3227
  %4340 = vmatprep.subr.bf16.mxu0 %v3241
  %4341 = vmatpush1.bf16.msra.mxu0 %v3240
  %4342 = vmatprep.subr.bf16.mxu0 %v3254
  %4343 = vmatpush1.bf16.msra.mxu0 %v3253
  %4344 = vmatprep.subr.bf16.mxu0 %v3267
  %4345 = vmatpush1.bf16.msra.mxu0 %v3266
  %4346 = vmatprep.subr.bf16.mxu0 %v3280
  %4347 = vmatpush1.bf16.msra.mxu0 %v3279
  %4348 = vmatprep.subr.bf16.mxu0 %v3293
  %4349 = vmatpush1.bf16.msra.mxu0 %v3292
  %4350 = vmatprep.subr.bf16.mxu0 %v3306
  %4351 = vmatpush1.bf16.msra.mxu0 %v3305
  %4352 = vmatprep.subr.bf16.mxu0 %v3319
  %4353 = vmatpush1.bf16.msra.mxu0 %v3318
  %4354 = vmatprep.subr.bf16.mxu0 %v3332
  %4355 = vmatpush1.bf16.msra.mxu0 %v3331
  %4356 = vmatprep.subr.bf16.mxu0 %v3345
  %4357 = vmatpush1.bf16.msra.mxu0 %v3344
  %4358 = vmatprep.subr.bf16.mxu0 %v3358
  %4359 = vmatpush1.bf16.msra.mxu0 %v3357
  %4360 = vmatprep.subr.bf16.mxu0 %v3371
  %4361 = vmatpush1.bf16.msra.mxu0 %v3370
  %4362 = vmatprep.subr.bf16.mxu0 %v3384
  %4363 = vmatpush1.bf16.msra.mxu0 %v3383
  %4364 = vmatprep.mubr.bf16.mxu0 %v762
  %4365 = vmatmul.mubr.bf16.gmra.mrb[0].mxu0 %v761
  %v4366 = vpop.f32.mrb[0].mxu0
  %v4367 = vadd.f32 %v4324, %v4366
  %v4368 = vpop.f32.mrb[0].mxu0
  %v4369 = vadd.f32 %v4326, %v4368
  %v4370 = vpop.f32.mrb[0].mxu0
  %v4371 = vadd.f32 %v4328, %v4370
  %v4372 = vpop.f32.mrb[0].mxu0
  %v4373 = vadd.f32 %v4330, %v4372
  %4374 = vdwg.mxu0
  %4375 = vmatprep.subr.bf16.mxu0 %v3397
  %4376 = vmatpush1.bf16.msra.mxu0 %v3396
  %4377 = vmatprep.subr.bf16.mxu0 %v3410
  %4378 = vmatpush1.bf16.msra.mxu0 %v3409
  %4379 = vmatprep.subr.bf16.mxu0 0
  %4380 = vmatpush1.bf16.msra.mxu0 0
  %4381 = vmatprep.subr.bf16.mxu0 0
  %4382 = vmatpush1.bf16.msra.mxu0 0
  %4383 = vmatprep.subr.bf16.mxu0 0
  %4384 = vmatpush1.bf16.msra.mxu0 0
  %4385 = vmatprep.subr.bf16.mxu0 0
  %4386 = vmatpush1.bf16.msra.mxu0 0
  %4387 = vmatprep.subr.bf16.mxu0 0
  %4388 = vmatpush1.bf16.msra.mxu0 0
  %4389 = vmatprep.subr.bf16.mxu0 0
  %4390 = vmatpush1.bf16.msra.mxu0 0
  %4391 = vmatprep.subr.bf16.mxu0 0
  %4392 = vmatpush1.bf16.msra.mxu0 0
  %4393 = vmatprep.subr.bf16.mxu0 0
  %4394 = vmatpush1.bf16.msra.mxu0 0
  %4395 = vmatprep.subr.bf16.mxu0 0
  %4396 = vmatpush1.bf16.msra.mxu0 0
  %4397 = vmatprep.subr.bf16.mxu0 0
  %4398 = vmatpush1.bf16.msra.mxu0 0
  %4399 = vmatprep.subr.bf16.mxu0 0
  %4400 = vmatpush1.bf16.msra.mxu0 0
  %4401 = vmatprep.subr.bf16.mxu0 0
  %4402 = vmatpush1.bf16.msra.mxu0 0
  %4403 = vmatprep.subr.bf16.mxu0 0
  %4404 = vmatpush1.bf16.msra.mxu0 0
  %4405 = vmatprep.subr.bf16.mxu0 0
  %4406 = vmatpush1.bf16.msra.mxu0 0
  %4407 = vmatprep.mubr.bf16.mxu0 0
  %4408 = vmatmul.mubr.bf16.gmra.mrb[0].mxu0 %v4072
  %v4409 = vpop.f32.mrb[0].mxu0
  %v4410 = vadd.f32 %v4367, %v4409
  %v4411 = vpop.f32.mrb[0].mxu0
  %v4412 = vadd.f32 %v4369, %v4411
  %v4413 = vpop.f32.mrb[0].mxu0
  %v4414 = vadd.f32 %v4371, %v4413
  %v4415 = vpop.f32.mrb[0].mxu0
  %v4416 = vadd.f32 %v4373, %v4415
  %4417 = vdwg.mxu0
  %4418 = vmatprep.subr.bf16.mxu0 %v2775
  %4419 = vmatpush1.bf16.msra.mxu0 %v2774
  %4420 = vmatprep.subr.bf16.mxu0 %v2788
  %4421 = vmatpush1.bf16.msra.mxu0 %v2787
  %4422 = vmatprep.subr.bf16.mxu0 %v2801
  %4423 = vmatpush1.bf16.msra.mxu0 %v2800
  %4424 = vmatprep.subr.bf16.mxu0 %v2814
  %4425 = vmatpush1.bf16.msra.mxu0 %v2813
  %4426 = vmatprep.subr.bf16.mxu0 %v2827
  %4427 = vmatpush1.bf16.msra.mxu0 %v2826
  %4428 = vmatprep.subr.bf16.mxu0 %v2840
  %4429 = vmatpush1.bf16.msra.mxu0 %v2839
  %4430 = vmatprep.subr.bf16.mxu0 %v2853
  %4431 = vmatpush1.bf16.msra.mxu0 %v2852
  %4432 = vmatprep.subr.bf16.mxu0 %v2866
  %4433 = vmatpush1.bf16.msra.mxu0 %v2865
  %4434 = vmatprep.subr.bf16.mxu0 %v2879
  %4435 = vmatpush1.bf16.msra.mxu0 %v2878
  %4436 = vmatprep.subr.bf16.mxu0 %v2892
  %4437 = vmatpush1.bf16.msra.mxu0 %v2891
  %4438 = vmatprep.subr.bf16.mxu0 %v2905
  %4439 = vmatpush1.bf16.msra.mxu0 %v2904
  %4440 = vmatprep.subr.bf16.mxu0 %v2918
  %4441 = vmatpush1.bf16.msra.mxu0 %v2917
  %4442 = vmatprep.subr.bf16.mxu0 %v2931
  %4443 = vmatpush1.bf16.msra.mxu0 %v2930
  %4444 = vmatprep.subr.bf16.mxu0 %v2944
  %4445 = vmatpush1.bf16.msra.mxu0 %v2943
  %4446 = vmatprep.subr.bf16.mxu0 %v2957
  %4447 = vmatpush1.bf16.msra.mxu0 %v2956
  %4448 = vmatprep.subr.bf16.mxu0 %v2970
  %4449 = vmatpush1.bf16.msra.mxu0 %v2969
  %4450 = vmatprep.mubr.bf16.mxu0 %v758
  %4451 = vmatmul.mubr.bf16.gmra.mrb[0].mxu0 %v757
  %v4452 = vpop.f32.mrb[0].mxu0
  %v4453 = vadd.f32 %v728, %v4452
  %v4454 = vpop.f32.mrb[0].mxu0
  %v4455 = vadd.f32 %v728, %v4454
  %v4456 = vpop.f32.mrb[0].mxu0
  %v4457 = vadd.f32 %v733, %v4456
  %v4458 = vpop.f32.mrb[0].mxu0
  %v4459 = vadd.f32 %v733, %v4458
  %4460 = vdwg.mxu0
  %4461 = vmatprep.subr.bf16.mxu0 %v2983
  %4462 = vmatpush1.bf16.msra.mxu0 %v2982
  %4463 = vmatprep.subr.bf16.mxu0 %v2996
  %4464 = vmatpush1.bf16.msra.mxu0 %v2995
  %4465 = vmatprep.subr.bf16.mxu0 %v3009
  %4466 = vmatpush1.bf16.msra.mxu0 %v3008
  %4467 = vmatprep.subr.bf16.mxu0 %v3022
  %4468 = vmatpush1.bf16.msra.mxu0 %v3021
  %4469 = vmatprep.subr.bf16.mxu0 %v3035
  %4470 = vmatpush1.bf16.msra.mxu0 %v3034
  %4471 = vmatprep.subr.bf16.mxu0 %v3048
  %4472 = vmatpush1.bf16.msra.mxu0 %v3047
  %4473 = vmatprep.subr.bf16.mxu0 %v3061
  %4474 = vmatpush1.bf16.msra.mxu0 %v3060
  %4475 = vmatprep.subr.bf16.mxu0 %v3074
  %4476 = vmatpush1.bf16.msra.mxu0 %v3073
  %4477 = vmatprep.subr.bf16.mxu0 %v3087
  %4478 = vmatpush1.bf16.msra.mxu0 %v3086
  %4479 = vmatprep.subr.bf16.mxu0 %v3100
  %4480 = vmatpush1.bf16.msra.mxu0 %v3099
  %4481 = vmatprep.subr.bf16.mxu0 %v3113
  %4482 = vmatpush1.bf16.msra.mxu0 %v3112
  %4483 = vmatprep.subr.bf16.mxu0 %v3126
  %4484 = vmatpush1.bf16.msra.mxu0 %v3125
  %4485 = vmatprep.subr.bf16.mxu0 %v3139
  %4486 = vmatpush1.bf16.msra.mxu0 %v3138
  %4487 = vmatprep.subr.bf16.mxu0 %v3152
  %4488 = vmatpush1.bf16.msra.mxu0 %v3151
  %4489 = vmatprep.subr.bf16.mxu0 %v3165
  %4490 = vmatpush1.bf16.msra.mxu0 %v3164
  %4491 = vmatprep.subr.bf16.mxu0 %v3178
  %4492 = vmatpush1.bf16.msra.mxu0 %v3177
  %4493 = vmatprep.mubr.bf16.mxu0 %v760
  %4494 = vmatmul.mubr.bf16.gmra.mrb[0].mxu0 %v759
  %v4495 = vpop.f32.mrb[0].mxu0
  %v4496 = vadd.f32 %v4453, %v4495
  %v4497 = vpop.f32.mrb[0].mxu0
  %v4498 = vadd.f32 %v4455, %v4497
  %v4499 = vpop.f32.mrb[0].mxu0
  %v4500 = vadd.f32 %v4457, %v4499
  %v4501 = vpop.f32.mrb[0].mxu0
  %v4502 = vadd.f32 %v4459, %v4501
  %4503 = vdwg.mxu0
  %4504 = vmatprep.subr.bf16.mxu0 %v3191
  %4505 = vmatpush1.bf16.msra.mxu0 %v3190
  %4506 = vmatprep.subr.bf16.mxu0 %v3204
  %4507 = vmatpush1.bf16.msra.mxu0 %v3203
  %4508 = vmatprep.subr.bf16.mxu0 %v3217
  %4509 = vmatpush1.bf16.msra.mxu0 %v3216
  %4510 = vmatprep.subr.bf16.mxu0 %v3230
  %4511 = vmatpush1.bf16.msra.mxu0 %v3229
  %4512 = vmatprep.subr.bf16.mxu0 %v3243
  %4513 = vmatpush1.bf16.msra.mxu0 %v3242
  %4514 = vmatprep.subr.bf16.mxu0 %v3256
  %4515 = vmatpush1.bf16.msra.mxu0 %v3255
  %4516 = vmatprep.subr.bf16.mxu0 %v3269
  %4517 = vmatpush1.bf16.msra.mxu0 %v3268
  %4518 = vmatprep.subr.bf16.mxu0 %v3282
  %4519 = vmatpush1.bf16.msra.mxu0 %v3281
  %4520 = vmatprep.subr.bf16.mxu0 %v3295
  %4521 = vmatpush1.bf16.msra.mxu0 %v3294
  %4522 = vmatprep.subr.bf16.mxu0 %v3308
  %4523 = vmatpush1.bf16.msra.mxu0 %v3307
  %4524 = vmatprep.subr.bf16.mxu0 %v3321
  %4525 = vmatpush1.bf16.msra.mxu0 %v3320
  %4526 = vmatprep.subr.bf16.mxu0 %v3334
  %4527 = vmatpush1.bf16.msra.mxu0 %v3333
  %4528 = vmatprep.subr.bf16.mxu0 %v3347
  %4529 = vmatpush1.bf16.msra.mxu0 %v3346
  %4530 = vmatprep.subr.bf16.mxu0 %v3360
  %4531 = vmatpush1.bf16.msra.mxu0 %v3359
  %4532 = vmatprep.subr.bf16.mxu0 %v3373
  %4533 = vmatpush1.bf16.msra.mxu0 %v3372
  %4534 = vmatprep.subr.bf16.mxu0 %v3386
  %4535 = vmatpush1.bf16.msra.mxu0 %v3385
  %4536 = vmatprep.mubr.bf16.mxu0 %v762
  %4537 = vmatmul.mubr.bf16.gmra.mrb[0].mxu0 %v761
  %v4538 = vpop.f32.mrb[0].mxu0
  %v4539 = vadd.f32 %v4496, %v4538
  %v4540 = vpop.f32.mrb[0].mxu0
  %v4541 = vadd.f32 %v4498, %v4540
  %v4542 = vpop.f32.mrb[0].mxu0
  %v4543 = vadd.f32 %v4500, %v4542
  %v4544 = vpop.f32.mrb[0].mxu0
  %v4545 = vadd.f32 %v4502, %v4544
  %4546 = vdwg.mxu0
  %4547 = vmatprep.subr.bf16.mxu0 %v3399
  %4548 = vmatpush1.bf16.msra.mxu0 %v3398
  %4549 = vmatprep.subr.bf16.mxu0 %v3412
  %4550 = vmatpush1.bf16.msra.mxu0 %v3411
  %4551 = vmatprep.subr.bf16.mxu0 0
  %4552 = vmatpush1.bf16.msra.mxu0 0
  %4553 = vmatprep.subr.bf16.mxu0 0
  %4554 = vmatpush1.bf16.msra.mxu0 0
  %4555 = vmatprep.subr.bf16.mxu0 0
  %4556 = vmatpush1.bf16.msra.mxu0 0
  %4557 = vmatprep.subr.bf16.mxu0 0
  %4558 = vmatpush1.bf16.msra.mxu0 0
  %4559 = vmatprep.subr.bf16.mxu0 0
  %4560 = vmatpush1.bf16.msra.mxu0 0
  %4561 = vmatprep.subr.bf16.mxu0 0
  %4562 = vmatpush1.bf16.msra.mxu0 0
  %4563 = vmatprep.subr.bf16.mxu0 0
  %4564 = vmatpush1.bf16.msra.mxu0 0
  %4565 = vmatprep.subr.bf16.mxu0 0
  %4566 = vmatpush1.bf16.msra.mxu0 0
  %4567 = vmatprep.subr.bf16.mxu0 0
  %4568 = vmatpush1.bf16.msra.mxu0 0
  %4569 = vmatprep.subr.bf16.mxu0 0
  %4570 = vmatpush1.bf16.msra.mxu0 0
  %4571 = vmatprep.subr.bf16.mxu0 0
  %4572 = vmatpush1.bf16.msra.mxu0 0
  %4573 = vmatprep.subr.bf16.mxu0 0
  %4574 = vmatpush1.bf16.msra.mxu0 0
  %4575 = vmatprep.subr.bf16.mxu0 0
  %4576 = vmatpush1.bf16.msra.mxu0 0
  %4577 = vmatprep.subr.bf16.mxu0 0
  %4578 = vmatpush1.bf16.msra.mxu0 0
  %4579 = vmatprep.mubr.bf16.mxu0 0
  %4580 = vmatmul.mubr.bf16.gmra.mrb[0].mxu0 %v4072
  %v4581 = vpop.f32.mrb[0].mxu0
  %v4582 = vadd.f32 %v4539, %v4581
  %v4583 = vpop.f32.mrb[0].mxu0
  %v4584 = vadd.f32 %v4541, %v4583
  %v4585 = vpop.f32.mrb[0].mxu0
  %v4586 = vadd.f32 %v4543, %v4585
  %v4587 = vpop.f32.mrb[0].mxu0
  %v4588 = vadd.f32 %v4545, %v4587
  %4589 = vdwg.mxu0
  %4590 = vmatprep.subr.bf16.mxu0 %v2777
  %4591 = vmatpush1.bf16.msra.mxu0 %v2776
  %4592 = vmatprep.subr.bf16.mxu0 %v2790
  %4593 = vmatpush1.bf16.msra.mxu0 %v2789
  %4594 = vmatprep.subr.bf16.mxu0 %v2803
  %4595 = vmatpush1.bf16.msra.mxu0 %v2802
  %4596 = vmatprep.subr.bf16.mxu0 %v2816
  %4597 = vmatpush1.bf16.msra.mxu0 %v2815
  %4598 = vmatprep.subr.bf16.mxu0 %v2829
  %4599 = vmatpush1.bf16.msra.mxu0 %v2828
  %4600 = vmatprep.subr.bf16.mxu0 %v2842
  %4601 = vmatpush1.bf16.msra.mxu0 %v2841
  %4602 = vmatprep.subr.bf16.mxu0 %v2855
  %4603 = vmatpush1.bf16.msra.mxu0 %v2854
  %4604 = vmatprep.subr.bf16.mxu0 %v2868
  %4605 = vmatpush1.bf16.msra.mxu0 %v2867
  %4606 = vmatprep.subr.bf16.mxu0 %v2881
  %4607 = vmatpush1.bf16.msra.mxu0 %v2880
  %4608 = vmatprep.subr.bf16.mxu0 %v2894
  %4609 = vmatpush1.bf16.msra.mxu0 %v2893
  %4610 = vmatprep.subr.bf16.mxu0 %v2907
  %4611 = vmatpush1.bf16.msra.mxu0 %v2906
  %4612 = vmatprep.subr.bf16.mxu0 %v2920
  %4613 = vmatpush1.bf16.msra.mxu0 %v2919
  %4614 = vmatprep.subr.bf16.mxu0 %v2933
  %4615 = vmatpush1.bf16.msra.mxu0 %v2932
  %4616 = vmatprep.subr.bf16.mxu0 %v2946
  %4617 = vmatpush1.bf16.msra.mxu0 %v2945
  %4618 = vmatprep.subr.bf16.mxu0 %v2959
  %4619 = vmatpush1.bf16.msra.mxu0 %v2958
  %4620 = vmatprep.subr.bf16.mxu0 %v2972
  %4621 = vmatpush1.bf16.msra.mxu0 %v2971
  %4622 = vmatprep.mubr.bf16.mxu0 %v758
  %4623 = vmatmul.mubr.bf16.gmra.mrb[0].mxu0 %v757
  %v4624 = vpop.f32.mrb[0].mxu0
  %v4625 = vadd.f32 %v728, %v4624
  %v4626 = vpop.f32.mrb[0].mxu0
  %v4627 = vadd.f32 %v728, %v4626
  %v4628 = vpop.f32.mrb[0].mxu0
  %v4629 = vadd.f32 %v733, %v4628
  %v4630 = vpop.f32.mrb[0].mxu0
  %v4631 = vadd.f32 %v733, %v4630
  %4632 = vdwg.mxu0
  %4633 = vmatprep.subr.bf16.mxu0 %v2985
  %4634 = vmatpush1.bf16.msra.mxu0 %v2984
  %4635 = vmatprep.subr.bf16.mxu0 %v2998
  %4636 = vmatpush1.bf16.msra.mxu0 %v2997
  %4637 = vmatprep.subr.bf16.mxu0 %v3011
  %4638 = vmatpush1.bf16.msra.mxu0 %v3010
  %4639 = vmatprep.subr.bf16.mxu0 %v3024
  %4640 = vmatpush1.bf16.msra.mxu0 %v3023
  %4641 = vmatprep.subr.bf16.mxu0 %v3037
  %4642 = vmatpush1.bf16.msra.mxu0 %v3036
  %4643 = vmatprep.subr.bf16.mxu0 %v3050
  %4644 = vmatpush1.bf16.msra.mxu0 %v3049
  %4645 = vmatprep.subr.bf16.mxu0 %v3063
  %4646 = vmatpush1.bf16.msra.mxu0 %v3062
  %4647 = vmatprep.subr.bf16.mxu0 %v3076
  %4648 = vmatpush1.bf16.msra.mxu0 %v3075
  %4649 = vmatprep.subr.bf16.mxu0 %v3089
  %4650 = vmatpush1.bf16.msra.mxu0 %v3088
  %4651 = vmatprep.subr.bf16.mxu0 %v3102
  %4652 = vmatpush1.bf16.msra.mxu0 %v3101
  %4653 = vmatprep.subr.bf16.mxu0 %v3115
  %4654 = vmatpush1.bf16.msra.mxu0 %v3114
  %4655 = vmatprep.subr.bf16.mxu0 %v3128
  %4656 = vmatpush1.bf16.msra.mxu0 %v3127
  %4657 = vmatprep.subr.bf16.mxu0 %v3141
  %4658 = vmatpush1.bf16.msra.mxu0 %v3140
  %4659 = vmatprep.subr.bf16.mxu0 %v3154
  %4660 = vmatpush1.bf16.msra.mxu0 %v3153
  %4661 = vmatprep.subr.bf16.mxu0 %v3167
  %4662 = vmatpush1.bf16.msra.mxu0 %v3166
  %4663 = vmatprep.subr.bf16.mxu0 %v3180
  %4664 = vmatpush1.bf16.msra.mxu0 %v3179
  %4665 = vmatprep.mubr.bf16.mxu0 %v760
  %4666 = vmatmul.mubr.bf16.gmra.mrb[0].mxu0 %v759
  %v4667 = vpop.f32.mrb[0].mxu0
  %v4668 = vadd.f32 %v4625, %v4667
  %v4669 = vpop.f32.mrb[0].mxu0
  %v4670 = vadd.f32 %v4627, %v4669
  %v4671 = vpop.f32.mrb[0].mxu0
  %v4672 = vadd.f32 %v4629, %v4671
  %v4673 = vpop.f32.mrb[0].mxu0
  %v4674 = vadd.f32 %v4631, %v4673
  %4675 = vdwg.mxu0
  %4676 = vmatprep.subr.bf16.mxu0 %v3193
  %4677 = vmatpush1.bf16.msra.mxu0 %v3192
  %4678 = vmatprep.subr.bf16.mxu0 %v3206
  %4679 = vmatpush1.bf16.msra.mxu0 %v3205
  %4680 = vmatprep.subr.bf16.mxu0 %v3219
  %4681 = vmatpush1.bf16.msra.mxu0 %v3218
  %4682 = vmatprep.subr.bf16.mxu0 %v3232
  %4683 = vmatpush1.bf16.msra.mxu0 %v3231
  %4684 = vmatprep.subr.bf16.mxu0 %v3245
  %4685 = vmatpush1.bf16.msra.mxu0 %v3244
  %4686 = vmatprep.subr.bf16.mxu0 %v3258
  %4687 = vmatpush1.bf16.msra.mxu0 %v3257
  %4688 = vmatprep.subr.bf16.mxu0 %v3271
  %4689 = vmatpush1.bf16.msra.mxu0 %v3270
  %4690 = vmatprep.subr.bf16.mxu0 %v3284
  %4691 = vmatpush1.bf16.msra.mxu0 %v3283
  %4692 = vmatprep.subr.bf16.mxu0 %v3297
  %4693 = vmatpush1.bf16.msra.mxu0 %v3296
  %4694 = vmatprep.subr.bf16.mxu0 %v3310
  %4695 = vmatpush1.bf16.msra.mxu0 %v3309
  %4696 = vmatprep.subr.bf16.mxu0 %v3323
  %4697 = vmatpush1.bf16.msra.mxu0 %v3322
  %4698 = vmatprep.subr.bf16.mxu0 %v3336
  %4699 = vmatpush1.bf16.msra.mxu0 %v3335
  %4700 = vmatprep.subr.bf16.mxu0 %v3349
  %4701 = vmatpush1.bf16.msra.mxu0 %v3348
  %4702 = vmatprep.subr.bf16.mxu0 %v3362
  %4703 = vmatpush1.bf16.msra.mxu0 %v3361
  %4704 = vmatprep.subr.bf16.mxu0 %v3375
  %4705 = vmatpush1.bf16.msra.mxu0 %v3374
  %4706 = vmatprep.subr.bf16.mxu0 %v3388
  %4707 = vmatpush1.bf16.msra.mxu0 %v3387
  %4708 = vmatprep.mubr.bf16.mxu0 %v762
  %4709 = vmatmul.mubr.bf16.gmra.mrb[0].mxu0 %v761
  %v4710 = vpop.f32.mrb[0].mxu0
  %v4711 = vadd.f32 %v4668, %v4710
  %v4712 = vpop.f32.mrb[0].mxu0
  %v4713 = vadd.f32 %v4670, %v4712
  %v4714 = vpop.f32.mrb[0].mxu0
  %v4715 = vadd.f32 %v4672, %v4714
  %v4716 = vpop.f32.mrb[0].mxu0
  %v4717 = vadd.f32 %v4674, %v4716
  %4718 = vdwg.mxu0
  %4719 = vmatprep.subr.bf16.mxu0 %v3401
  %4720 = vmatpush1.bf16.msra.mxu0 %v3400
  %4721 = vmatprep.subr.bf16.mxu0 %v3414
  %4722 = vmatpush1.bf16.msra.mxu0 %v3413
  %4723 = vmatprep.subr.bf16.mxu0 0
  %4724 = vmatpush1.bf16.msra.mxu0 0
  %4725 = vmatprep.subr.bf16.mxu0 0
  %4726 = vmatpush1.bf16.msra.mxu0 0
  %4727 = vmatprep.subr.bf16.mxu0 0
  %4728 = vmatpush1.bf16.msra.mxu0 0
  %4729 = vmatprep.subr.bf16.mxu0 0
  %4730 = vmatpush1.bf16.msra.mxu0 0
  %4731 = vmatprep.subr.bf16.mxu0 0
  %4732 = vmatpush1.bf16.msra.mxu0 0
  %4733 = vmatprep.subr.bf16.mxu0 0
  %4734 = vmatpush1.bf16.msra.mxu0 0
  %4735 = vmatprep.subr.bf16.mxu0 0
  %4736 = vmatpush1.bf16.msra.mxu0 0
  %4737 = vmatprep.subr.bf16.mxu0 0
  %4738 = vmatpush1.bf16.msra.mxu0 0
  %4739 = vmatprep.subr.bf16.mxu0 0
  %4740 = vmatpush1.bf16.msra.mxu0 0
  %4741 = vmatprep.subr.bf16.mxu0 0
  %4742 = vmatpush1.bf16.msra.mxu0 0
  %4743 = vmatprep.subr.bf16.mxu0 0
  %4744 = vmatpush1.bf16.msra.mxu0 0
  %4745 = vmatprep.subr.bf16.mxu0 0
  %4746 = vmatpush1.bf16.msra.mxu0 0
  %4747 = vmatprep.subr.bf16.mxu0 0
  %4748 = vmatpush1.bf16.msra.mxu0 0
  %4749 = vmatprep.subr.bf16.mxu0 0
  %4750 = vmatpush1.bf16.msra.mxu0 0
  %4751 = vmatprep.mubr.bf16.mxu0 0
  %4752 = vmatmul.mubr.bf16.gmra.mrb[0].mxu0 %v4072
  %v4753 = vpop.f32.mrb[0].mxu0
  %v4754 = vadd.f32 %v4711, %v4753
  %v4755 = vpop.f32.mrb[0].mxu0
  %v4756 = vadd.f32 %v4713, %v4755
  %v4757 = vpop.f32.mrb[0].mxu0
  %v4758 = vadd.f32 %v4715, %v4757
  %v4759 = vpop.f32.mrb[0].mxu0
  %v4760 = vadd.f32 %v4717, %v4759
  %4761 = vdwg.mxu0
  %4762 = vmatprep.subr.bf16.mxu0 %v2779
  %4763 = vmatpush1.bf16.msra.mxu0 %v2778
  %4764 = vmatprep.subr.bf16.mxu0 %v2792
  %4765 = vmatpush1.bf16.msra.mxu0 %v2791
  %4766 = vmatprep.subr.bf16.mxu0 %v2805
  %4767 = vmatpush1.bf16.msra.mxu0 %v2804
  %4768 = vmatprep.subr.bf16.mxu0 %v2818
  %4769 = vmatpush1.bf16.msra.mxu0 %v2817
  %4770 = vmatprep.subr.bf16.mxu0 %v2831
  %4771 = vmatpush1.bf16.msra.mxu0 %v2830
  %4772 = vmatprep.subr.bf16.mxu0 %v2844
  %4773 = vmatpush1.bf16.msra.mxu0 %v2843
  %4774 = vmatprep.subr.bf16.mxu0 %v2857
  %4775 = vmatpush1.bf16.msra.mxu0 %v2856
  %4776 = vmatprep.subr.bf16.mxu0 %v2870
  %4777 = vmatpush1.bf16.msra.mxu0 %v2869
  %4778 = vmatprep.subr.bf16.mxu0 %v2883
  %4779 = vmatpush1.bf16.msra.mxu0 %v2882
  %4780 = vmatprep.subr.bf16.mxu0 %v2896
  %4781 = vmatpush1.bf16.msra.mxu0 %v2895
  %4782 = vmatprep.subr.bf16.mxu0 %v2909
  %4783 = vmatpush1.bf16.msra.mxu0 %v2908
  %4784 = vmatprep.subr.bf16.mxu0 %v2922
  %4785 = vmatpush1.bf16.msra.mxu0 %v2921
  %4786 = vmatprep.subr.bf16.mxu0 %v2935
  %4787 = vmatpush1.bf16.msra.mxu0 %v2934
  %4788 = vmatprep.subr.bf16.mxu0 %v2948
  %4789 = vmatpush1.bf16.msra.mxu0 %v2947
  %4790 = vmatprep.subr.bf16.mxu0 %v2961
  %4791 = vmatpush1.bf16.msra.mxu0 %v2960
  %4792 = vmatprep.subr.bf16.mxu0 %v2974
  %4793 = vmatpush1.bf16.msra.mxu0 %v2973
  %4794 = vmatprep.mubr.bf16.mxu0 %v758
  %4795 = vmatmul.mubr.bf16.gmra.mrb[0].mxu0 %v757
  %v4796 = vpop.f32.mrb[0].mxu0
  %v4797 = vadd.f32 %v728, %v4796
  %v4798 = vpop.f32.mrb[0].mxu0
  %v4799 = vadd.f32 %v728, %v4798
  %v4800 = vpop.f32.mrb[0].mxu0
  %v4801 = vadd.f32 %v733, %v4800
  %v4802 = vpop.f32.mrb[0].mxu0
  %v4803 = vadd.f32 %v733, %v4802
  %4804 = vdwg.mxu0
  %4805 = vmatprep.subr.bf16.mxu0 %v2987
  %4806 = vmatpush1.bf16.msra.mxu0 %v2986
  %4807 = vmatprep.subr.bf16.mxu0 %v3000
  %4808 = vmatpush1.bf16.msra.mxu0 %v2999
  %4809 = vmatprep.subr.bf16.mxu0 %v3013
  %4810 = vmatpush1.bf16.msra.mxu0 %v3012
  %4811 = vmatprep.subr.bf16.mxu0 %v3026
  %4812 = vmatpush1.bf16.msra.mxu0 %v3025
  %4813 = vmatprep.subr.bf16.mxu0 %v3039
  %4814 = vmatpush1.bf16.msra.mxu0 %v3038
  %4815 = vmatprep.subr.bf16.mxu0 %v3052
  %4816 = vmatpush1.bf16.msra.mxu0 %v3051
  %4817 = vmatprep.subr.bf16.mxu0 %v3065
  %4818 = vmatpush1.bf16.msra.mxu0 %v3064
  %4819 = vmatprep.subr.bf16.mxu0 %v3078
  %4820 = vmatpush1.bf16.msra.mxu0 %v3077
  %4821 = vmatprep.subr.bf16.mxu0 %v3091
  %4822 = vmatpush1.bf16.msra.mxu0 %v3090
  %4823 = vmatprep.subr.bf16.mxu0 %v3104
  %4824 = vmatpush1.bf16.msra.mxu0 %v3103
  %4825 = vmatprep.subr.bf16.mxu0 %v3117
  %4826 = vmatpush1.bf16.msra.mxu0 %v3116
  %4827 = vmatprep.subr.bf16.mxu0 %v3130
  %4828 = vmatpush1.bf16.msra.mxu0 %v3129
  %4829 = vmatprep.subr.bf16.mxu0 %v3143
  %4830 = vmatpush1.bf16.msra.mxu0 %v3142
  %4831 = vmatprep.subr.bf16.mxu0 %v3156
  %4832 = vmatpush1.bf16.msra.mxu0 %v3155
  %4833 = vmatprep.subr.bf16.mxu0 %v3169
  %4834 = vmatpush1.bf16.msra.mxu0 %v3168
  %4835 = vmatprep.subr.bf16.mxu0 %v3182
  %4836 = vmatpush1.bf16.msra.mxu0 %v3181
  %4837 = vmatprep.mubr.bf16.mxu0 %v760
  %4838 = vmatmul.mubr.bf16.gmra.mrb[0].mxu0 %v759
  %v4839 = vpop.f32.mrb[0].mxu0
  %v4840 = vadd.f32 %v4797, %v4839
  %v4841 = vpop.f32.mrb[0].mxu0
  %v4842 = vadd.f32 %v4799, %v4841
  %v4843 = vpop.f32.mrb[0].mxu0
  %v4844 = vadd.f32 %v4801, %v4843
  %v4845 = vpop.f32.mrb[0].mxu0
  %v4846 = vadd.f32 %v4803, %v4845
  %4847 = vdwg.mxu0
  %4848 = vmatprep.subr.bf16.mxu0 %v3195
  %4849 = vmatpush1.bf16.msra.mxu0 %v3194
  %4850 = vmatprep.subr.bf16.mxu0 %v3208
  %4851 = vmatpush1.bf16.msra.mxu0 %v3207
  %4852 = vmatprep.subr.bf16.mxu0 %v3221
  %4853 = vmatpush1.bf16.msra.mxu0 %v3220
  %4854 = vmatprep.subr.bf16.mxu0 %v3234
  %4855 = vmatpush1.bf16.msra.mxu0 %v3233
  %4856 = vmatprep.subr.bf16.mxu0 %v3247
  %4857 = vmatpush1.bf16.msra.mxu0 %v3246
  %4858 = vmatprep.subr.bf16.mxu0 %v3260
  %4859 = vmatpush1.bf16.msra.mxu0 %v3259
  %4860 = vmatprep.subr.bf16.mxu0 %v3273
  %4861 = vmatpush1.bf16.msra.mxu0 %v3272
  %4862 = vmatprep.subr.bf16.mxu0 %v3286
  %4863 = vmatpush1.bf16.msra.mxu0 %v3285
  %4864 = vmatprep.subr.bf16.mxu0 %v3299
  %4865 = vmatpush1.bf16.msra.mxu0 %v3298
  %4866 = vmatprep.subr.bf16.mxu0 %v3312
  %4867 = vmatpush1.bf16.msra.mxu0 %v3311
  %4868 = vmatprep.subr.bf16.mxu0 %v3325
  %4869 = vmatpush1.bf16.msra.mxu0 %v3324
  %4870 = vmatprep.subr.bf16.mxu0 %v3338
  %4871 = vmatpush1.bf16.msra.mxu0 %v3337
  %4872 = vmatprep.subr.bf16.mxu0 %v3351
  %4873 = vmatpush1.bf16.msra.mxu0 %v3350
  %4874 = vmatprep.subr.bf16.mxu0 %v3364
  %4875 = vmatpush1.bf16.msra.mxu0 %v3363
  %4876 = vmatprep.subr.bf16.mxu0 %v3377
  %4877 = vmatpush1.bf16.msra.mxu0 %v3376
  %4878 = vmatprep.subr.bf16.mxu0 %v3390
  %4879 = vmatpush1.bf16.msra.mxu0 %v3389
  %4880 = vmatprep.mubr.bf16.mxu0 %v762
  %4881 = vmatmul.mubr.bf16.gmra.mrb[0].mxu0 %v761
  %v4882 = vpop.f32.mrb[0].mxu0
  %v4883 = vadd.f32 %v4840, %v4882
  %v4884 = vpop.f32.mrb[0].mxu0
  %v4885 = vadd.f32 %v4842, %v4884
  %v4886 = vpop.f32.mrb[0].mxu0
  %v4887 = vadd.f32 %v4844, %v4886
  %v4888 = vpop.f32.mrb[0].mxu0
  %v4889 = vadd.f32 %v4846, %v4888
  %4890 = vdwg.mxu0
  %4891 = vmatprep.subr.bf16.mxu0 %v3403
  %4892 = vmatpush1.bf16.msra.mxu0 %v3402
  %4893 = vmatprep.subr.bf16.mxu0 %v3416
  %4894 = vmatpush1.bf16.msra.mxu0 %v3415
  %4895 = vmatprep.subr.bf16.mxu0 0
  %4896 = vmatpush1.bf16.msra.mxu0 0
  %4897 = vmatprep.subr.bf16.mxu0 0
  %4898 = vmatpush1.bf16.msra.mxu0 0
  %4899 = vmatprep.subr.bf16.mxu0 0
  %4900 = vmatpush1.bf16.msra.mxu0 0
  %4901 = vmatprep.subr.bf16.mxu0 0
  %4902 = vmatpush1.bf16.msra.mxu0 0
  %4903 = vmatprep.subr.bf16.mxu0 0
  %4904 = vmatpush1.bf16.msra.mxu0 0
  %4905 = vmatprep.subr.bf16.mxu0 0
  %4906 = vmatpush1.bf16.msra.mxu0 0
  %4907 = vmatprep.subr.bf16.mxu0 0
  %4908 = vmatpush1.bf16.msra.mxu0 0
  %4909 = vmatprep.subr.bf16.mxu0 0
  %4910 = vmatpush1.bf16.msra.mxu0 0
  %4911 = vmatprep.subr.bf16.mxu0 0
  %4912 = vmatpush1.bf16.msra.mxu0 0
  %4913 = vmatprep.subr.bf16.mxu0 0
  %4914 = vmatpush1.bf16.msra.mxu0 0
  %4915 = vmatprep.subr.bf16.mxu0 0
  %4916 = vmatpush1.bf16.msra.mxu0 0
  %4917 = vmatprep.subr.bf16.mxu0 0
  %4918 = vmatpush1.bf16.msra.mxu0 0
  %4919 = vmatprep.subr.bf16.mxu0 0
  %4920 = vmatpush1.bf16.msra.mxu0 0
  %4921 = vmatprep.subr.bf16.mxu0 0
  %4922 = vmatpush1.bf16.msra.mxu0 0
  %4923 = vmatprep.mubr.bf16.mxu0 0
  %4924 = vmatmul.mubr.bf16.gmra.mrb[0].mxu0 %v4072
  %v4925 = vpop.f32.mrb[0].mxu0
  %v4926 = vadd.f32 %v4883, %v4925
  %v4927 = vpop.f32.mrb[0].mxu0
  %v4928 = vadd.f32 %v4885, %v4927
  %v4929 = vpop.f32.mrb[0].mxu0
  %v4930 = vadd.f32 %v4887, %v4929
  %v4931 = vpop.f32.mrb[0].mxu0
  %v4932 = vadd.f32 %v4889, %v4931
  %4933 = vdwg.mxu0
  %4934 = vmatprep.subr.bf16.mxu0 %v2781
  %4935 = vmatpush1.bf16.msra.mxu0 %v2780
  %4936 = vmatprep.subr.bf16.mxu0 %v2794
  %4937 = vmatpush1.bf16.msra.mxu0 %v2793
  %4938 = vmatprep.subr.bf16.mxu0 %v2807
  %4939 = vmatpush1.bf16.msra.mxu0 %v2806
  %4940 = vmatprep.subr.bf16.mxu0 %v2820
  %4941 = vmatpush1.bf16.msra.mxu0 %v2819
  %4942 = vmatprep.subr.bf16.mxu0 %v2833
  %4943 = vmatpush1.bf16.msra.mxu0 %v2832
  %4944 = vmatprep.subr.bf16.mxu0 %v2846
  %4945 = vmatpush1.bf16.msra.mxu0 %v2845
  %4946 = vmatprep.subr.bf16.mxu0 %v2859
  %4947 = vmatpush1.bf16.msra.mxu0 %v2858
  %4948 = vmatprep.subr.bf16.mxu0 %v2872
  %4949 = vmatpush1.bf16.msra.mxu0 %v2871
  %4950 = vmatprep.subr.bf16.mxu0 %v2885
  %4951 = vmatpush1.bf16.msra.mxu0 %v2884
  %4952 = vmatprep.subr.bf16.mxu0 %v2898
  %4953 = vmatpush1.bf16.msra.mxu0 %v2897
  %4954 = vmatprep.subr.bf16.mxu0 %v2911
  %4955 = vmatpush1.bf16.msra.mxu0 %v2910
  %4956 = vmatprep.subr.bf16.mxu0 %v2924
  %4957 = vmatpush1.bf16.msra.mxu0 %v2923
  %4958 = vmatprep.subr.bf16.mxu0 %v2937
  %4959 = vmatpush1.bf16.msra.mxu0 %v2936
  %4960 = vmatprep.subr.bf16.mxu0 %v2950
  %4961 = vmatpush1.bf16.msra.mxu0 %v2949
  %4962 = vmatprep.subr.bf16.mxu0 %v2963
  %4963 = vmatpush1.bf16.msra.mxu0 %v2962
  %4964 = vmatprep.subr.bf16.mxu0 %v2976
  %4965 = vmatpush1.bf16.msra.mxu0 %v2975
  %4966 = vmatprep.mubr.bf16.mxu0 %v758
  %4967 = vmatmul.mubr.bf16.gmra.mrb[0].mxu0 %v757
  %v4968 = vpop.f32.mrb[0].mxu0
  %v4969 = vadd.f32 %v728, %v4968
  %v4970 = vpop.f32.mrb[0].mxu0
  %v4971 = vadd.f32 %v728, %v4970
  %v4972 = vpop.f32.mrb[0].mxu0
  %v4973 = vadd.f32 %v733, %v4972
  %v4974 = vpop.f32.mrb[0].mxu0
  %v4975 = vadd.f32 %v733, %v4974
  %4976 = vdwg.mxu0
  %4977 = vmatprep.subr.bf16.mxu0 %v2989
  %4978 = vmatpush1.bf16.msra.mxu0 %v2988
  %4979 = vmatprep.subr.bf16.mxu0 %v3002
  %4980 = vmatpush1.bf16.msra.mxu0 %v3001
  %4981 = vmatprep.subr.bf16.mxu0 %v3015
  %4982 = vmatpush1.bf16.msra.mxu0 %v3014
  %4983 = vmatprep.subr.bf16.mxu0 %v3028
  %4984 = vmatpush1.bf16.msra.mxu0 %v3027
  %4985 = vmatprep.subr.bf16.mxu0 %v3041
  %4986 = vmatpush1.bf16.msra.mxu0 %v3040
  %4987 = vmatprep.subr.bf16.mxu0 %v3054
  %4988 = vmatpush1.bf16.msra.mxu0 %v3053
  %4989 = vmatprep.subr.bf16.mxu0 %v3067
  %4990 = vmatpush1.bf16.msra.mxu0 %v3066
  %4991 = vmatprep.subr.bf16.mxu0 %v3080
  %4992 = vmatpush1.bf16.msra.mxu0 %v3079
  %4993 = vmatprep.subr.bf16.mxu0 %v3093
  %4994 = vmatpush1.bf16.msra.mxu0 %v3092
  %4995 = vmatprep.subr.bf16.mxu0 %v3106
  %4996 = vmatpush1.bf16.msra.mxu0 %v3105
  %4997 = vmatprep.subr.bf16.mxu0 %v3119
  %4998 = vmatpush1.bf16.msra.mxu0 %v3118
  %4999 = vmatprep.subr.bf16.mxu0 %v3132
  %5000 = vmatpush1.bf16.msra.mxu0 %v3131
  %5001 = vmatprep.subr.bf16.mxu0 %v3145
  %5002 = vmatpush1.bf16.msra.mxu0 %v3144
  %5003 = vmatprep.subr.bf16.mxu0 %v3158
  %5004 = vmatpush1.bf16.msra.mxu0 %v3157
  %5005 = vmatprep.subr.bf16.mxu0 %v3171
  %5006 = vmatpush1.bf16.msra.mxu0 %v3170
  %5007 = vmatprep.subr.bf16.mxu0 %v3184
  %5008 = vmatpush1.bf16.msra.mxu0 %v3183
  %5009 = vmatprep.mubr.bf16.mxu0 %v760
  %5010 = vmatmul.mubr.bf16.gmra.mrb[0].mxu0 %v759
  %v5011 = vpop.f32.mrb[0].mxu0
  %v5012 = vadd.f32 %v4969, %v5011
  %v5013 = vpop.f32.mrb[0].mxu0
  %v5014 = vadd.f32 %v4971, %v5013
  %v5015 = vpop.f32.mrb[0].mxu0
  %v5016 = vadd.f32 %v4973, %v5015
  %v5017 = vpop.f32.mrb[0].mxu0
  %v5018 = vadd.f32 %v4975, %v5017
  %5019 = vdwg.mxu0
  %5020 = vmatprep.subr.bf16.mxu0 %v3197
  %5021 = vmatpush1.bf16.msra.mxu0 %v3196
  %5022 = vmatprep.subr.bf16.mxu0 %v3210
  %5023 = vmatpush1.bf16.msra.mxu0 %v3209
  %5024 = vmatprep.subr.bf16.mxu0 %v3223
  %5025 = vmatpush1.bf16.msra.mxu0 %v3222
  %5026 = vmatprep.subr.bf16.mxu0 %v3236
  %5027 = vmatpush1.bf16.msra.mxu0 %v3235
  %5028 = vmatprep.subr.bf16.mxu0 %v3249
  %5029 = vmatpush1.bf16.msra.mxu0 %v3248
  %5030 = vmatprep.subr.bf16.mxu0 %v3262
  %5031 = vmatpush1.bf16.msra.mxu0 %v3261
  %5032 = vmatprep.subr.bf16.mxu0 %v3275
  %5033 = vmatpush1.bf16.msra.mxu0 %v3274
  %5034 = vmatprep.subr.bf16.mxu0 %v3288
  %5035 = vmatpush1.bf16.msra.mxu0 %v3287
  %5036 = vmatprep.subr.bf16.mxu0 %v3301
  %5037 = vmatpush1.bf16.msra.mxu0 %v3300
  %5038 = vmatprep.subr.bf16.mxu0 %v3314
  %5039 = vmatpush1.bf16.msra.mxu0 %v3313
  %5040 = vmatprep.subr.bf16.mxu0 %v3327
  %5041 = vmatpush1.bf16.msra.mxu0 %v3326
  %5042 = vmatprep.subr.bf16.mxu0 %v3340
  %5043 = vmatpush1.bf16.msra.mxu0 %v3339
  %5044 = vmatprep.subr.bf16.mxu0 %v3353
  %5045 = vmatpush1.bf16.msra.mxu0 %v3352
  %5046 = vmatprep.subr.bf16.mxu0 %v3366
  %5047 = vmatpush1.bf16.msra.mxu0 %v3365
  %5048 = vmatprep.subr.bf16.mxu0 %v3379
  %5049 = vmatpush1.bf16.msra.mxu0 %v3378
  %5050 = vmatprep.subr.bf16.mxu0 %v3392
  %5051 = vmatpush1.bf16.msra.mxu0 %v3391
  %5052 = vmatprep.mubr.bf16.mxu0 %v762
  %5053 = vmatmul.mubr.bf16.gmra.mrb[0].mxu0 %v761
  %v5054 = vpop.f32.mrb[0].mxu0
  %v5055 = vadd.f32 %v5012, %v5054
  %v5056 = vpop.f32.mrb[0].mxu0
  %v5057 = vadd.f32 %v5014, %v5056
  %v5058 = vpop.f32.mrb[0].mxu0
  %v5059 = vadd.f32 %v5016, %v5058
  %v5060 = vpop.f32.mrb[0].mxu0
  %v5061 = vadd.f32 %v5018, %v5060
  %5062 = vdwg.mxu0
  %5063 = vmatprep.subr.bf16.mxu0 %v3405
  %5064 = vmatpush1.bf16.msra.mxu0 %v3404
  %5065 = vmatprep.subr.bf16.mxu0 %v3418
  %5066 = vmatpush1.bf16.msra.mxu0 %v3417
  %5067 = vmatprep.subr.bf16.mxu0 0
  %5068 = vmatpush1.bf16.msra.mxu0 0
  %5069 = vmatprep.subr.bf16.mxu0 0
  %5070 = vmatpush1.bf16.msra.mxu0 0
  %5071 = vmatprep.subr.bf16.mxu0 0
  %5072 = vmatpush1.bf16.msra.mxu0 0
  %5073 = vmatprep.subr.bf16.mxu0 0
  %5074 = vmatpush1.bf16.msra.mxu0 0
  %5075 = vmatprep.subr.bf16.mxu0 0
  %5076 = vmatpush1.bf16.msra.mxu0 0
  %5077 = vmatprep.subr.bf16.mxu0 0
  %5078 = vmatpush1.bf16.msra.mxu0 0
  %5079 = vmatprep.subr.bf16.mxu0 0
  %5080 = vmatpush1.bf16.msra.mxu0 0
  %5081 = vmatprep.subr.bf16.mxu0 0
  %5082 = vmatpush1.bf16.msra.mxu0 0
  %5083 = vmatprep.subr.bf16.mxu0 0
  %5084 = vmatpush1.bf16.msra.mxu0 0
  %5085 = vmatprep.subr.bf16.mxu0 0
  %5086 = vmatpush1.bf16.msra.mxu0 0
  %5087 = vmatprep.subr.bf16.mxu0 0
  %5088 = vmatpush1.bf16.msra.mxu0 0
  %5089 = vmatprep.subr.bf16.mxu0 0
  %5090 = vmatpush1.bf16.msra.mxu0 0
  %5091 = vmatprep.subr.bf16.mxu0 0
  %5092 = vmatpush1.bf16.msra.mxu0 0
  %5093 = vmatprep.subr.bf16.mxu0 0
  %5094 = vmatpush1.bf16.msra.mxu0 0
  %5095 = vmatprep.mubr.bf16.mxu0 0
  %5096 = vmatmul.mubr.bf16.gmra.mrb[0].mxu0 %v4072
  %v5097 = vpop.f32.mrb[0].mxu0
  %v5098 = vadd.f32 %v5055, %v5097
  %v5099 = vpop.f32.mrb[0].mxu0
  %v5100 = vadd.f32 %v5057, %v5099
  %v5101 = vpop.f32.mrb[0].mxu0
  %v5102 = vadd.f32 %v5059, %v5101
  %v5103 = vpop.f32.mrb[0].mxu0
  %v5104 = vadd.f32 %v5061, %v5103
  %5105 = vdwg.mxu0
  %5106 = vmatprep.subr.bf16.mxu0 0
  %5107 = vmatpush1.bf16.msra.mxu0 %v2782
  %5108 = vmatprep.subr.bf16.mxu0 0
  %5109 = vmatpush1.bf16.msra.mxu0 %v2795
  %5110 = vmatprep.subr.bf16.mxu0 0
  %5111 = vmatpush1.bf16.msra.mxu0 %v2808
  %5112 = vmatprep.subr.bf16.mxu0 0
  %5113 = vmatpush1.bf16.msra.mxu0 %v2821
  %5114 = vmatprep.subr.bf16.mxu0 0
  %5115 = vmatpush1.bf16.msra.mxu0 %v2834
  %5116 = vmatprep.subr.bf16.mxu0 0
  %5117 = vmatpush1.bf16.msra.mxu0 %v2847
  %5118 = vmatprep.subr.bf16.mxu0 0
  %5119 = vmatpush1.bf16.msra.mxu0 %v2860
  %5120 = vmatprep.subr.bf16.mxu0 0
  %5121 = vmatpush1.bf16.msra.mxu0 %v2873
  %5122 = vmatprep.subr.bf16.mxu0 0
  %5123 = vmatpush1.bf16.msra.mxu0 %v2886
  %5124 = vmatprep.subr.bf16.mxu0 0
  %5125 = vmatpush1.bf16.msra.mxu0 %v2899
  %5126 = vmatprep.subr.bf16.mxu0 0
  %5127 = vmatpush1.bf16.msra.mxu0 %v2912
  %5128 = vmatprep.subr.bf16.mxu0 0
  %5129 = vmatpush1.bf16.msra.mxu0 %v2925
  %5130 = vmatprep.subr.bf16.mxu0 0
  %5131 = vmatpush1.bf16.msra.mxu0 %v2938
  %5132 = vmatprep.subr.bf16.mxu0 0
  %5133 = vmatpush1.bf16.msra.mxu0 %v2951
  %5134 = vmatprep.subr.bf16.mxu0 0
  %5135 = vmatpush1.bf16.msra.mxu0 %v2964
  %5136 = vmatprep.subr.bf16.mxu0 0
  %5137 = vmatpush1.bf16.msra.mxu0 %v2977
  %5138 = vmatprep.mubr.bf16.mxu0 %v758
  %5139 = vmatmul.mubr.bf16.gmra.mrb[0].mxu0 %v757
  %v5140 = vpop.f32.mrb[0].mxu0
  %v5141 = vadd.f32 %v728, %v5140
  %v5142 = vpop.f32.mrb[0].mxu0
  %v5143 = vpop.f32.mrb[0].mxu0
  %v5144 = vadd.f32 %v733, %v5143
  %v5145 = vpop.f32.mrb[0].mxu0
  %5146 = vdwg.mxu0
  %5147 = vmatprep.subr.bf16.mxu0 0
  %5148 = vmatpush1.bf16.msra.mxu0 %v2990
  %5149 = vmatprep.subr.bf16.mxu0 0
  %5150 = vmatpush1.bf16.msra.mxu0 %v3003
  %5151 = vmatprep.subr.bf16.mxu0 0
  %5152 = vmatpush1.bf16.msra.mxu0 %v3016
  %5153 = vmatprep.subr.bf16.mxu0 0
  %5154 = vmatpush1.bf16.msra.mxu0 %v3029
  %5155 = vmatprep.subr.bf16.mxu0 0
  %5156 = vmatpush1.bf16.msra.mxu0 %v3042
  %5157 = vmatprep.subr.bf16.mxu0 0
  %5158 = vmatpush1.bf16.msra.mxu0 %v3055
  %5159 = vmatprep.subr.bf16.mxu0 0
  %5160 = vmatpush1.bf16.msra.mxu0 %v3068
  %5161 = vmatprep.subr.bf16.mxu0 0
  %5162 = vmatpush1.bf16.msra.mxu0 %v3081
  %5163 = vmatprep.subr.bf16.mxu0 0
  %5164 = vmatpush1.bf16.msra.mxu0 %v3094
  %5165 = vmatprep.subr.bf16.mxu0 0
  %5166 = vmatpush1.bf16.msra.mxu0 %v3107
  %5167 = vmatprep.subr.bf16.mxu0 0
  %5168 = vmatpush1.bf16.msra.mxu0 %v3120
  %5169 = vmatprep.subr.bf16.mxu0 0
  %5170 = vmatpush1.bf16.msra.mxu0 %v3133
  %5171 = vmatprep.subr.bf16.mxu0 0
  %5172 = vmatpush1.bf16.msra.mxu0 %v3146
  %5173 = vmatprep.subr.bf16.mxu0 0
  %5174 = vmatpush1.bf16.msra.mxu0 %v3159
  %5175 = vmatprep.subr.bf16.mxu0 0
  %5176 = vmatpush1.bf16.msra.mxu0 %v3172
  %5177 = vmatprep.subr.bf16.mxu0 0
  %5178 = vmatpush1.bf16.msra.mxu0 %v3185
  %5179 = vmatprep.mubr.bf16.mxu0 %v760
  %5180 = vmatmul.mubr.bf16.gmra.mrb[0].mxu0 %v759
  %v5181 = vpop.f32.mrb[0].mxu0
  %v5182 = vadd.f32 %v5141, %v5181
  %v5183 = vpop.f32.mrb[0].mxu0
  %v5184 = vpop.f32.mrb[0].mxu0
  %v5185 = vadd.f32 %v5144, %v5184
  %v5186 = vpop.f32.mrb[0].mxu0
  %5187 = vdwg.mxu0
  %5188 = vmatprep.subr.bf16.mxu0 0
  %5189 = vmatpush1.bf16.msra.mxu0 %v3198
  %5190 = vmatprep.subr.bf16.mxu0 0
  %5191 = vmatpush1.bf16.msra.mxu0 %v3211
  %5192 = vmatprep.subr.bf16.mxu0 0
  %5193 = vmatpush1.bf16.msra.mxu0 %v3224
  %5194 = vmatprep.subr.bf16.mxu0 0
  %5195 = vmatpush1.bf16.msra.mxu0 %v3237
  %5196 = vmatprep.subr.bf16.mxu0 0
  %5197 = vmatpush1.bf16.msra.mxu0 %v3250
  %5198 = vmatprep.subr.bf16.mxu0 0
  %5199 = vmatpush1.bf16.msra.mxu0 %v3263
  %5200 = vmatprep.subr.bf16.mxu0 0
  %5201 = vmatpush1.bf16.msra.mxu0 %v3276
  %5202 = vmatprep.subr.bf16.mxu0 0
  %5203 = vmatpush1.bf16.msra.mxu0 %v3289
  %5204 = vmatprep.subr.bf16.mxu0 0
  %5205 = vmatpush1.bf16.msra.mxu0 %v3302
  %5206 = vmatprep.subr.bf16.mxu0 0
  %5207 = vmatpush1.bf16.msra.mxu0 %v3315
  %5208 = vmatprep.subr.bf16.mxu0 0
  %5209 = vmatpush1.bf16.msra.mxu0 %v3328
  %5210 = vmatprep.subr.bf16.mxu0 0
  %5211 = vmatpush1.bf16.msra.mxu0 %v3341
  %5212 = vmatprep.subr.bf16.mxu0 0
  %5213 = vmatpush1.bf16.msra.mxu0 %v3354
  %5214 = vmatprep.subr.bf16.mxu0 0
  %5215 = vmatpush1.bf16.msra.mxu0 %v3367
  %5216 = vmatprep.subr.bf16.mxu0 0
  %5217 = vmatpush1.bf16.msra.mxu0 %v3380
  %5218 = vmatprep.subr.bf16.mxu0 0
  %5219 = vmatpush1.bf16.msra.mxu0 %v3393
  %5220 = vmatprep.mubr.bf16.mxu0 %v762
  %5221 = vmatmul.mubr.bf16.gmra.mrb[0].mxu0 %v761
  %v5222 = vpop.f32.mrb[0].mxu0
  %v5223 = vadd.f32 %v5182, %v5222
  %v5224 = vpop.f32.mrb[0].mxu0
  %v5225 = vpop.f32.mrb[0].mxu0
  %v5226 = vadd.f32 %v5185, %v5225
  %v5227 = vpop.f32.mrb[0].mxu0
  %5228 = vdwg.mxu0
  %5229 = vmatprep.subr.bf16.mxu0 0
  %5230 = vmatpush1.bf16.msra.mxu0 %v3406
  %5231 = vmatprep.subr.bf16.mxu0 0
  %5232 = vmatpush1.bf16.msra.mxu0 %v3419
  %5233 = vmatprep.subr.bf16.mxu0 0
  %5234 = vmatpush1.bf16.msra.mxu0 0
  %5235 = vmatprep.subr.bf16.mxu0 0
  %5236 = vmatpush1.bf16.msra.mxu0 0
  %5237 = vmatprep.subr.bf16.mxu0 0
  %5238 = vmatpush1.bf16.msra.mxu0 0
  %5239 = vmatprep.subr.bf16.mxu0 0
  %5240 = vmatpush1.bf16.msra.mxu0 0
  %5241 = vmatprep.subr.bf16.mxu0 0
  %5242 = vmatpush1.bf16.msra.mxu0 0
  %5243 = vmatprep.subr.bf16.mxu0 0
  %5244 = vmatpush1.bf16.msra.mxu0 0
  %5245 = vmatprep.subr.bf16.mxu0 0
  %5246 = vmatpush1.bf16.msra.mxu0 0
  %5247 = vmatprep.subr.bf16.mxu0 0
  %5248 = vmatpush1.bf16.msra.mxu0 0
  %5249 = vmatprep.subr.bf16.mxu0 0
  %5250 = vmatpush1.bf16.msra.mxu0 0
  %5251 = vmatprep.subr.bf16.mxu0 0
  %5252 = vmatpush1.bf16.msra.mxu0 0
  %5253 = vmatprep.subr.bf16.mxu0 0
  %5254 = vmatpush1.bf16.msra.mxu0 0
  %5255 = vmatprep.subr.bf16.mxu0 0
  %5256 = vmatpush1.bf16.msra.mxu0 0
  %5257 = vmatprep.subr.bf16.mxu0 0
  %5258 = vmatpush1.bf16.msra.mxu0 0
  %5259 = vmatprep.subr.bf16.mxu0 0
  %5260 = vmatpush1.bf16.msra.mxu0 0
  %5261 = vmatprep.mubr.bf16.mxu0 0
  %5262 = vmatmul.mubr.bf16.gmra.mrb[0].mxu0 %v4072
  %v5263 = vpop.f32.mrb[0].mxu0
  %v5264 = vadd.f32 %v5223, %v5263
  %v5265 = vpop.f32.mrb[0].mxu0
  %v5266 = vpop.f32.mrb[0].mxu0
  %v5267 = vadd.f32 %v5226, %v5266
  %v5268 = vpop.f32.mrb[0].mxu0
  %5269 = vdwg.mxu0
  %5270 = vst [vmem:[%s3] sm:$0xff] %v4238
  %5271 = vst [vmem:[%s3 + $0x8] sm:$0xff] %v4240
  %5272 = vst [vmem:[%s3 + $0x10] sm:$0xff] %v4410
  %5273 = vst [vmem:[%s3 + $0x18] sm:$0xff] %v4412
  %5274 = vst [vmem:[%s3 + $0x20] sm:$0xff] %v4582
  %5275 = vst [vmem:[%s3 + $0x28] sm:$0xff] %v4584
  %5276 = vst [vmem:[%s3 + $0x30] sm:$0xff] %v4754
  %5277 = vst [vmem:[%s3 + $0x38] sm:$0xff] %v4756
  %5278 = vst [vmem:[%s3 + $0x40] sm:$0xff] %v4926
  %5279 = vst [vmem:[%s3 + $0x48] sm:$0xff] %v4928
  %5280 = vst [vmem:[%s3 + $0x50] sm:$0xff] %v5098
  %5281 = vst [vmem:[%s3 + $0x58] sm:$0xff] %v5100
  %5282 = vst [vmem:[%s3 + $0x60] sm:$0xff] %v5264
  %5283 = vst [vmem:[%s3 + $0x68] sm:$0xff] %v4242
  %5284 = vst [vmem:[%s3 + $0x70] sm:$0xff] %v4244
  %5285 = vst [vmem:[%s3 + $0x78] sm:$0xff] %v4414
  %5286 = vst [vmem:[%s3 + $0x80] sm:$0xff] %v4416
  %5287 = vst [vmem:[%s3 + $0x88] sm:$0xff] %v4586
  %5288 = vst [vmem:[%s3 + $0x90] sm:$0xff] %v4588
  %5289 = vst [vmem:[%s3 + $0x98] sm:$0xff] %v4758
  %5290 = vst [vmem:[%s3 + $0xa0] sm:$0xff] %v4760
  %5291 = vst [vmem:[%s3 + $0xa8] sm:$0xff] %v4930
  %5292 = vst [vmem:[%s3 + $0xb0] sm:$0xff] %v4932
  %5293 = vst [vmem:[%s3 + $0xb8] sm:$0xff] %v5102
  %5294 = vst [vmem:[%s3 + $0xc0] sm:$0xff] %v5104
  %5295 = vst [vmem:[%s3 + $0xc8] sm:$0xff] %v5267
  // Predicated region
  $region14: #{_lambda_.5} parent=0 // pred_check
    _
  $region15: #{_lambda_.5} parent=0 // pred_check_branch
    %5297 = sbr.rel (0) target = $region17
  $region16: #{_lambda_.5} parent=0 // pred_region
    _
  $region17: #{_lambda_.5} parent=0 // pred_fallthru
    _
  // Predicated region
  $region18: #{_lambda_.5} parent=0 // pred_check
    _
  $region19: #{_lambda_.5} parent=0 // pred_check_branch
    %5299 = sbr.rel (0) target = $region21
  $region20: #{_lambda_.5} parent=0 // pred_region
    _
  $region21: #{_lambda_.5} parent=0 // pred_fallthru
    _

</llo_original>
